<compile_context>
chip_gen: v7x
topology: tpu7x:2x2x1
jax: 0.10.0
libtpu: 0.0.40
codegen_flags: <defaults>
</compile_context>

<pallas_src>
import jax
import jax.numpy as jnp
from jax.experimental import pallas as pl
from jax.experimental.pallas import tpu as pltpu

# ---- module config (base GAMMAPolicy: body_repr='ssm2_67_condi_marker') ----
H_DIM = 32                     # config['h_dim']
Z_DIM = 8                      # config['z_dim']
N_BLOCKS = 2                   # config['n_blocks']
IN_DIM = 67 * 3 * 2            # 402, GRU input width
IN_PAD = 512                   # padded GRU contraction dim (multiple of 128)
H_PAD = 128                    # padded hidden width (one full lane group)
Z_OUT = 2 * Z_DIM              # 16  (mu | logvar)
OUT_PAD = 128                  # lane-dense output slab: [z_prob(16) | val(1) | zeros]
DEFAULT_BLOCK_B = 128          # production batch tile


def _sigmoid(x):
    # shared by kernel and reference so both use identical math
    return 1.0 / (1.0 + jnp.exp(-x))


def gamma_policy_kernel(x_ref,
                        wih_ref, whh_ref, bih_ref, bhh_ref,        # GRU
                        pw1_ref, pb1_ref, pw2_ref, pb2_ref,        # pnet residual blocks
                        vw1_ref, vb1_ref, vw2_ref, vb2_ref,        # vnet residual blocks
                        wz_ref, wv_ref, bout_ref,                  # fused output linears
                        out_ref):
    """One batch tile of GRU + pnet + vnet.  Weights are VMEM-resident across the grid.

    x_ref:    (T, TB, IN_PAD)            bf16 (zero-padded)
    wih_ref:  (IN_PAD, 3*H_PAD)          bf16  gates [r|z|n], each 128-lane aligned
    whh_ref:  (H_PAD, 3*H_PAD)           bf16
    bih/bhh:  (1, 3*H_PAD)               f32
    *w1/*w2:  (N_BLOCKS, H_PAD, H_PAD)   bf16
    *b1/*b2:  (N_BLOCKS, 1, H_PAD)       f32
    wz/wv:    (H_PAD, OUT_PAD)           bf16   cols [0:16]=pnet.out_fc, col [16]=vnet.out_fc
    bout:     (1, OUT_PAD)               f32
    out_ref:  (TB, OUT_PAD)              f32
    """
    T = x_ref.shape[0]
    TB = out_ref.shape[0]

    wih = wih_ref[...]
    whh = whh_ref[...]
    bih = bih_ref[...]
    b_hr = bhh_ref[:, 0 * H_PAD:1 * H_PAD]
    b_hz = bhh_ref[:, 1 * H_PAD:2 * H_PAD]
    b_hn = bhh_ref[:, 2 * H_PAD:3 * H_PAD]

    # ---- GRU recurrence, statically unrolled over the (small) time axis ----
    # Padding lanes [H_DIM:H_PAD] of h stay exactly zero through the recurrence
    # (all padded weight rows/cols and biases are zero), so the head matmuls see
    # the true 32-wide hidden state.
    h = jnp.zeros((TB, H_PAD), jnp.float32)
    for t in range(T):
        gx = jnp.dot(x_ref[t], wih, preferred_element_type=jnp.float32) + bih
        gh = jnp.dot(h.astype(jnp.bfloat16), whh, preferred_element_type=jnp.float32)
        r = _sigmoid(gx[:, 0 * H_PAD:1 * H_PAD] + gh[:, 0 * H_PAD:1 * H_PAD] + b_hr)
        z = _sigmoid(gx[:, 1 * H_PAD:2 * H_PAD] + gh[:, 1 * H_PAD:2 * H_PAD] + b_hz)
        n = jnp.tanh(gx[:, 2 * H_PAD:3 * H_PAD]
                     + r * (gh[:, 2 * H_PAD:3 * H_PAD] + b_hn))
        h = (1.0 - z) * n + z * h

    # ---- residual MLP trunks (pnet / vnet) ----
    def trunk(h0, w1_ref, b1_ref, w2_ref, b2_ref):
        hh = h0
        for blk in range(N_BLOCKS):
            res = hh
            u = jnp.dot(hh.astype(jnp.bfloat16), w1_ref[blk],
                        preferred_element_type=jnp.float32) + b1_ref[blk]
            u = jnp.maximum(u, 0.0)                           # relu in f32 (VPU)
            u = jnp.dot(u.astype(jnp.bfloat16), w2_ref[blk],
                        preferred_element_type=jnp.float32) + b2_ref[blk]
            u = jnp.maximum(u, 0.0)
            hh = u + res                                      # residual add in f32
        return hh

    hp = trunk(h, pw1_ref, pb1_ref, pw2_ref, pb2_ref)
    hv = trunk(h, vw1_ref, vb1_ref, vw2_ref, vb2_ref)

    # ---- fused output linears -> one lane-dense 128-wide slab ----
    y = (jnp.dot(hp.astype(jnp.bfloat16), wz_ref[...],
                 preferred_element_type=jnp.float32)
         + jnp.dot(hv.astype(jnp.bfloat16), wv_ref[...],
                   preferred_element_type=jnp.float32)
         + bout_ref[...])
    out_ref[...] = y.astype(out_ref.dtype)


def gamma_policy_forward(x_in, prepared_params, *, block_b=DEFAULT_BLOCK_B):
    """JAX wrapper mirroring GAMMAPolicy.forward: x_in (T, B, IN_DIM) -> (mu, logvar, val)."""
    T, B, in_dim = x_in.shape
    assert in_dim == IN_DIM
    n_tiles = max(1, pl.cdiv(B, block_b))
    B_pad = n_tiles * block_b

    # lane-pad the feature dim, sublane-pad the batch; cast to bf16 (halves DMA,
    # the reference also feeds bf16 into its matmuls so values are identical)
    x_p = jnp.zeros((T, B_pad, IN_PAD), jnp.bfloat16)
    x_p = x_p.at[:, :B, :IN_DIM].set(x_in.astype(jnp.bfloat16))

    c2 = lambda i: (0, 0)      # weights: same block every grid step -> stay in VMEM
    c3 = lambda i: (0, 0, 0)
    blk_w_spec = pl.BlockSpec((N_BLOCKS, H_PAD, H_PAD), c3)
    blk_b_spec = pl.BlockSpec((N_BLOCKS, 1, H_PAD), c3)

    out = pl.pallas_call(
        gamma_policy_kernel,
        out_shape=jax.ShapeDtypeStruct((B_pad, OUT_PAD), jnp.float32),
        grid=(n_tiles,),
        in_specs=[
            pl.BlockSpec((T, block_b, IN_PAD), lambda i: (0, i, 0)),   # x batch tile
            pl.BlockSpec((IN_PAD, 3 * H_PAD), c2),                     # GRU w_ih
            pl.BlockSpec((H_PAD, 3 * H_PAD), c2),                      # GRU w_hh
            pl.BlockSpec((1, 3 * H_PAD), c2),                          # GRU b_ih
            pl.BlockSpec((1, 3 * H_PAD), c2),                          # GRU b_hh
            blk_w_spec, blk_b_spec, blk_w_spec, blk_b_spec,            # pnet blocks
            blk_w_spec, blk_b_spec, blk_w_spec, blk_b_spec,            # vnet blocks
            pl.BlockSpec((H_PAD, OUT_PAD), c2),                        # wz (pnet.out_fc)
            pl.BlockSpec((H_PAD, OUT_PAD), c2),                        # wv (vnet.out_fc)
            pl.BlockSpec((1, OUT_PAD), c2),                            # bout
        ],
        out_specs=pl.BlockSpec((block_b, OUT_PAD), lambda i: (i, 0)),
        compiler_params=pltpu.CompilerParams(
            dimension_semantics=("parallel",)),                        # megacore split
    )(x_p, *prepared_params)

    mu = out[:B, :Z_DIM]
    logvar = out[:B, Z_DIM:Z_OUT]
    val = out[:B, Z_OUT:Z_OUT + 1]
    return mu, logvar, val


# ---------------- parameter construction / preparation ----------------

def init_params(key):
    """Deterministic synthetic parameters (torch-style uniform(-1/sqrt(h), 1/sqrt(h)) init).

    Linear weights stored as (in_features, out_features) so kernels compute y = x @ W + b.
    GRU gate order along the output axis is (r | z | n), matching torch.nn.GRU.
    """
    keys = jax.random.split(key, 16)
    s = 1.0 / jnp.sqrt(jnp.float32(H_DIM))
    u = lambda k, shape: jax.random.uniform(k, shape, jnp.float32, -s, s)
    wih = u(keys[0], (IN_DIM, 3 * H_DIM))
    whh = u(keys[1], (H_DIM, 3 * H_DIM))
    bih = u(keys[2], (1, 3 * H_DIM))
    bhh = u(keys[3], (1, 3 * H_DIM))
    pw1 = u(keys[4], (N_BLOCKS, H_DIM, H_DIM)); pb1 = u(keys[5], (N_BLOCKS, 1, H_DIM))
    pw2 = u(keys[6], (N_BLOCKS, H_DIM, H_DIM)); pb2 = u(keys[7], (N_BLOCKS, 1, H_DIM))
    pwo = u(keys[8], (H_DIM, Z_OUT));           pbo = u(keys[9], (1, Z_OUT))
    vw1 = u(keys[10], (N_BLOCKS, H_DIM, H_DIM)); vb1 = u(keys[11], (N_BLOCKS, 1, H_DIM))
    vw2 = u(keys[12], (N_BLOCKS, H_DIM, H_DIM)); vb2 = u(keys[13], (N_BLOCKS, 1, H_DIM))
    vwo = u(keys[14], (H_DIM, 1));               vbo = u(keys[15], (1, 1))
    return (wih, whh, bih, bhh,
            pw1, pb1, pw2, pb2, pwo, pbo,
            vw1, vb1, vw2, vb2, vwo, vbo)


def prepare_params(raw):
    """One-time pad (IN_DIM->IN_PAD, H_DIM->H_PAD, out->OUT_PAD) + bf16 cast of matmul weights."""
    (wih, whh, bih, bhh,
     pw1, pb1, pw2, pb2, pwo, pbo,
     vw1, vb1, vw2, vb2, vwo, vbo) = raw

    def pad_gate_w(w, rows_pad):
        # (rows, 3*H_DIM) -> (rows_pad, 3*H_PAD); gate g lives at lanes [g*H_PAD : g*H_PAD+H_DIM]
        out = jnp.zeros((rows_pad, 3 * H_PAD), jnp.float32)
        for g in range(3):
            out = out.at[:w.shape[0], g * H_PAD:g * H_PAD + H_DIM].set(
                w[:, g * H_DIM:(g + 1) * H_DIM])
        return out.astype(jnp.bfloat16)

    def pad_gate_b(b):
        out = jnp.zeros((1, 3 * H_PAD), jnp.float32)
        for g in range(3):
            out = out.at[:, g * H_PAD:g * H_PAD + H_DIM].set(
                b[:, g * H_DIM:(g + 1) * H_DIM])
        return out

    def pad_blk_w(w):   # (N, H, H) -> (N, H_PAD, H_PAD) bf16, zero padded
        return jnp.pad(w, ((0, 0), (0, H_PAD - H_DIM), (0, H_PAD - H_DIM))).astype(jnp.bfloat16)

    def pad_blk_b(b):   # (N, 1, H) -> (N, 1, H_PAD) f32, zero padded
        return jnp.pad(b, ((0, 0), (0, 0), (0, H_PAD - H_DIM))).astype(jnp.float32)

    wz = (jnp.zeros((H_PAD, OUT_PAD), jnp.float32)
          .at[:H_DIM, :Z_OUT].set(pwo)).astype(jnp.bfloat16)
    wv = (jnp.zeros((H_PAD, OUT_PAD), jnp.float32)
          .at[:H_DIM, Z_OUT:Z_OUT + 1].set(vwo)).astype(jnp.bfloat16)
    bout = (jnp.zeros((1, OUT_PAD), jnp.float32)
            .at[:, :Z_OUT].set(pbo)
            .at[:, Z_OUT:Z_OUT + 1].set(vbo))

    return (pad_gate_w(wih, IN_PAD), pad_gate_w(whh, H_PAD), pad_gate_b(bih), pad_gate_b(bhh),
            pad_blk_w(pw1), pad_blk_b(pb1), pad_blk_w(pw2), pad_blk_b(pb2),
            pad_blk_w(vw1), pad_blk_b(vb1), pad_blk_w(vw2), pad_blk_b(vb2),
            wz, wv, bout)


# ---------------- pure-JAX reference (same bf16-at-MXU math) ----------------

def _reference_forward(x_in, raw):
    (wih, whh, bih, bhh,
     pw1, pb1, pw2, pb2, pwo, pbo,
     vw1, vb1, vw2, vb2, vwo, vbo) = raw
    T, B, _ = x_in.shape

    def bdot(a, b):
        return jnp.dot(a.astype(jnp.bfloat16), b.astype(jnp.bfloat16),
                       preferred_element_type=jnp.float32)

    h = jnp.zeros((B, H_DIM), jnp.float32)
    for t in range(T):
        gx = bdot(x_in[t], wih) + bih
        gh = bdot(h, whh)
        r = _sigmoid(gx[:, :H_DIM] + gh[:, :H_DIM] + bhh[:, :H_DIM])
        z = _sigmoid(gx[:, H_DIM:2 * H_DIM] + gh[:, H_DIM:2 * H_DIM] + bhh[:, H_DIM:2 * H_DIM])
        n = jnp.tanh(gx[:, 2 * H_DIM:] + r * (gh[:, 2 * H_DIM:] + bhh[:, 2 * H_DIM:]))
        h = (1.0 - z) * n + z * h

    def trunk(hh, w1, b1, w2, b2):
        for blk in range(N_BLOCKS):
            res = hh
            u = jnp.maximum(bdot(hh, w1[blk]) + b1[blk], 0.0)
            u = jnp.maximum(bdot(u, w2[blk]) + b2[blk], 0.0)
            hh = u + res
        return hh

    hp = trunk(h, pw1, pb1, pw2, pb2)
    hv = trunk(h, vw1, vb1, vw2, vb2)
    zp = bdot(hp, pwo) + pbo
    val = bdot(hv, vwo) + vbo
    return zp[:, :Z_DIM], zp[:, Z_DIM:], val


if __name__ == "__main__":
    key = jax.random.PRNGKey(0)
    pkey, xkey = jax.random.split(key)
    raw_params = init_params(pkey)
    prep_params = prepare_params(raw_params)   # pad + bf16-cast once, reused every call

    # small demo shapes; block_b=8 exercises a 2-step batch grid with VMEM-resident
    # weights (production would use block_b=128 and arbitrarily large B)
    T, B = 8, 16
    x_in = jax.random.normal(xkey, (T, B, IN_DIM), dtype=jnp.float32)

    mu, logvar, val = gamma_policy_forward(x_in, prep_params, block_b=8)
    jax.block_until_ready((mu, logvar, val))

    assert mu.shape == (B, Z_DIM) and logvar.shape == (B, Z_DIM) and val.shape == (B, 1)
    mu_ref, logvar_ref, val_ref = _reference_forward(x_in, raw_params)
    assert jnp.allclose(mu, mu_ref, atol=2e-3, rtol=2e-3)
    assert jnp.allclose(logvar, logvar_ref, atol=2e-3, rtol=2e-3)
    assert jnp.allclose(val, val_ref, atol=2e-3, rtol=2e-3)

    print("KERNEL_OK")
</pallas_src>

<mosaic_0001>
module attributes {stable_mosaic.version = 11 : i64} {
  func.func @gamma_policy_kernel(%arg0: i32, %arg1: memref<8x8x512xbf16, #tpu.memory_space<vmem>>, %arg2: memref<512x384xbf16, #tpu.memory_space<vmem>>, %arg3: memref<128x384xbf16, #tpu.memory_space<vmem>>, %arg4: memref<1x384xf32, #tpu.memory_space<vmem>>, %arg5: memref<1x384xf32, #tpu.memory_space<vmem>>, %arg6: memref<2x128x128xbf16, #tpu.memory_space<vmem>>, %arg7: memref<2x1x128xf32, #tpu.memory_space<vmem>>, %arg8: memref<2x128x128xbf16, #tpu.memory_space<vmem>>, %arg9: memref<2x1x128xf32, #tpu.memory_space<vmem>>, %arg10: memref<2x128x128xbf16, #tpu.memory_space<vmem>>, %arg11: memref<2x1x128xf32, #tpu.memory_space<vmem>>, %arg12: memref<2x128x128xbf16, #tpu.memory_space<vmem>>, %arg13: memref<2x1x128xf32, #tpu.memory_space<vmem>>, %arg14: memref<128x128xbf16, #tpu.memory_space<vmem>>, %arg15: memref<128x128xbf16, #tpu.memory_space<vmem>>, %arg16: memref<1x128xf32, #tpu.memory_space<vmem>>, %arg17: memref<8x128xf32, #tpu.memory_space<vmem>>) attributes {dimension_semantics = [#tpu.dimension_semantics<parallel>], iteration_bounds = array<i64: 2>, scalar_prefetch = 0 : i64, scratch_operands = 0 : i64, tpu.core_type = #tpu.core_type<tc>, window_params = [{transform_indices = @transform_0, window_bounds = array<i64: 8, 8, 512>}, {pipeline_mode = #tpu.pipeline_mode<synchronous>, transform_indices = @transform_1, window_bounds = array<i64: 512, 384>}, {pipeline_mode = #tpu.pipeline_mode<synchronous>, transform_indices = @transform_2, window_bounds = array<i64: 128, 384>}, {pipeline_mode = #tpu.pipeline_mode<synchronous>, transform_indices = @transform_3, window_bounds = array<i64: 1, 384>}, {pipeline_mode = #tpu.pipeline_mode<synchronous>, transform_indices = @transform_4, window_bounds = array<i64: 1, 384>}, {pipeline_mode = #tpu.pipeline_mode<synchronous>, transform_indices = @transform_5, window_bounds = array<i64: 2, 128, 128>}, {pipeline_mode = #tpu.pipeline_mode<synchronous>, transform_indices = @transform_6, window_bounds = array<i64: 2, 1, 128>}, {pipeline_mode = #tpu.pipeline_mode<synchronous>, transform_indices = @transform_7, window_bounds = array<i64: 2, 128, 128>}, {pipeline_mode = #tpu.pipeline_mode<synchronous>, transform_indices = @transform_8, window_bounds = array<i64: 2, 1, 128>}, {pipeline_mode = #tpu.pipeline_mode<synchronous>, transform_indices = @transform_9, window_bounds = array<i64: 2, 128, 128>}, {pipeline_mode = #tpu.pipeline_mode<synchronous>, transform_indices = @transform_10, window_bounds = array<i64: 2, 1, 128>}, {pipeline_mode = #tpu.pipeline_mode<synchronous>, transform_indices = @transform_11, window_bounds = array<i64: 2, 128, 128>}, {pipeline_mode = #tpu.pipeline_mode<synchronous>, transform_indices = @transform_12, window_bounds = array<i64: 2, 1, 128>}, {pipeline_mode = #tpu.pipeline_mode<synchronous>, transform_indices = @transform_13, window_bounds = array<i64: 128, 128>}, {pipeline_mode = #tpu.pipeline_mode<synchronous>, transform_indices = @transform_14, window_bounds = array<i64: 128, 128>}, {pipeline_mode = #tpu.pipeline_mode<synchronous>, transform_indices = @transform_15, window_bounds = array<i64: 1, 128>}, {transform_indices = @transform_16, window_bounds = array<i64: 8, 128>}]} {
    %c0 = arith.constant 0 : index
    %c0_0 = arith.constant 0 : index
    %0 = vector.load %arg2[%c0, %c0_0] : memref<512x384xbf16, #tpu.memory_space<vmem>>, vector<512x384xbf16>
    %c0_1 = arith.constant 0 : index
    %c0_2 = arith.constant 0 : index
    %1 = vector.load %arg3[%c0_1, %c0_2] : memref<128x384xbf16, #tpu.memory_space<vmem>>, vector<128x384xbf16>
    %c0_3 = arith.constant 0 : index
    %c0_4 = arith.constant 0 : index
    %2 = vector.load %arg4[%c0_3, %c0_4] : memref<1x384xf32, #tpu.memory_space<vmem>>, vector<1x384xf32>
    %c0_5 = arith.constant 0 : index
    %c0_6 = arith.constant 0 : index
    %3 = vector.load %arg5[%c0_5, %c0_6] : memref<1x384xf32, #tpu.memory_space<vmem>>, vector<1x128xf32>
    %c0_7 = arith.constant 0 : index
    %c128 = arith.constant 128 : index
    %4 = vector.load %arg5[%c0_7, %c128] : memref<1x384xf32, #tpu.memory_space<vmem>>, vector<1x128xf32>
    %c0_8 = arith.constant 0 : index
    %c256 = arith.constant 256 : index
    %5 = vector.load %arg5[%c0_8, %c256] : memref<1x384xf32, #tpu.memory_space<vmem>>, vector<1x128xf32>
    %cst = arith.constant 0.000000e+00 : f32
    %6 = vector.broadcast %cst : f32 to vector<8x128xf32>
    %c0_9 = arith.constant 0 : index
    %c0_10 = arith.constant 0 : index
    %c0_11 = arith.constant 0 : index
    %7 = vector.load %arg1[%c0_9, %c0_10, %c0_11] : memref<8x8x512xbf16, #tpu.memory_space<vmem>>, vector<1x8x512xbf16>
    %8 = vector.shape_cast %7 : vector<1x8x512xbf16> to vector<8x512xbf16>
    %cst_12 = arith.constant dense<0.000000e+00> : vector<8x384xf32>
    %9 = tpu.matmul %8, %0, %cst_12 {dimension_numbers = #tpu.dot_dimension_numbers<[1], [0], [0], [1], [0, 0, 1, 1], [], []>} : vector<8x512xbf16>, vector<512x384xbf16>, vector<8x384xf32> -> vector<8x384xf32>
    %10 = vector.broadcast %2 : vector<1x384xf32> to vector<8x384xf32>
    %11 = arith.addf %9, %10 : vector<8x384xf32>
    %12 = arith.truncf %6 : vector<8x128xf32> to vector<8x128xbf16>
    %cst_13 = arith.constant dense<0.000000e+00> : vector<8x384xf32>
    %13 = tpu.matmul %12, %1, %cst_13 {dimension_numbers = #tpu.dot_dimension_numbers<[1], [0], [0], [1], [0, 0, 1, 1], [], []>} : vector<8x128xbf16>, vector<128x384xbf16>, vector<8x384xf32> -> vector<8x384xf32>
    %14 = vector.extract_strided_slice %11 {offsets = [0, 0], sizes = [8, 128], strides = [1, 1]} : vector<8x384xf32> to vector<8x128xf32>
    %15 = vector.extract_strided_slice %13 {offsets = [0, 0], sizes = [8, 128], strides = [1, 1]} : vector<8x384xf32> to vector<8x128xf32>
    %16 = arith.addf %14, %15 : vector<8x128xf32>
    %17 = vector.broadcast %3 : vector<1x128xf32> to vector<8x128xf32>
    %18 = arith.addf %16, %17 : vector<8x128xf32>
    %cst_14 = arith.constant 0.000000e+00 : f32
    %19 = vector.broadcast %cst_14 : f32 to vector<8x128xf32>
    %20 = arith.subf %19, %18 : vector<8x128xf32>
    %21 = math.exp %20 : vector<8x128xf32>
    %cst_15 = arith.constant 1.000000e+00 : f32
    %22 = vector.broadcast %cst_15 : f32 to vector<8x128xf32>
    %23 = arith.addf %22, %21 : vector<8x128xf32>
    %cst_16 = arith.constant 1.000000e+00 : f32
    %24 = vector.broadcast %cst_16 : f32 to vector<8x128xf32>
    %25 = arith.divf %24, %23 : vector<8x128xf32>
    %26 = vector.extract_strided_slice %11 {offsets = [0, 128], sizes = [8, 128], strides = [1, 1]} : vector<8x384xf32> to vector<8x128xf32>
    %27 = vector.extract_strided_slice %13 {offsets = [0, 128], sizes = [8, 128], strides = [1, 1]} : vector<8x384xf32> to vector<8x128xf32>
    %28 = arith.addf %26, %27 : vector<8x128xf32>
    %29 = vector.broadcast %4 : vector<1x128xf32> to vector<8x128xf32>
    %30 = arith.addf %28, %29 : vector<8x128xf32>
    %cst_17 = arith.constant 0.000000e+00 : f32
    %31 = vector.broadcast %cst_17 : f32 to vector<8x128xf32>
    %32 = arith.subf %31, %30 : vector<8x128xf32>
    %33 = math.exp %32 : vector<8x128xf32>
    %cst_18 = arith.constant 1.000000e+00 : f32
    %34 = vector.broadcast %cst_18 : f32 to vector<8x128xf32>
    %35 = arith.addf %34, %33 : vector<8x128xf32>
    %cst_19 = arith.constant 1.000000e+00 : f32
    %36 = vector.broadcast %cst_19 : f32 to vector<8x128xf32>
    %37 = arith.divf %36, %35 : vector<8x128xf32>
    %38 = vector.extract_strided_slice %11 {offsets = [0, 256], sizes = [8, 128], strides = [1, 1]} : vector<8x384xf32> to vector<8x128xf32>
    %39 = vector.extract_strided_slice %13 {offsets = [0, 256], sizes = [8, 128], strides = [1, 1]} : vector<8x384xf32> to vector<8x128xf32>
    %40 = vector.broadcast %5 : vector<1x128xf32> to vector<8x128xf32>
    %41 = arith.addf %39, %40 : vector<8x128xf32>
    %42 = arith.mulf %25, %41 : vector<8x128xf32>
    %43 = arith.addf %38, %42 : vector<8x128xf32>
    %44 = math.tanh %43 : vector<8x128xf32>
    %cst_20 = arith.constant 1.000000e+00 : f32
    %45 = vector.broadcast %cst_20 : f32 to vector<8x128xf32>
    %46 = arith.subf %45, %37 : vector<8x128xf32>
    %47 = arith.mulf %46, %44 : vector<8x128xf32>
    %48 = arith.mulf %37, %6 : vector<8x128xf32>
    %49 = arith.addf %47, %48 : vector<8x128xf32>
    %c1 = arith.constant 1 : index
    %c0_21 = arith.constant 0 : index
    %c0_22 = arith.constant 0 : index
    %50 = vector.load %arg1[%c1, %c0_21, %c0_22] : memref<8x8x512xbf16, #tpu.memory_space<vmem>>, vector<1x8x512xbf16>
    %51 = vector.shape_cast %50 : vector<1x8x512xbf16> to vector<8x512xbf16>
    %cst_23 = arith.constant dense<0.000000e+00> : vector<8x384xf32>
    %52 = tpu.matmul %51, %0, %cst_23 {dimension_numbers = #tpu.dot_dimension_numbers<[1], [0], [0], [1], [0, 0, 1, 1], [], []>} : vector<8x512xbf16>, vector<512x384xbf16>, vector<8x384xf32> -> vector<8x384xf32>
    %53 = vector.broadcast %2 : vector<1x384xf32> to vector<8x384xf32>
    %54 = arith.addf %52, %53 : vector<8x384xf32>
    %55 = arith.truncf %49 : vector<8x128xf32> to vector<8x128xbf16>
    %cst_24 = arith.constant dense<0.000000e+00> : vector<8x384xf32>
    %56 = tpu.matmul %55, %1, %cst_24 {dimension_numbers = #tpu.dot_dimension_numbers<[1], [0], [0], [1], [0, 0, 1, 1], [], []>} : vector<8x128xbf16>, vector<128x384xbf16>, vector<8x384xf32> -> vector<8x384xf32>
    %57 = vector.extract_strided_slice %54 {offsets = [0, 0], sizes = [8, 128], strides = [1, 1]} : vector<8x384xf32> to vector<8x128xf32>
    %58 = vector.extract_strided_slice %56 {offsets = [0, 0], sizes = [8, 128], strides = [1, 1]} : vector<8x384xf32> to vector<8x128xf32>
    %59 = arith.addf %57, %58 : vector<8x128xf32>
    %60 = vector.broadcast %3 : vector<1x128xf32> to vector<8x128xf32>
    %61 = arith.addf %59, %60 : vector<8x128xf32>
    %cst_25 = arith.constant 0.000000e+00 : f32
    %62 = vector.broadcast %cst_25 : f32 to vector<8x128xf32>
    %63 = arith.subf %62, %61 : vector<8x128xf32>
    %64 = math.exp %63 : vector<8x128xf32>
    %cst_26 = arith.constant 1.000000e+00 : f32
    %65 = vector.broadcast %cst_26 : f32 to vector<8x128xf32>
    %66 = arith.addf %65, %64 : vector<8x128xf32>
    %cst_27 = arith.constant 1.000000e+00 : f32
    %67 = vector.broadcast %cst_27 : f32 to vector<8x128xf32>
    %68 = arith.divf %67, %66 : vector<8x128xf32>
    %69 = vector.extract_strided_slice %54 {offsets = [0, 128], sizes = [8, 128], strides = [1, 1]} : vector<8x384xf32> to vector<8x128xf32>
    %70 = vector.extract_strided_slice %56 {offsets = [0, 128], sizes = [8, 128], strides = [1, 1]} : vector<8x384xf32> to vector<8x128xf32>
    %71 = arith.addf %69, %70 : vector<8x128xf32>
    %72 = vector.broadcast %4 : vector<1x128xf32> to vector<8x128xf32>
    %73 = arith.addf %71, %72 : vector<8x128xf32>
    %cst_28 = arith.constant 0.000000e+00 : f32
    %74 = vector.broadcast %cst_28 : f32 to vector<8x128xf32>
    %75 = arith.subf %74, %73 : vector<8x128xf32>
    %76 = math.exp %75 : vector<8x128xf32>
    %cst_29 = arith.constant 1.000000e+00 : f32
    %77 = vector.broadcast %cst_29 : f32 to vector<8x128xf32>
    %78 = arith.addf %77, %76 : vector<8x128xf32>
    %cst_30 = arith.constant 1.000000e+00 : f32
    %79 = vector.broadcast %cst_30 : f32 to vector<8x128xf32>
    %80 = arith.divf %79, %78 : vector<8x128xf32>
    %81 = vector.extract_strided_slice %54 {offsets = [0, 256], sizes = [8, 128], strides = [1, 1]} : vector<8x384xf32> to vector<8x128xf32>
    %82 = vector.extract_strided_slice %56 {offsets = [0, 256], sizes = [8, 128], strides = [1, 1]} : vector<8x384xf32> to vector<8x128xf32>
    %83 = vector.broadcast %5 : vector<1x128xf32> to vector<8x128xf32>
    %84 = arith.addf %82, %83 : vector<8x128xf32>
    %85 = arith.mulf %68, %84 : vector<8x128xf32>
    %86 = arith.addf %81, %85 : vector<8x128xf32>
    %87 = math.tanh %86 : vector<8x128xf32>
    %cst_31 = arith.constant 1.000000e+00 : f32
    %88 = vector.broadcast %cst_31 : f32 to vector<8x128xf32>
    %89 = arith.subf %88, %80 : vector<8x128xf32>
    %90 = arith.mulf %89, %87 : vector<8x128xf32>
    %91 = arith.mulf %80, %49 : vector<8x128xf32>
    %92 = arith.addf %90, %91 : vector<8x128xf32>
    %c2 = arith.constant 2 : index
    %c0_32 = arith.constant 0 : index
    %c0_33 = arith.constant 0 : index
    %93 = vector.load %arg1[%c2, %c0_32, %c0_33] : memref<8x8x512xbf16, #tpu.memory_space<vmem>>, vector<1x8x512xbf16>
    %94 = vector.shape_cast %93 : vector<1x8x512xbf16> to vector<8x512xbf16>
    %cst_34 = arith.constant dense<0.000000e+00> : vector<8x384xf32>
    %95 = tpu.matmul %94, %0, %cst_34 {dimension_numbers = #tpu.dot_dimension_numbers<[1], [0], [0], [1], [0, 0, 1, 1], [], []>} : vector<8x512xbf16>, vector<512x384xbf16>, vector<8x384xf32> -> vector<8x384xf32>
    %96 = vector.broadcast %2 : vector<1x384xf32> to vector<8x384xf32>
    %97 = arith.addf %95, %96 : vector<8x384xf32>
    %98 = arith.truncf %92 : vector<8x128xf32> to vector<8x128xbf16>
    %cst_35 = arith.constant dense<0.000000e+00> : vector<8x384xf32>
    %99 = tpu.matmul %98, %1, %cst_35 {dimension_numbers = #tpu.dot_dimension_numbers<[1], [0], [0], [1], [0, 0, 1, 1], [], []>} : vector<8x128xbf16>, vector<128x384xbf16>, vector<8x384xf32> -> vector<8x384xf32>
    %100 = vector.extract_strided_slice %97 {offsets = [0, 0], sizes = [8, 128], strides = [1, 1]} : vector<8x384xf32> to vector<8x128xf32>
    %101 = vector.extract_strided_slice %99 {offsets = [0, 0], sizes = [8, 128], strides = [1, 1]} : vector<8x384xf32> to vector<8x128xf32>
    %102 = arith.addf %100, %101 : vector<8x128xf32>
    %103 = vector.broadcast %3 : vector<1x128xf32> to vector<8x128xf32>
    %104 = arith.addf %102, %103 : vector<8x128xf32>
    %cst_36 = arith.constant 0.000000e+00 : f32
    %105 = vector.broadcast %cst_36 : f32 to vector<8x128xf32>
    %106 = arith.subf %105, %104 : vector<8x128xf32>
    %107 = math.exp %106 : vector<8x128xf32>
    %cst_37 = arith.constant 1.000000e+00 : f32
    %108 = vector.broadcast %cst_37 : f32 to vector<8x128xf32>
    %109 = arith.addf %108, %107 : vector<8x128xf32>
    %cst_38 = arith.constant 1.000000e+00 : f32
    %110 = vector.broadcast %cst_38 : f32 to vector<8x128xf32>
    %111 = arith.divf %110, %109 : vector<8x128xf32>
    %112 = vector.extract_strided_slice %97 {offsets = [0, 128], sizes = [8, 128], strides = [1, 1]} : vector<8x384xf32> to vector<8x128xf32>
    %113 = vector.extract_strided_slice %99 {offsets = [0, 128], sizes = [8, 128], strides = [1, 1]} : vector<8x384xf32> to vector<8x128xf32>
    %114 = arith.addf %112, %113 : vector<8x128xf32>
    %115 = vector.broadcast %4 : vector<1x128xf32> to vector<8x128xf32>
    %116 = arith.addf %114, %115 : vector<8x128xf32>
    %cst_39 = arith.constant 0.000000e+00 : f32
    %117 = vector.broadcast %cst_39 : f32 to vector<8x128xf32>
    %118 = arith.subf %117, %116 : vector<8x128xf32>
    %119 = math.exp %118 : vector<8x128xf32>
    %cst_40 = arith.constant 1.000000e+00 : f32
    %120 = vector.broadcast %cst_40 : f32 to vector<8x128xf32>
    %121 = arith.addf %120, %119 : vector<8x128xf32>
    %cst_41 = arith.constant 1.000000e+00 : f32
    %122 = vector.broadcast %cst_41 : f32 to vector<8x128xf32>
    %123 = arith.divf %122, %121 : vector<8x128xf32>
    %124 = vector.extract_strided_slice %97 {offsets = [0, 256], sizes = [8, 128], strides = [1, 1]} : vector<8x384xf32> to vector<8x128xf32>
    %125 = vector.extract_strided_slice %99 {offsets = [0, 256], sizes = [8, 128], strides = [1, 1]} : vector<8x384xf32> to vector<8x128xf32>
    %126 = vector.broadcast %5 : vector<1x128xf32> to vector<8x128xf32>
    %127 = arith.addf %125, %126 : vector<8x128xf32>
    %128 = arith.mulf %111, %127 : vector<8x128xf32>
    %129 = arith.addf %124, %128 : vector<8x128xf32>
    %130 = math.tanh %129 : vector<8x128xf32>
    %cst_42 = arith.constant 1.000000e+00 : f32
    %131 = vector.broadcast %cst_42 : f32 to vector<8x128xf32>
    %132 = arith.subf %131, %123 : vector<8x128xf32>
    %133 = arith.mulf %132, %130 : vector<8x128xf32>
    %134 = arith.mulf %123, %92 : vector<8x128xf32>
    %135 = arith.addf %133, %134 : vector<8x128xf32>
    %c3 = arith.constant 3 : index
    %c0_43 = arith.constant 0 : index
    %c0_44 = arith.constant 0 : index
    %136 = vector.load %arg1[%c3, %c0_43, %c0_44] : memref<8x8x512xbf16, #tpu.memory_space<vmem>>, vector<1x8x512xbf16>
    %137 = vector.shape_cast %136 : vector<1x8x512xbf16> to vector<8x512xbf16>
    %cst_45 = arith.constant dense<0.000000e+00> : vector<8x384xf32>
    %138 = tpu.matmul %137, %0, %cst_45 {dimension_numbers = #tpu.dot_dimension_numbers<[1], [0], [0], [1], [0, 0, 1, 1], [], []>} : vector<8x512xbf16>, vector<512x384xbf16>, vector<8x384xf32> -> vector<8x384xf32>
    %139 = vector.broadcast %2 : vector<1x384xf32> to vector<8x384xf32>
    %140 = arith.addf %138, %139 : vector<8x384xf32>
    %141 = arith.truncf %135 : vector<8x128xf32> to vector<8x128xbf16>
    %cst_46 = arith.constant dense<0.000000e+00> : vector<8x384xf32>
    %142 = tpu.matmul %141, %1, %cst_46 {dimension_numbers = #tpu.dot_dimension_numbers<[1], [0], [0], [1], [0, 0, 1, 1], [], []>} : vector<8x128xbf16>, vector<128x384xbf16>, vector<8x384xf32> -> vector<8x384xf32>
    %143 = vector.extract_strided_slice %140 {offsets = [0, 0], sizes = [8, 128], strides = [1, 1]} : vector<8x384xf32> to vector<8x128xf32>
    %144 = vector.extract_strided_slice %142 {offsets = [0, 0], sizes = [8, 128], strides = [1, 1]} : vector<8x384xf32> to vector<8x128xf32>
    %145 = arith.addf %143, %144 : vector<8x128xf32>
    %146 = vector.broadcast %3 : vector<1x128xf32> to vector<8x128xf32>
    %147 = arith.addf %145, %146 : vector<8x128xf32>
    %cst_47 = arith.constant 0.000000e+00 : f32
    %148 = vector.broadcast %cst_47 : f32 to vector<8x128xf32>
    %149 = arith.subf %148, %147 : vector<8x128xf32>
    %150 = math.exp %149 : vector<8x128xf32>
    %cst_48 = arith.constant 1.000000e+00 : f32
    %151 = vector.broadcast %cst_48 : f32 to vector<8x128xf32>
    %152 = arith.addf %151, %150 : vector<8x128xf32>
    %cst_49 = arith.constant 1.000000e+00 : f32
    %153 = vector.broadcast %cst_49 : f32 to vector<8x128xf32>
    %154 = arith.divf %153, %152 : vector<8x128xf32>
    %155 = vector.extract_strided_slice %140 {offsets = [0, 128], sizes = [8, 128], strides = [1, 1]} : vector<8x384xf32> to vector<8x128xf32>
    %156 = vector.extract_strided_slice %142 {offsets = [0, 128], sizes = [8, 128], strides = [1, 1]} : vector<8x384xf32> to vector<8x128xf32>
    %157 = arith.addf %155, %156 : vector<8x128xf32>
    %158 = vector.broadcast %4 : vector<1x128xf32> to vector<8x128xf32>
    %159 = arith.addf %157, %158 : vector<8x128xf32>
    %cst_50 = arith.constant 0.000000e+00 : f32
    %160 = vector.broadcast %cst_50 : f32 to vector<8x128xf32>
    %161 = arith.subf %160, %159 : vector<8x128xf32>
    %162 = math.exp %161 : vector<8x128xf32>
    %cst_51 = arith.constant 1.000000e+00 : f32
    %163 = vector.broadcast %cst_51 : f32 to vector<8x128xf32>
    %164 = arith.addf %163, %162 : vector<8x128xf32>
    %cst_52 = arith.constant 1.000000e+00 : f32
    %165 = vector.broadcast %cst_52 : f32 to vector<8x128xf32>
    %166 = arith.divf %165, %164 : vector<8x128xf32>
    %167 = vector.extract_strided_slice %140 {offsets = [0, 256], sizes = [8, 128], strides = [1, 1]} : vector<8x384xf32> to vector<8x128xf32>
    %168 = vector.extract_strided_slice %142 {offsets = [0, 256], sizes = [8, 128], strides = [1, 1]} : vector<8x384xf32> to vector<8x128xf32>
    %169 = vector.broadcast %5 : vector<1x128xf32> to vector<8x128xf32>
    %170 = arith.addf %168, %169 : vector<8x128xf32>
    %171 = arith.mulf %154, %170 : vector<8x128xf32>
    %172 = arith.addf %167, %171 : vector<8x128xf32>
    %173 = math.tanh %172 : vector<8x128xf32>
    %cst_53 = arith.constant 1.000000e+00 : f32
    %174 = vector.broadcast %cst_53 : f32 to vector<8x128xf32>
    %175 = arith.subf %174, %166 : vector<8x128xf32>
    %176 = arith.mulf %175, %173 : vector<8x128xf32>
    %177 = arith.mulf %166, %135 : vector<8x128xf32>
    %178 = arith.addf %176, %177 : vector<8x128xf32>
    %c4 = arith.constant 4 : index
    %c0_54 = arith.constant 0 : index
    %c0_55 = arith.constant 0 : index
    %179 = vector.load %arg1[%c4, %c0_54, %c0_55] : memref<8x8x512xbf16, #tpu.memory_space<vmem>>, vector<1x8x512xbf16>
    %180 = vector.shape_cast %179 : vector<1x8x512xbf16> to vector<8x512xbf16>
    %cst_56 = arith.constant dense<0.000000e+00> : vector<8x384xf32>
    %181 = tpu.matmul %180, %0, %cst_56 {dimension_numbers = #tpu.dot_dimension_numbers<[1], [0], [0], [1], [0, 0, 1, 1], [], []>} : vector<8x512xbf16>, vector<512x384xbf16>, vector<8x384xf32> -> vector<8x384xf32>
    %182 = vector.broadcast %2 : vector<1x384xf32> to vector<8x384xf32>
    %183 = arith.addf %181, %182 : vector<8x384xf32>
    %184 = arith.truncf %178 : vector<8x128xf32> to vector<8x128xbf16>
    %cst_57 = arith.constant dense<0.000000e+00> : vector<8x384xf32>
    %185 = tpu.matmul %184, %1, %cst_57 {dimension_numbers = #tpu.dot_dimension_numbers<[1], [0], [0], [1], [0, 0, 1, 1], [], []>} : vector<8x128xbf16>, vector<128x384xbf16>, vector<8x384xf32> -> vector<8x384xf32>
    %186 = vector.extract_strided_slice %183 {offsets = [0, 0], sizes = [8, 128], strides = [1, 1]} : vector<8x384xf32> to vector<8x128xf32>
    %187 = vector.extract_strided_slice %185 {offsets = [0, 0], sizes = [8, 128], strides = [1, 1]} : vector<8x384xf32> to vector<8x128xf32>
    %188 = arith.addf %186, %187 : vector<8x128xf32>
    %189 = vector.broadcast %3 : vector<1x128xf32> to vector<8x128xf32>
    %190 = arith.addf %188, %189 : vector<8x128xf32>
    %cst_58 = arith.constant 0.000000e+00 : f32
    %191 = vector.broadcast %cst_58 : f32 to vector<8x128xf32>
    %192 = arith.subf %191, %190 : vector<8x128xf32>
    %193 = math.exp %192 : vector<8x128xf32>
    %cst_59 = arith.constant 1.000000e+00 : f32
    %194 = vector.broadcast %cst_59 : f32 to vector<8x128xf32>
    %195 = arith.addf %194, %193 : vector<8x128xf32>
    %cst_60 = arith.constant 1.000000e+00 : f32
    %196 = vector.broadcast %cst_60 : f32 to vector<8x128xf32>
    %197 = arith.divf %196, %195 : vector<8x128xf32>
    %198 = vector.extract_strided_slice %183 {offsets = [0, 128], sizes = [8, 128], strides = [1, 1]} : vector<8x384xf32> to vector<8x128xf32>
    %199 = vector.extract_strided_slice %185 {offsets = [0, 128], sizes = [8, 128], strides = [1, 1]} : vector<8x384xf32> to vector<8x128xf32>
    %200 = arith.addf %198, %199 : vector<8x128xf32>
    %201 = vector.broadcast %4 : vector<1x128xf32> to vector<8x128xf32>
    %202 = arith.addf %200, %201 : vector<8x128xf32>
    %cst_61 = arith.constant 0.000000e+00 : f32
    %203 = vector.broadcast %cst_61 : f32 to vector<8x128xf32>
    %204 = arith.subf %203, %202 : vector<8x128xf32>
    %205 = math.exp %204 : vector<8x128xf32>
    %cst_62 = arith.constant 1.000000e+00 : f32
    %206 = vector.broadcast %cst_62 : f32 to vector<8x128xf32>
    %207 = arith.addf %206, %205 : vector<8x128xf32>
    %cst_63 = arith.constant 1.000000e+00 : f32
    %208 = vector.broadcast %cst_63 : f32 to vector<8x128xf32>
    %209 = arith.divf %208, %207 : vector<8x128xf32>
    %210 = vector.extract_strided_slice %183 {offsets = [0, 256], sizes = [8, 128], strides = [1, 1]} : vector<8x384xf32> to vector<8x128xf32>
    %211 = vector.extract_strided_slice %185 {offsets = [0, 256], sizes = [8, 128], strides = [1, 1]} : vector<8x384xf32> to vector<8x128xf32>
    %212 = vector.broadcast %5 : vector<1x128xf32> to vector<8x128xf32>
    %213 = arith.addf %211, %212 : vector<8x128xf32>
    %214 = arith.mulf %197, %213 : vector<8x128xf32>
    %215 = arith.addf %210, %214 : vector<8x128xf32>
    %216 = math.tanh %215 : vector<8x128xf32>
    %cst_64 = arith.constant 1.000000e+00 : f32
    %217 = vector.broadcast %cst_64 : f32 to vector<8x128xf32>
    %218 = arith.subf %217, %209 : vector<8x128xf32>
    %219 = arith.mulf %218, %216 : vector<8x128xf32>
    %220 = arith.mulf %209, %178 : vector<8x128xf32>
    %221 = arith.addf %219, %220 : vector<8x128xf32>
    %c5 = arith.constant 5 : index
    %c0_65 = arith.constant 0 : index
    %c0_66 = arith.constant 0 : index
    %222 = vector.load %arg1[%c5, %c0_65, %c0_66] : memref<8x8x512xbf16, #tpu.memory_space<vmem>>, vector<1x8x512xbf16>
    %223 = vector.shape_cast %222 : vector<1x8x512xbf16> to vector<8x512xbf16>
    %cst_67 = arith.constant dense<0.000000e+00> : vector<8x384xf32>
    %224 = tpu.matmul %223, %0, %cst_67 {dimension_numbers = #tpu.dot_dimension_numbers<[1], [0], [0], [1], [0, 0, 1, 1], [], []>} : vector<8x512xbf16>, vector<512x384xbf16>, vector<8x384xf32> -> vector<8x384xf32>
    %225 = vector.broadcast %2 : vector<1x384xf32> to vector<8x384xf32>
    %226 = arith.addf %224, %225 : vector<8x384xf32>
    %227 = arith.truncf %221 : vector<8x128xf32> to vector<8x128xbf16>
    %cst_68 = arith.constant dense<0.000000e+00> : vector<8x384xf32>
    %228 = tpu.matmul %227, %1, %cst_68 {dimension_numbers = #tpu.dot_dimension_numbers<[1], [0], [0], [1], [0, 0, 1, 1], [], []>} : vector<8x128xbf16>, vector<128x384xbf16>, vector<8x384xf32> -> vector<8x384xf32>
    %229 = vector.extract_strided_slice %226 {offsets = [0, 0], sizes = [8, 128], strides = [1, 1]} : vector<8x384xf32> to vector<8x128xf32>
    %230 = vector.extract_strided_slice %228 {offsets = [0, 0], sizes = [8, 128], strides = [1, 1]} : vector<8x384xf32> to vector<8x128xf32>
    %231 = arith.addf %229, %230 : vector<8x128xf32>
    %232 = vector.broadcast %3 : vector<1x128xf32> to vector<8x128xf32>
    %233 = arith.addf %231, %232 : vector<8x128xf32>
    %cst_69 = arith.constant 0.000000e+00 : f32
    %234 = vector.broadcast %cst_69 : f32 to vector<8x128xf32>
    %235 = arith.subf %234, %233 : vector<8x128xf32>
    %236 = math.exp %235 : vector<8x128xf32>
    %cst_70 = arith.constant 1.000000e+00 : f32
    %237 = vector.broadcast %cst_70 : f32 to vector<8x128xf32>
    %238 = arith.addf %237, %236 : vector<8x128xf32>
    %cst_71 = arith.constant 1.000000e+00 : f32
    %239 = vector.broadcast %cst_71 : f32 to vector<8x128xf32>
    %240 = arith.divf %239, %238 : vector<8x128xf32>
    %241 = vector.extract_strided_slice %226 {offsets = [0, 128], sizes = [8, 128], strides = [1, 1]} : vector<8x384xf32> to vector<8x128xf32>
    %242 = vector.extract_strided_slice %228 {offsets = [0, 128], sizes = [8, 128], strides = [1, 1]} : vector<8x384xf32> to vector<8x128xf32>
    %243 = arith.addf %241, %242 : vector<8x128xf32>
    %244 = vector.broadcast %4 : vector<1x128xf32> to vector<8x128xf32>
    %245 = arith.addf %243, %244 : vector<8x128xf32>
    %cst_72 = arith.constant 0.000000e+00 : f32
    %246 = vector.broadcast %cst_72 : f32 to vector<8x128xf32>
    %247 = arith.subf %246, %245 : vector<8x128xf32>
    %248 = math.exp %247 : vector<8x128xf32>
    %cst_73 = arith.constant 1.000000e+00 : f32
    %249 = vector.broadcast %cst_73 : f32 to vector<8x128xf32>
    %250 = arith.addf %249, %248 : vector<8x128xf32>
    %cst_74 = arith.constant 1.000000e+00 : f32
    %251 = vector.broadcast %cst_74 : f32 to vector<8x128xf32>
    %252 = arith.divf %251, %250 : vector<8x128xf32>
    %253 = vector.extract_strided_slice %226 {offsets = [0, 256], sizes = [8, 128], strides = [1, 1]} : vector<8x384xf32> to vector<8x128xf32>
    %254 = vector.extract_strided_slice %228 {offsets = [0, 256], sizes = [8, 128], strides = [1, 1]} : vector<8x384xf32> to vector<8x128xf32>
    %255 = vector.broadcast %5 : vector<1x128xf32> to vector<8x128xf32>
    %256 = arith.addf %254, %255 : vector<8x128xf32>
    %257 = arith.mulf %240, %256 : vector<8x128xf32>
    %258 = arith.addf %253, %257 : vector<8x128xf32>
    %259 = math.tanh %258 : vector<8x128xf32>
    %cst_75 = arith.constant 1.000000e+00 : f32
    %260 = vector.broadcast %cst_75 : f32 to vector<8x128xf32>
    %261 = arith.subf %260, %252 : vector<8x128xf32>
    %262 = arith.mulf %261, %259 : vector<8x128xf32>
    %263 = arith.mulf %252, %221 : vector<8x128xf32>
    %264 = arith.addf %262, %263 : vector<8x128xf32>
    %c6 = arith.constant 6 : index
    %c0_76 = arith.constant 0 : index
    %c0_77 = arith.constant 0 : index
    %265 = vector.load %arg1[%c6, %c0_76, %c0_77] : memref<8x8x512xbf16, #tpu.memory_space<vmem>>, vector<1x8x512xbf16>
    %266 = vector.shape_cast %265 : vector<1x8x512xbf16> to vector<8x512xbf16>
    %cst_78 = arith.constant dense<0.000000e+00> : vector<8x384xf32>
    %267 = tpu.matmul %266, %0, %cst_78 {dimension_numbers = #tpu.dot_dimension_numbers<[1], [0], [0], [1], [0, 0, 1, 1], [], []>} : vector<8x512xbf16>, vector<512x384xbf16>, vector<8x384xf32> -> vector<8x384xf32>
    %268 = vector.broadcast %2 : vector<1x384xf32> to vector<8x384xf32>
    %269 = arith.addf %267, %268 : vector<8x384xf32>
    %270 = arith.truncf %264 : vector<8x128xf32> to vector<8x128xbf16>
    %cst_79 = arith.constant dense<0.000000e+00> : vector<8x384xf32>
    %271 = tpu.matmul %270, %1, %cst_79 {dimension_numbers = #tpu.dot_dimension_numbers<[1], [0], [0], [1], [0, 0, 1, 1], [], []>} : vector<8x128xbf16>, vector<128x384xbf16>, vector<8x384xf32> -> vector<8x384xf32>
    %272 = vector.extract_strided_slice %269 {offsets = [0, 0], sizes = [8, 128], strides = [1, 1]} : vector<8x384xf32> to vector<8x128xf32>
    %273 = vector.extract_strided_slice %271 {offsets = [0, 0], sizes = [8, 128], strides = [1, 1]} : vector<8x384xf32> to vector<8x128xf32>
    %274 = arith.addf %272, %273 : vector<8x128xf32>
    %275 = vector.broadcast %3 : vector<1x128xf32> to vector<8x128xf32>
    %276 = arith.addf %274, %275 : vector<8x128xf32>
    %cst_80 = arith.constant 0.000000e+00 : f32
    %277 = vector.broadcast %cst_80 : f32 to vector<8x128xf32>
    %278 = arith.subf %277, %276 : vector<8x128xf32>
    %279 = math.exp %278 : vector<8x128xf32>
    %cst_81 = arith.constant 1.000000e+00 : f32
    %280 = vector.broadcast %cst_81 : f32 to vector<8x128xf32>
    %281 = arith.addf %280, %279 : vector<8x128xf32>
    %cst_82 = arith.constant 1.000000e+00 : f32
    %282 = vector.broadcast %cst_82 : f32 to vector<8x128xf32>
    %283 = arith.divf %282, %281 : vector<8x128xf32>
    %284 = vector.extract_strided_slice %269 {offsets = [0, 128], sizes = [8, 128], strides = [1, 1]} : vector<8x384xf32> to vector<8x128xf32>
    %285 = vector.extract_strided_slice %271 {offsets = [0, 128], sizes = [8, 128], strides = [1, 1]} : vector<8x384xf32> to vector<8x128xf32>
    %286 = arith.addf %284, %285 : vector<8x128xf32>
    %287 = vector.broadcast %4 : vector<1x128xf32> to vector<8x128xf32>
    %288 = arith.addf %286, %287 : vector<8x128xf32>
    %cst_83 = arith.constant 0.000000e+00 : f32
    %289 = vector.broadcast %cst_83 : f32 to vector<8x128xf32>
    %290 = arith.subf %289, %288 : vector<8x128xf32>
    %291 = math.exp %290 : vector<8x128xf32>
    %cst_84 = arith.constant 1.000000e+00 : f32
    %292 = vector.broadcast %cst_84 : f32 to vector<8x128xf32>
    %293 = arith.addf %292, %291 : vector<8x128xf32>
    %cst_85 = arith.constant 1.000000e+00 : f32
    %294 = vector.broadcast %cst_85 : f32 to vector<8x128xf32>
    %295 = arith.divf %294, %293 : vector<8x128xf32>
    %296 = vector.extract_strided_slice %269 {offsets = [0, 256], sizes = [8, 128], strides = [1, 1]} : vector<8x384xf32> to vector<8x128xf32>
    %297 = vector.extract_strided_slice %271 {offsets = [0, 256], sizes = [8, 128], strides = [1, 1]} : vector<8x384xf32> to vector<8x128xf32>
    %298 = vector.broadcast %5 : vector<1x128xf32> to vector<8x128xf32>
    %299 = arith.addf %297, %298 : vector<8x128xf32>
    %300 = arith.mulf %283, %299 : vector<8x128xf32>
    %301 = arith.addf %296, %300 : vector<8x128xf32>
    %302 = math.tanh %301 : vector<8x128xf32>
    %cst_86 = arith.constant 1.000000e+00 : f32
    %303 = vector.broadcast %cst_86 : f32 to vector<8x128xf32>
    %304 = arith.subf %303, %295 : vector<8x128xf32>
    %305 = arith.mulf %304, %302 : vector<8x128xf32>
    %306 = arith.mulf %295, %264 : vector<8x128xf32>
    %307 = arith.addf %305, %306 : vector<8x128xf32>
    %c7 = arith.constant 7 : index
    %c0_87 = arith.constant 0 : index
    %c0_88 = arith.constant 0 : index
    %308 = vector.load %arg1[%c7, %c0_87, %c0_88] : memref<8x8x512xbf16, #tpu.memory_space<vmem>>, vector<1x8x512xbf16>
    %309 = vector.shape_cast %308 : vector<1x8x512xbf16> to vector<8x512xbf16>
    %cst_89 = arith.constant dense<0.000000e+00> : vector<8x384xf32>
    %310 = tpu.matmul %309, %0, %cst_89 {dimension_numbers = #tpu.dot_dimension_numbers<[1], [0], [0], [1], [0, 0, 1, 1], [], []>} : vector<8x512xbf16>, vector<512x384xbf16>, vector<8x384xf32> -> vector<8x384xf32>
    %311 = vector.broadcast %2 : vector<1x384xf32> to vector<8x384xf32>
    %312 = arith.addf %310, %311 : vector<8x384xf32>
    %313 = arith.truncf %307 : vector<8x128xf32> to vector<8x128xbf16>
    %cst_90 = arith.constant dense<0.000000e+00> : vector<8x384xf32>
    %314 = tpu.matmul %313, %1, %cst_90 {dimension_numbers = #tpu.dot_dimension_numbers<[1], [0], [0], [1], [0, 0, 1, 1], [], []>} : vector<8x128xbf16>, vector<128x384xbf16>, vector<8x384xf32> -> vector<8x384xf32>
    %315 = vector.extract_strided_slice %312 {offsets = [0, 0], sizes = [8, 128], strides = [1, 1]} : vector<8x384xf32> to vector<8x128xf32>
    %316 = vector.extract_strided_slice %314 {offsets = [0, 0], sizes = [8, 128], strides = [1, 1]} : vector<8x384xf32> to vector<8x128xf32>
    %317 = arith.addf %315, %316 : vector<8x128xf32>
    %318 = vector.broadcast %3 : vector<1x128xf32> to vector<8x128xf32>
    %319 = arith.addf %317, %318 : vector<8x128xf32>
    %cst_91 = arith.constant 0.000000e+00 : f32
    %320 = vector.broadcast %cst_91 : f32 to vector<8x128xf32>
    %321 = arith.subf %320, %319 : vector<8x128xf32>
    %322 = math.exp %321 : vector<8x128xf32>
    %cst_92 = arith.constant 1.000000e+00 : f32
    %323 = vector.broadcast %cst_92 : f32 to vector<8x128xf32>
    %324 = arith.addf %323, %322 : vector<8x128xf32>
    %cst_93 = arith.constant 1.000000e+00 : f32
    %325 = vector.broadcast %cst_93 : f32 to vector<8x128xf32>
    %326 = arith.divf %325, %324 : vector<8x128xf32>
    %327 = vector.extract_strided_slice %312 {offsets = [0, 128], sizes = [8, 128], strides = [1, 1]} : vector<8x384xf32> to vector<8x128xf32>
    %328 = vector.extract_strided_slice %314 {offsets = [0, 128], sizes = [8, 128], strides = [1, 1]} : vector<8x384xf32> to vector<8x128xf32>
    %329 = arith.addf %327, %328 : vector<8x128xf32>
    %330 = vector.broadcast %4 : vector<1x128xf32> to vector<8x128xf32>
    %331 = arith.addf %329, %330 : vector<8x128xf32>
    %cst_94 = arith.constant 0.000000e+00 : f32
    %332 = vector.broadcast %cst_94 : f32 to vector<8x128xf32>
    %333 = arith.subf %332, %331 : vector<8x128xf32>
    %334 = math.exp %333 : vector<8x128xf32>
    %cst_95 = arith.constant 1.000000e+00 : f32
    %335 = vector.broadcast %cst_95 : f32 to vector<8x128xf32>
    %336 = arith.addf %335, %334 : vector<8x128xf32>
    %cst_96 = arith.constant 1.000000e+00 : f32
    %337 = vector.broadcast %cst_96 : f32 to vector<8x128xf32>
    %338 = arith.divf %337, %336 : vector<8x128xf32>
    %339 = vector.extract_strided_slice %312 {offsets = [0, 256], sizes = [8, 128], strides = [1, 1]} : vector<8x384xf32> to vector<8x128xf32>
    %340 = vector.extract_strided_slice %314 {offsets = [0, 256], sizes = [8, 128], strides = [1, 1]} : vector<8x384xf32> to vector<8x128xf32>
    %341 = vector.broadcast %5 : vector<1x128xf32> to vector<8x128xf32>
    %342 = arith.addf %340, %341 : vector<8x128xf32>
    %343 = arith.mulf %326, %342 : vector<8x128xf32>
    %344 = arith.addf %339, %343 : vector<8x128xf32>
    %345 = math.tanh %344 : vector<8x128xf32>
    %cst_97 = arith.constant 1.000000e+00 : f32
    %346 = vector.broadcast %cst_97 : f32 to vector<8x128xf32>
    %347 = arith.subf %346, %338 : vector<8x128xf32>
    %348 = arith.mulf %347, %345 : vector<8x128xf32>
    %349 = arith.mulf %338, %307 : vector<8x128xf32>
    %350 = arith.addf %348, %349 : vector<8x128xf32>
    %351 = arith.truncf %350 : vector<8x128xf32> to vector<8x128xbf16>
    %c0_98 = arith.constant 0 : index
    %c0_99 = arith.constant 0 : index
    %c0_100 = arith.constant 0 : index
    %352 = vector.load %arg6[%c0_98, %c0_99, %c0_100] : memref<2x128x128xbf16, #tpu.memory_space<vmem>>, vector<1x128x128xbf16>
    %353 = vector.shape_cast %352 : vector<1x128x128xbf16> to vector<128x128xbf16>
    %cst_101 = arith.constant dense<0.000000e+00> : vector<8x128xf32>
    %354 = tpu.matmul %351, %353, %cst_101 {dimension_numbers = #tpu.dot_dimension_numbers<[1], [0], [0], [1], [0, 0, 1, 1], [], []>} : vector<8x128xbf16>, vector<128x128xbf16>, vector<8x128xf32> -> vector<8x128xf32>
    %c0_102 = arith.constant 0 : index
    %c0_103 = arith.constant 0 : index
    %c0_104 = arith.constant 0 : index
    %355 = vector.load %arg7[%c0_102, %c0_103, %c0_104] : memref<2x1x128xf32, #tpu.memory_space<vmem>>, vector<1x1x128xf32>
    %356 = vector.shape_cast %355 : vector<1x1x128xf32> to vector<1x128xf32>
    %357 = vector.broadcast %356 : vector<1x128xf32> to vector<8x128xf32>
    %358 = arith.addf %354, %357 : vector<8x128xf32>
    %cst_105 = arith.constant 0.000000e+00 : f32
    %359 = vector.broadcast %cst_105 : f32 to vector<8x128xf32>
    %360 = arith.maximumf %358, %359 : vector<8x128xf32>
    %361 = arith.truncf %360 : vector<8x128xf32> to vector<8x128xbf16>
    %c0_106 = arith.constant 0 : index
    %c0_107 = arith.constant 0 : index
    %c0_108 = arith.constant 0 : index
    %362 = vector.load %arg8[%c0_106, %c0_107, %c0_108] : memref<2x128x128xbf16, #tpu.memory_space<vmem>>, vector<1x128x128xbf16>
    %363 = vector.shape_cast %362 : vector<1x128x128xbf16> to vector<128x128xbf16>
    %cst_109 = arith.constant dense<0.000000e+00> : vector<8x128xf32>
    %364 = tpu.matmul %361, %363, %cst_109 {dimension_numbers = #tpu.dot_dimension_numbers<[1], [0], [0], [1], [0, 0, 1, 1], [], []>} : vector<8x128xbf16>, vector<128x128xbf16>, vector<8x128xf32> -> vector<8x128xf32>
    %c0_110 = arith.constant 0 : index
    %c0_111 = arith.constant 0 : index
    %c0_112 = arith.constant 0 : index
    %365 = vector.load %arg9[%c0_110, %c0_111, %c0_112] : memref<2x1x128xf32, #tpu.memory_space<vmem>>, vector<1x1x128xf32>
    %366 = vector.shape_cast %365 : vector<1x1x128xf32> to vector<1x128xf32>
    %367 = vector.broadcast %366 : vector<1x128xf32> to vector<8x128xf32>
    %368 = arith.addf %364, %367 : vector<8x128xf32>
    %cst_113 = arith.constant 0.000000e+00 : f32
    %369 = vector.broadcast %cst_113 : f32 to vector<8x128xf32>
    %370 = arith.maximumf %368, %369 : vector<8x128xf32>
    %371 = arith.addf %370, %350 : vector<8x128xf32>
    %372 = arith.truncf %371 : vector<8x128xf32> to vector<8x128xbf16>
    %c1_114 = arith.constant 1 : index
    %c0_115 = arith.constant 0 : index
    %c0_116 = arith.constant 0 : index
    %373 = vector.load %arg6[%c1_114, %c0_115, %c0_116] : memref<2x128x128xbf16, #tpu.memory_space<vmem>>, vector<1x128x128xbf16>
    %374 = vector.shape_cast %373 : vector<1x128x128xbf16> to vector<128x128xbf16>
    %cst_117 = arith.constant dense<0.000000e+00> : vector<8x128xf32>
    %375 = tpu.matmul %372, %374, %cst_117 {dimension_numbers = #tpu.dot_dimension_numbers<[1], [0], [0], [1], [0, 0, 1, 1], [], []>} : vector<8x128xbf16>, vector<128x128xbf16>, vector<8x128xf32> -> vector<8x128xf32>
    %c1_118 = arith.constant 1 : index
    %c0_119 = arith.constant 0 : index
    %c0_120 = arith.constant 0 : index
    %376 = vector.load %arg7[%c1_118, %c0_119, %c0_120] : memref<2x1x128xf32, #tpu.memory_space<vmem>>, vector<1x1x128xf32>
    %377 = vector.shape_cast %376 : vector<1x1x128xf32> to vector<1x128xf32>
    %378 = vector.broadcast %377 : vector<1x128xf32> to vector<8x128xf32>
    %379 = arith.addf %375, %378 : vector<8x128xf32>
    %cst_121 = arith.constant 0.000000e+00 : f32
    %380 = vector.broadcast %cst_121 : f32 to vector<8x128xf32>
    %381 = arith.maximumf %379, %380 : vector<8x128xf32>
    %382 = arith.truncf %381 : vector<8x128xf32> to vector<8x128xbf16>
    %c1_122 = arith.constant 1 : index
    %c0_123 = arith.constant 0 : index
    %c0_124 = arith.constant 0 : index
    %383 = vector.load %arg8[%c1_122, %c0_123, %c0_124] : memref<2x128x128xbf16, #tpu.memory_space<vmem>>, vector<1x128x128xbf16>
    %384 = vector.shape_cast %383 : vector<1x128x128xbf16> to vector<128x128xbf16>
    %cst_125 = arith.constant dense<0.000000e+00> : vector<8x128xf32>
    %385 = tpu.matmul %382, %384, %cst_125 {dimension_numbers = #tpu.dot_dimension_numbers<[1], [0], [0], [1], [0, 0, 1, 1], [], []>} : vector<8x128xbf16>, vector<128x128xbf16>, vector<8x128xf32> -> vector<8x128xf32>
    %c1_126 = arith.constant 1 : index
    %c0_127 = arith.constant 0 : index
    %c0_128 = arith.constant 0 : index
    %386 = vector.load %arg9[%c1_126, %c0_127, %c0_128] : memref<2x1x128xf32, #tpu.memory_space<vmem>>, vector<1x1x128xf32>
    %387 = vector.shape_cast %386 : vector<1x1x128xf32> to vector<1x128xf32>
    %388 = vector.broadcast %387 : vector<1x128xf32> to vector<8x128xf32>
    %389 = arith.addf %385, %388 : vector<8x128xf32>
    %cst_129 = arith.constant 0.000000e+00 : f32
    %390 = vector.broadcast %cst_129 : f32 to vector<8x128xf32>
    %391 = arith.maximumf %389, %390 : vector<8x128xf32>
    %392 = arith.addf %391, %371 : vector<8x128xf32>
    %393 = arith.truncf %350 : vector<8x128xf32> to vector<8x128xbf16>
    %c0_130 = arith.constant 0 : index
    %c0_131 = arith.constant 0 : index
    %c0_132 = arith.constant 0 : index
    %394 = vector.load %arg10[%c0_130, %c0_131, %c0_132] : memref<2x128x128xbf16, #tpu.memory_space<vmem>>, vector<1x128x128xbf16>
    %395 = vector.shape_cast %394 : vector<1x128x128xbf16> to vector<128x128xbf16>
    %cst_133 = arith.constant dense<0.000000e+00> : vector<8x128xf32>
    %396 = tpu.matmul %393, %395, %cst_133 {dimension_numbers = #tpu.dot_dimension_numbers<[1], [0], [0], [1], [0, 0, 1, 1], [], []>} : vector<8x128xbf16>, vector<128x128xbf16>, vector<8x128xf32> -> vector<8x128xf32>
    %c0_134 = arith.constant 0 : index
    %c0_135 = arith.constant 0 : index
    %c0_136 = arith.constant 0 : index
    %397 = vector.load %arg11[%c0_134, %c0_135, %c0_136] : memref<2x1x128xf32, #tpu.memory_space<vmem>>, vector<1x1x128xf32>
    %398 = vector.shape_cast %397 : vector<1x1x128xf32> to vector<1x128xf32>
    %399 = vector.broadcast %398 : vector<1x128xf32> to vector<8x128xf32>
    %400 = arith.addf %396, %399 : vector<8x128xf32>
    %cst_137 = arith.constant 0.000000e+00 : f32
    %401 = vector.broadcast %cst_137 : f32 to vector<8x128xf32>
    %402 = arith.maximumf %400, %401 : vector<8x128xf32>
    %403 = arith.truncf %402 : vector<8x128xf32> to vector<8x128xbf16>
    %c0_138 = arith.constant 0 : index
    %c0_139 = arith.constant 0 : index
    %c0_140 = arith.constant 0 : index
    %404 = vector.load %arg12[%c0_138, %c0_139, %c0_140] : memref<2x128x128xbf16, #tpu.memory_space<vmem>>, vector<1x128x128xbf16>
    %405 = vector.shape_cast %404 : vector<1x128x128xbf16> to vector<128x128xbf16>
    %cst_141 = arith.constant dense<0.000000e+00> : vector<8x128xf32>
    %406 = tpu.matmul %403, %405, %cst_141 {dimension_numbers = #tpu.dot_dimension_numbers<[1], [0], [0], [1], [0, 0, 1, 1], [], []>} : vector<8x128xbf16>, vector<128x128xbf16>, vector<8x128xf32> -> vector<8x128xf32>
    %c0_142 = arith.constant 0 : index
    %c0_143 = arith.constant 0 : index
    %c0_144 = arith.constant 0 : index
    %407 = vector.load %arg13[%c0_142, %c0_143, %c0_144] : memref<2x1x128xf32, #tpu.memory_space<vmem>>, vector<1x1x128xf32>
    %408 = vector.shape_cast %407 : vector<1x1x128xf32> to vector<1x128xf32>
    %409 = vector.broadcast %408 : vector<1x128xf32> to vector<8x128xf32>
    %410 = arith.addf %406, %409 : vector<8x128xf32>
    %cst_145 = arith.constant 0.000000e+00 : f32
    %411 = vector.broadcast %cst_145 : f32 to vector<8x128xf32>
    %412 = arith.maximumf %410, %411 : vector<8x128xf32>
    %413 = arith.addf %412, %350 : vector<8x128xf32>
    %414 = arith.truncf %413 : vector<8x128xf32> to vector<8x128xbf16>
    %c1_146 = arith.constant 1 : index
    %c0_147 = arith.constant 0 : index
    %c0_148 = arith.constant 0 : index
    %415 = vector.load %arg10[%c1_146, %c0_147, %c0_148] : memref<2x128x128xbf16, #tpu.memory_space<vmem>>, vector<1x128x128xbf16>
    %416 = vector.shape_cast %415 : vector<1x128x128xbf16> to vector<128x128xbf16>
    %cst_149 = arith.constant dense<0.000000e+00> : vector<8x128xf32>
    %417 = tpu.matmul %414, %416, %cst_149 {dimension_numbers = #tpu.dot_dimension_numbers<[1], [0], [0], [1], [0, 0, 1, 1], [], []>} : vector<8x128xbf16>, vector<128x128xbf16>, vector<8x128xf32> -> vector<8x128xf32>
    %c1_150 = arith.constant 1 : index
    %c0_151 = arith.constant 0 : index
    %c0_152 = arith.constant 0 : index
    %418 = vector.load %arg11[%c1_150, %c0_151, %c0_152] : memref<2x1x128xf32, #tpu.memory_space<vmem>>, vector<1x1x128xf32>
    %419 = vector.shape_cast %418 : vector<1x1x128xf32> to vector<1x128xf32>
    %420 = vector.broadcast %419 : vector<1x128xf32> to vector<8x128xf32>
    %421 = arith.addf %417, %420 : vector<8x128xf32>
    %cst_153 = arith.constant 0.000000e+00 : f32
    %422 = vector.broadcast %cst_153 : f32 to vector<8x128xf32>
    %423 = arith.maximumf %421, %422 : vector<8x128xf32>
    %424 = arith.truncf %423 : vector<8x128xf32> to vector<8x128xbf16>
    %c1_154 = arith.constant 1 : index
    %c0_155 = arith.constant 0 : index
    %c0_156 = arith.constant 0 : index
    %425 = vector.load %arg12[%c1_154, %c0_155, %c0_156] : memref<2x128x128xbf16, #tpu.memory_space<vmem>>, vector<1x128x128xbf16>
    %426 = vector.shape_cast %425 : vector<1x128x128xbf16> to vector<128x128xbf16>
    %cst_157 = arith.constant dense<0.000000e+00> : vector<8x128xf32>
    %427 = tpu.matmul %424, %426, %cst_157 {dimension_numbers = #tpu.dot_dimension_numbers<[1], [0], [0], [1], [0, 0, 1, 1], [], []>} : vector<8x128xbf16>, vector<128x128xbf16>, vector<8x128xf32> -> vector<8x128xf32>
    %c1_158 = arith.constant 1 : index
    %c0_159 = arith.constant 0 : index
    %c0_160 = arith.constant 0 : index
    %428 = vector.load %arg13[%c1_158, %c0_159, %c0_160] : memref<2x1x128xf32, #tpu.memory_space<vmem>>, vector<1x1x128xf32>
    %429 = vector.shape_cast %428 : vector<1x1x128xf32> to vector<1x128xf32>
    %430 = vector.broadcast %429 : vector<1x128xf32> to vector<8x128xf32>
    %431 = arith.addf %427, %430 : vector<8x128xf32>
    %cst_161 = arith.constant 0.000000e+00 : f32
    %432 = vector.broadcast %cst_161 : f32 to vector<8x128xf32>
    %433 = arith.maximumf %431, %432 : vector<8x128xf32>
    %434 = arith.addf %433, %413 : vector<8x128xf32>
    %435 = arith.truncf %392 : vector<8x128xf32> to vector<8x128xbf16>
    %c0_162 = arith.constant 0 : index
    %c0_163 = arith.constant 0 : index
    %436 = vector.load %arg14[%c0_162, %c0_163] : memref<128x128xbf16, #tpu.memory_space<vmem>>, vector<128x128xbf16>
    %cst_164 = arith.constant dense<0.000000e+00> : vector<8x128xf32>
    %437 = tpu.matmul %435, %436, %cst_164 {dimension_numbers = #tpu.dot_dimension_numbers<[1], [0], [0], [1], [0, 0, 1, 1], [], []>} : vector<8x128xbf16>, vector<128x128xbf16>, vector<8x128xf32> -> vector<8x128xf32>
    %438 = arith.truncf %434 : vector<8x128xf32> to vector<8x128xbf16>
    %c0_165 = arith.constant 0 : index
    %c0_166 = arith.constant 0 : index
    %439 = vector.load %arg15[%c0_165, %c0_166] : memref<128x128xbf16, #tpu.memory_space<vmem>>, vector<128x128xbf16>
    %cst_167 = arith.constant dense<0.000000e+00> : vector<8x128xf32>
    %440 = tpu.matmul %438, %439, %cst_167 {dimension_numbers = #tpu.dot_dimension_numbers<[1], [0], [0], [1], [0, 0, 1, 1], [], []>} : vector<8x128xbf16>, vector<128x128xbf16>, vector<8x128xf32> -> vector<8x128xf32>
    %441 = arith.addf %437, %440 : vector<8x128xf32>
    %c0_168 = arith.constant 0 : index
    %c0_169 = arith.constant 0 : index
    %442 = vector.load %arg16[%c0_168, %c0_169] : memref<1x128xf32, #tpu.memory_space<vmem>>, vector<1x128xf32>
    %443 = vector.broadcast %442 : vector<1x128xf32> to vector<8x128xf32>
    %444 = arith.addf %441, %443 : vector<8x128xf32>
    %c0_170 = arith.constant 0 : index
    %c0_171 = arith.constant 0 : index
    %445 = vector.load %arg17[%c0_170, %c0_171] : memref<8x128xf32, #tpu.memory_space<vmem>>, vector<8x128xf32>
    tpu.vector_store %arg17[%c0_170, %c0_171], %444 {strides = array<i32>} : memref<8x128xf32, #tpu.memory_space<vmem>>, vector<8x128xf32>,
    return
  }
  func.func @transform_0(%arg0: i32) -> (i32, i32, i32) {
    %c0_i32 = arith.constant 0 : i32
    %c0_i32_0 = arith.constant 0 : i32
    %c0_i32_1 = arith.constant 0 : i32
    return %c0_i32, %arg0, %c0_i32_0 : i32, i32, i32
  }
  func.func @transform_1(%arg0: i32) -> (i32, i32) {
    %c0_i32 = arith.constant 0 : i32
    %c0_i32_0 = arith.constant 0 : i32
    %c0_i32_1 = arith.constant 0 : i32
    return %c0_i32, %c0_i32_0 : i32, i32
  }
  func.func @transform_2(%arg0: i32) -> (i32, i32) {
    %c0_i32 = arith.constant 0 : i32
    %c0_i32_0 = arith.constant 0 : i32
    %c0_i32_1 = arith.constant 0 : i32
    return %c0_i32, %c0_i32_0 : i32, i32
  }
  func.func @transform_3(%arg0: i32) -> (i32, i32) {
    %c0_i32 = arith.constant 0 : i32
    %c0_i32_0 = arith.constant 0 : i32
    %c0_i32_1 = arith.constant 0 : i32
    return %c0_i32, %c0_i32_0 : i32, i32
  }
  func.func @transform_4(%arg0: i32) -> (i32, i32) {
    %c0_i32 = arith.constant 0 : i32
    %c0_i32_0 = arith.constant 0 : i32
    %c0_i32_1 = arith.constant 0 : i32
    return %c0_i32, %c0_i32_0 : i32, i32
  }
  func.func @transform_5(%arg0: i32) -> (i32, i32, i32) {
    %c0_i32 = arith.constant 0 : i32
    %c0_i32_0 = arith.constant 0 : i32
    %c0_i32_1 = arith.constant 0 : i32
    %c0_i32_2 = arith.constant 0 : i32
    return %c0_i32, %c0_i32_0, %c0_i32_1 : i32, i32, i32
  }
  func.func @transform_6(%arg0: i32) -> (i32, i32, i32) {
    %c0_i32 = arith.constant 0 : i32
    %c0_i32_0 = arith.constant 0 : i32
    %c0_i32_1 = arith.constant 0 : i32
    %c0_i32_2 = arith.constant 0 : i32
    return %c0_i32, %c0_i32_0, %c0_i32_1 : i32, i32, i32
  }
  func.func @transform_7(%arg0: i32) -> (i32, i32, i32) {
    %c0_i32 = arith.constant 0 : i32
    %c0_i32_0 = arith.constant 0 : i32
    %c0_i32_1 = arith.constant 0 : i32
    %c0_i32_2 = arith.constant 0 : i32
    return %c0_i32, %c0_i32_0, %c0_i32_1 : i32, i32, i32
  }
  func.func @transform_8(%arg0: i32) -> (i32, i32, i32) {
    %c0_i32 = arith.constant 0 : i32
    %c0_i32_0 = arith.constant 0 : i32
    %c0_i32_1 = arith.constant 0 : i32
    %c0_i32_2 = arith.constant 0 : i32
    return %c0_i32, %c0_i32_0, %c0_i32_1 : i32, i32, i32
  }
  func.func @transform_9(%arg0: i32) -> (i32, i32, i32) {
    %c0_i32 = arith.constant 0 : i32
    %c0_i32_0 = arith.constant 0 : i32
    %c0_i32_1 = arith.constant 0 : i32
    %c0_i32_2 = arith.constant 0 : i32
    return %c0_i32, %c0_i32_0, %c0_i32_1 : i32, i32, i32
  }
  func.func @transform_10(%arg0: i32) -> (i32, i32, i32) {
    %c0_i32 = arith.constant 0 : i32
    %c0_i32_0 = arith.constant 0 : i32
    %c0_i32_1 = arith.constant 0 : i32
    %c0_i32_2 = arith.constant 0 : i32
    return %c0_i32, %c0_i32_0, %c0_i32_1 : i32, i32, i32
  }
  func.func @transform_11(%arg0: i32) -> (i32, i32, i32) {
    %c0_i32 = arith.constant 0 : i32
    %c0_i32_0 = arith.constant 0 : i32
    %c0_i32_1 = arith.constant 0 : i32
    %c0_i32_2 = arith.constant 0 : i32
    return %c0_i32, %c0_i32_0, %c0_i32_1 : i32, i32, i32
  }
  func.func @transform_12(%arg0: i32) -> (i32, i32, i32) {
    %c0_i32 = arith.constant 0 : i32
    %c0_i32_0 = arith.constant 0 : i32
    %c0_i32_1 = arith.constant 0 : i32
    %c0_i32_2 = arith.constant 0 : i32
    return %c0_i32, %c0_i32_0, %c0_i32_1 : i32, i32, i32
  }
  func.func @transform_13(%arg0: i32) -> (i32, i32) {
    %c0_i32 = arith.constant 0 : i32
    %c0_i32_0 = arith.constant 0 : i32
    %c0_i32_1 = arith.constant 0 : i32
    return %c0_i32, %c0_i32_0 : i32, i32
  }
  func.func @transform_14(%arg0: i32) -> (i32, i32) {
    %c0_i32 = arith.constant 0 : i32
    %c0_i32_0 = arith.constant 0 : i32
    %c0_i32_1 = arith.constant 0 : i32
    return %c0_i32, %c0_i32_0 : i32, i32
  }
  func.func @transform_15(%arg0: i32) -> (i32, i32) {
    %c0_i32 = arith.constant 0 : i32
    %c0_i32_0 = arith.constant 0 : i32
    %c0_i32_1 = arith.constant 0 : i32
    return %c0_i32, %c0_i32_0 : i32, i32
  }
  func.func @transform_16(%arg0: i32) -> (i32, i32) {
    %c0_i32 = arith.constant 0 : i32
    %c0_i32_0 = arith.constant 0 : i32
    return %arg0, %c0_i32 : i32, i32
  }
}

</mosaic_0001>

<llo_original>
// kernel: tpu_custom_call.1
$region0: #{tpu_custom_call.1}
  #allocation0 [shape = 'u32[]', space=smem, size = 0x4, offset = 0x4, fixed_abs, tag = 'smem constant byte address 0x4 - core index']
  #allocation1 [shape = 'u32[144,128]{1,0:T(1,128)}', space=vmem, size = 0x12000, scoped, tag = 'internal scratch']
  %s0 = inlined_call_operand.hbm [shape: bf16[8,16,512], index: 0, kind: input, shape index: {}]
  %s1 = inlined_call_operand.hbm [shape: bf16[512,384], index: 1, kind: input, shape index: {}]
  %s2 = inlined_call_operand.hbm [shape: bf16[128,384], index: 2, kind: input, shape index: {}]
  %s3 = inlined_call_operand.vmem [shape: f32[1,384], index: 3, kind: input, shape index: {}]
  %s4 = inlined_call_operand.vmem [shape: f32[1,384], index: 4, kind: input, shape index: {}]
  %s5 = inlined_call_operand.hbm [shape: bf16[2,128,128], index: 5, kind: input, shape index: {}]
  %s6 = inlined_call_operand.vmem [shape: f32[2,1,128], index: 6, kind: input, shape index: {}]
  %s7 = inlined_call_operand.hbm [shape: bf16[2,128,128], index: 7, kind: input, shape index: {}]
  %s8 = inlined_call_operand.vmem [shape: f32[2,1,128], index: 8, kind: input, shape index: {}]
  %s9 = inlined_call_operand.hbm [shape: bf16[2,128,128], index: 9, kind: input, shape index: {}]
  %s10 = inlined_call_operand.vmem [shape: f32[2,1,128], index: 10, kind: input, shape index: {}]
  %s11 = inlined_call_operand.hbm [shape: bf16[2,128,128], index: 11, kind: input, shape index: {}]
  %s12 = inlined_call_operand.vmem [shape: f32[2,1,128], index: 12, kind: input, shape index: {}]
  %s13 = inlined_call_operand.hbm [shape: bf16[128,128], index: 13, kind: input, shape index: {}]
  %s14 = inlined_call_operand.hbm [shape: bf16[128,128], index: 14, kind: input, shape index: {}]
  %s15 = inlined_call_operand.vmem [shape: f32[1,128], index: 15, kind: input, shape index: {}]
  %s16 = inlined_call_operand.hbm [shape: f32[16,128], index: 16, kind: output, shape index: {}]
  %s17 = sld [smem:[#allocation0]]
  $region133: #{tpu_custom_call.1} parent=0
    _
  %s19 = ssub.s32 1, %s17
  %s20 = scalar_select 0, %s19, %s17
  $region1: #{tpu_custom_call.1} parent=0
    #allocation2 [shape = 'u8[131072]{0}', space=vmem, size = 0x20000, scoped, tag = 'input window, operand 0']
    #allocation3 [shape = 's32[2]{0}', space=sflag, size = 0x8, scoped, tag = 'scoped memory for tpu_custom_call.1']
    #allocation4 [shape = 's32[2]{0}', space=sflag, size = 0x8, scoped, tag = 'scoped memory for tpu_custom_call.1']
    #allocation5 [shape = 'u8[393216]{0}', space=vmem, size = 0x60000, scoped, tag = 'input window, operand 1, single buffered']
    #allocation6 [shape = 's32[1]{0}', space=sflag, size = 0x4, scoped, tag = 'scoped memory for tpu_custom_call.1']
    #allocation7 [shape = 'u8[98304]{0}', space=vmem, size = 0x18000, scoped, tag = 'input window, operand 2, single buffered']
    #allocation8 [shape = 'u8[65536]{0}', space=vmem, size = 0x10000, scoped, tag = 'input window, operand 5, single buffered']
    #allocation9 [shape = 's32[1]{0}', space=sflag, size = 0x4, scoped, tag = 'scoped memory for tpu_custom_call.1']
    #allocation10 [shape = 'u8[65536]{0}', space=vmem, size = 0x10000, scoped, tag = 'input window, operand 7, single buffered']
    #allocation11 [shape = 'u8[65536]{0}', space=vmem, size = 0x10000, scoped, tag = 'input window, operand 9, single buffered']
    #allocation12 [shape = 's32[1]{0}', space=sflag, size = 0x4, scoped, tag = 'scoped memory for tpu_custom_call.1']
    #allocation13 [shape = 'u8[65536]{0}', space=vmem, size = 0x10000, scoped, tag = 'input window, operand 11, single buffered']
    #allocation14 [shape = 'u8[32768]{0}', space=vmem, size = 0x8000, scoped, tag = 'input window, operand 13, single buffered']
    #allocation15 [shape = 's32[1]{0}', space=sflag, size = 0x4, scoped, tag = 'scoped memory for tpu_custom_call.1']
    #allocation16 [shape = 'u8[32768]{0}', space=vmem, size = 0x8000, scoped, tag = 'input window, operand 14, single buffered']
    #allocation17 [shape = 'u8[8192]{0}', space=vmem, size = 0x2000, scoped, tag = 'output window, operand 0']
    %21 = vsyncpa [#allocation3], 0
    %s22 = scalar_lea.sflag [#allocation3], 1
    %23 = vsyncpa %s22, 0
    %24 = vsyncpa [#allocation6], 0
    %25 = vsyncpa [#allocation9], 0
    %26 = vsyncpa [#allocation12], 0
    %27 = vsyncpa [#allocation15], 0
    %28 = vsyncpa [#allocation4], 0
    %s29 = scalar_lea.sflag [#allocation4], 1
    %30 = vsyncpa %s29, 0
    loop: start=0, step=1, limit=4
    $region2: #{tpu_custom_call.1} parent=1 // loop_pre_header
      _
    $region3: #{tpu_custom_call.1} parent=1 // loop_header
      %s32 = sphi 0, %s36
      %p33 = scmp.ge.s32.totalorder %s32, 4
      %s42 = sphi 0, %s44
      %s45 = sphi 0, %s42
      %s46 = sphi 0, %s45
      %s62 = sphi 0, %s46
      %s66 = sphi 0, %s66
      %s68 = sphi 0, %s66
      %s69 = sphi 0, %s68
      %s83 = sphi 0, %s69
      %s87 = sphi 0, %s87
      %s89 = sphi 0, %s87
      %s90 = sphi 0, %s89
      %s104 = sphi 0, %s90
      %s108 = sphi 0, %s108
      %s110 = sphi 0, %s108
      %s111 = sphi 0, %s110
      %s125 = sphi 0, %s111
      %s129 = sphi 0, %s129
      %s131 = sphi 0, %s129
      %s132 = sphi 0, %s131
      %s146 = sphi 0, %s132
      %s150 = sphi 0, %s150
      %s152 = sphi 0, %s150
      %s153 = sphi 0, %s152
      %s167 = sphi 0, %s153
      %s171 = sphi 0, %s171
      %s173 = sphi 0, %s171
      %s174 = sphi 0, %s173
      %s188 = sphi 0, %s174
      %s192 = sphi 0, %s192
      %s194 = sphi 0, %s192
      %s195 = sphi 0, %s194
      %s209 = sphi 0, %s195
      %s213 = sphi 0, %s213
      %s215 = sphi 0, %s213
      %s216 = sphi 0, %s215
      %s230 = sphi 0, %s216
      %s234 = sphi 0, %s234
      %s236 = sphi 0, %s234
      %s237 = sphi 0, %s236
      %s251 = sphi 0, %s237
      %s255 = sphi 0, %s255
      %s257 = sphi 0, %s255
      %s258 = sphi 0, %s257
      %s272 = sphi 0, %s258
      %s276 = sphi 0, %s276
      %s278 = sphi 0, %s276
      %s279 = sphi 0, %s278
      %s293 = sphi 0, %s279
      %s297 = sphi 0, %s297
      %s299 = sphi 0, %s297
      %s300 = sphi 0, %s299
      %s314 = sphi 0, %s300
      %s318 = sphi 0, %s318
      %s320 = sphi 0, %s318
      %s321 = sphi 0, %s320
      %s335 = sphi 0, %s321
      %s339 = sphi 0, %s339
      %s341 = sphi 0, %s339
      %s342 = sphi 0, %s341
      %s356 = sphi 0, %s342
      %s360 = sphi 0, %s360
      %s362 = sphi 0, %s360
      %s363 = sphi 0, %s362
      %s377 = sphi 0, %s363
      %s383 = sphi 0, %s385
      %s386 = sphi 0, %s383
      %s387 = sphi 0, %s386
      %s403 = sphi 0, %s387
    $region4: #{tpu_custom_call.1} parent=1 // loop_header_branch
      %35 = sbr.rel (%p33) target = $region8
    $region5: #{tpu_custom_call.1} parent=1 // loop_body
      %s37 = ssub.s32 %s32, 1
      %s38 = ssub.s32 %s32, 2
      %s39 = sadd.s32 %s32, 1
      %s40 = ssub.s32 %s32, %s39
      %p41 = scmp.eq.s32.totalorder %s40, 0
      %s43 = sadd.s32 %s42, 1
      %s44 = scalar_select %p41, %s42, %s43
      %p47 = pneg %p41
      %p48 = scmp.eq.s32.totalorder %s32, 1
      %p49 = por %p47, %p48
      %p50 = scmp.ne.s32.totalorder %s42, %s45
      %p51 = scmp.eq.s32.totalorder %s32, 0
      %p52 = por %p50, %p51
      %p53 = scmp.ne.s32.totalorder %s42, %s45
      %p54 = scmp.eq.s32.totalorder %s37, 1
      %p55 = por %p53, %p54
      %p56 = scmp.ne.s32.totalorder %s45, %s46
      %p57 = scmp.eq.s32.totalorder %s37, 0
      %p58 = por %p56, %p57
      %p59 = scmp.ne.s32.totalorder %s45, %s46
      %p60 = scmp.eq.s32.totalorder %s38, 1
      %p61 = por %p59, %p60
      %p63 = scmp.ne.s32.totalorder %s46, %s62
      %p64 = scmp.eq.s32.totalorder %s38, 0
      %p65 = por %p63, %p64
      %s67 = sadd.s32 %s66, 1
      %p70 = scmp.eq.s32.totalorder %s32, 1
      %p71 = scmp.ne.s32.totalorder %s66, %s68
      %p72 = scmp.eq.s32.totalorder %s32, 0
      %p73 = por %p71, %p72
      %p74 = scmp.ne.s32.totalorder %s66, %s68
      %p75 = scmp.eq.s32.totalorder %s37, 1
      %p76 = por %p74, %p75
      %p77 = scmp.ne.s32.totalorder %s68, %s69
      %p78 = scmp.eq.s32.totalorder %s37, 0
      %p79 = por %p77, %p78
      %p80 = scmp.ne.s32.totalorder %s68, %s69
      %p81 = scmp.eq.s32.totalorder %s38, 1
      %p82 = por %p80, %p81
      %p84 = scmp.ne.s32.totalorder %s69, %s83
      %p85 = scmp.eq.s32.totalorder %s38, 0
      %p86 = por %p84, %p85
      %s88 = sadd.s32 %s87, 1
      %p91 = scmp.eq.s32.totalorder %s32, 1
      %p92 = scmp.ne.s32.totalorder %s87, %s89
      %p93 = scmp.eq.s32.totalorder %s32, 0
      %p94 = por %p92, %p93
      %p95 = scmp.ne.s32.totalorder %s87, %s89
      %p96 = scmp.eq.s32.totalorder %s37, 1
      %p97 = por %p95, %p96
      %p98 = scmp.ne.s32.totalorder %s89, %s90
      %p99 = scmp.eq.s32.totalorder %s37, 0
      %p100 = por %p98, %p99
      %p101 = scmp.ne.s32.totalorder %s89, %s90
      %p102 = scmp.eq.s32.totalorder %s38, 1
      %p103 = por %p101, %p102
      %p105 = scmp.ne.s32.totalorder %s90, %s104
      %p106 = scmp.eq.s32.totalorder %s38, 0
      %p107 = por %p105, %p106
      %s109 = sadd.s32 %s108, 1
      %p112 = scmp.eq.s32.totalorder %s32, 1
      %p113 = scmp.ne.s32.totalorder %s108, %s110
      %p114 = scmp.eq.s32.totalorder %s32, 0
      %p115 = por %p113, %p114
      %p116 = scmp.ne.s32.totalorder %s108, %s110
      %p117 = scmp.eq.s32.totalorder %s37, 1
      %p118 = por %p116, %p117
      %p119 = scmp.ne.s32.totalorder %s110, %s111
      %p120 = scmp.eq.s32.totalorder %s37, 0
      %p121 = por %p119, %p120
      %p122 = scmp.ne.s32.totalorder %s110, %s111
      %p123 = scmp.eq.s32.totalorder %s38, 1
      %p124 = por %p122, %p123
      %p126 = scmp.ne.s32.totalorder %s111, %s125
      %p127 = scmp.eq.s32.totalorder %s38, 0
      %p128 = por %p126, %p127
      %s130 = sadd.s32 %s129, 1
      %p133 = scmp.eq.s32.totalorder %s32, 1
      %p134 = scmp.ne.s32.totalorder %s129, %s131
      %p135 = scmp.eq.s32.totalorder %s32, 0
      %p136 = por %p134, %p135
      %p137 = scmp.ne.s32.totalorder %s129, %s131
      %p138 = scmp.eq.s32.totalorder %s37, 1
      %p139 = por %p137, %p138
      %p140 = scmp.ne.s32.totalorder %s131, %s132
      %p141 = scmp.eq.s32.totalorder %s37, 0
      %p142 = por %p140, %p141
      %p143 = scmp.ne.s32.totalorder %s131, %s132
      %p144 = scmp.eq.s32.totalorder %s38, 1
      %p145 = por %p143, %p144
      %p147 = scmp.ne.s32.totalorder %s132, %s146
      %p148 = scmp.eq.s32.totalorder %s38, 0
      %p149 = por %p147, %p148
      %s151 = sadd.s32 %s150, 1
      %p154 = scmp.eq.s32.totalorder %s32, 1
      %p155 = scmp.ne.s32.totalorder %s150, %s152
      %p156 = scmp.eq.s32.totalorder %s32, 0
      %p157 = por %p155, %p156
      %p158 = scmp.ne.s32.totalorder %s150, %s152
      %p159 = scmp.eq.s32.totalorder %s37, 1
      %p160 = por %p158, %p159
      %p161 = scmp.ne.s32.totalorder %s152, %s153
      %p162 = scmp.eq.s32.totalorder %s37, 0
      %p163 = por %p161, %p162
      %p164 = scmp.ne.s32.totalorder %s152, %s153
      %p165 = scmp.eq.s32.totalorder %s38, 1
      %p166 = por %p164, %p165
      %p168 = scmp.ne.s32.totalorder %s153, %s167
      %p169 = scmp.eq.s32.totalorder %s38, 0
      %p170 = por %p168, %p169
      %s172 = sadd.s32 %s171, 1
      %p175 = scmp.eq.s32.totalorder %s32, 1
      %p176 = scmp.ne.s32.totalorder %s171, %s173
      %p177 = scmp.eq.s32.totalorder %s32, 0
      %p178 = por %p176, %p177
      %p179 = scmp.ne.s32.totalorder %s171, %s173
      %p180 = scmp.eq.s32.totalorder %s37, 1
      %p181 = por %p179, %p180
      %p182 = scmp.ne.s32.totalorder %s173, %s174
      %p183 = scmp.eq.s32.totalorder %s37, 0
      %p184 = por %p182, %p183
      %p185 = scmp.ne.s32.totalorder %s173, %s174
      %p186 = scmp.eq.s32.totalorder %s38, 1
      %p187 = por %p185, %p186
      %p189 = scmp.ne.s32.totalorder %s174, %s188
      %p190 = scmp.eq.s32.totalorder %s38, 0
      %p191 = por %p189, %p190
      %s193 = sadd.s32 %s192, 1
      %p196 = scmp.eq.s32.totalorder %s32, 1
      %p197 = scmp.ne.s32.totalorder %s192, %s194
      %p198 = scmp.eq.s32.totalorder %s32, 0
      %p199 = por %p197, %p198
      %p200 = scmp.ne.s32.totalorder %s192, %s194
      %p201 = scmp.eq.s32.totalorder %s37, 1
      %p202 = por %p200, %p201
      %p203 = scmp.ne.s32.totalorder %s194, %s195
      %p204 = scmp.eq.s32.totalorder %s37, 0
      %p205 = por %p203, %p204
      %p206 = scmp.ne.s32.totalorder %s194, %s195
      %p207 = scmp.eq.s32.totalorder %s38, 1
      %p208 = por %p206, %p207
      %p210 = scmp.ne.s32.totalorder %s195, %s209
      %p211 = scmp.eq.s32.totalorder %s38, 0
      %p212 = por %p210, %p211
      %s214 = sadd.s32 %s213, 1
      %p217 = scmp.eq.s32.totalorder %s32, 1
      %p218 = scmp.ne.s32.totalorder %s213, %s215
      %p219 = scmp.eq.s32.totalorder %s32, 0
      %p220 = por %p218, %p219
      %p221 = scmp.ne.s32.totalorder %s213, %s215
      %p222 = scmp.eq.s32.totalorder %s37, 1
      %p223 = por %p221, %p222
      %p224 = scmp.ne.s32.totalorder %s215, %s216
      %p225 = scmp.eq.s32.totalorder %s37, 0
      %p226 = por %p224, %p225
      %p227 = scmp.ne.s32.totalorder %s215, %s216
      %p228 = scmp.eq.s32.totalorder %s38, 1
      %p229 = por %p227, %p228
      %p231 = scmp.ne.s32.totalorder %s216, %s230
      %p232 = scmp.eq.s32.totalorder %s38, 0
      %p233 = por %p231, %p232
      %s235 = sadd.s32 %s234, 1
      %p238 = scmp.eq.s32.totalorder %s32, 1
      %p239 = scmp.ne.s32.totalorder %s234, %s236
      %p240 = scmp.eq.s32.totalorder %s32, 0
      %p241 = por %p239, %p240
      %p242 = scmp.ne.s32.totalorder %s234, %s236
      %p243 = scmp.eq.s32.totalorder %s37, 1
      %p244 = por %p242, %p243
      %p245 = scmp.ne.s32.totalorder %s236, %s237
      %p246 = scmp.eq.s32.totalorder %s37, 0
      %p247 = por %p245, %p246
      %p248 = scmp.ne.s32.totalorder %s236, %s237
      %p249 = scmp.eq.s32.totalorder %s38, 1
      %p250 = por %p248, %p249
      %p252 = scmp.ne.s32.totalorder %s237, %s251
      %p253 = scmp.eq.s32.totalorder %s38, 0
      %p254 = por %p252, %p253
      %s256 = sadd.s32 %s255, 1
      %p259 = scmp.eq.s32.totalorder %s32, 1
      %p260 = scmp.ne.s32.totalorder %s255, %s257
      %p261 = scmp.eq.s32.totalorder %s32, 0
      %p262 = por %p260, %p261
      %p263 = scmp.ne.s32.totalorder %s255, %s257
      %p264 = scmp.eq.s32.totalorder %s37, 1
      %p265 = por %p263, %p264
      %p266 = scmp.ne.s32.totalorder %s257, %s258
      %p267 = scmp.eq.s32.totalorder %s37, 0
      %p268 = por %p266, %p267
      %p269 = scmp.ne.s32.totalorder %s257, %s258
      %p270 = scmp.eq.s32.totalorder %s38, 1
      %p271 = por %p269, %p270
      %p273 = scmp.ne.s32.totalorder %s258, %s272
      %p274 = scmp.eq.s32.totalorder %s38, 0
      %p275 = por %p273, %p274
      %s277 = sadd.s32 %s276, 1
      %p280 = scmp.eq.s32.totalorder %s32, 1
      %p281 = scmp.ne.s32.totalorder %s276, %s278
      %p282 = scmp.eq.s32.totalorder %s32, 0
      %p283 = por %p281, %p282
      %p284 = scmp.ne.s32.totalorder %s276, %s278
      %p285 = scmp.eq.s32.totalorder %s37, 1
      %p286 = por %p284, %p285
      %p287 = scmp.ne.s32.totalorder %s278, %s279
      %p288 = scmp.eq.s32.totalorder %s37, 0
      %p289 = por %p287, %p288
      %p290 = scmp.ne.s32.totalorder %s278, %s279
      %p291 = scmp.eq.s32.totalorder %s38, 1
      %p292 = por %p290, %p291
      %p294 = scmp.ne.s32.totalorder %s279, %s293
      %p295 = scmp.eq.s32.totalorder %s38, 0
      %p296 = por %p294, %p295
      %s298 = sadd.s32 %s297, 1
      %p301 = scmp.eq.s32.totalorder %s32, 1
      %p302 = scmp.ne.s32.totalorder %s297, %s299
      %p303 = scmp.eq.s32.totalorder %s32, 0
      %p304 = por %p302, %p303
      %p305 = scmp.ne.s32.totalorder %s297, %s299
      %p306 = scmp.eq.s32.totalorder %s37, 1
      %p307 = por %p305, %p306
      %p308 = scmp.ne.s32.totalorder %s299, %s300
      %p309 = scmp.eq.s32.totalorder %s37, 0
      %p310 = por %p308, %p309
      %p311 = scmp.ne.s32.totalorder %s299, %s300
      %p312 = scmp.eq.s32.totalorder %s38, 1
      %p313 = por %p311, %p312
      %p315 = scmp.ne.s32.totalorder %s300, %s314
      %p316 = scmp.eq.s32.totalorder %s38, 0
      %p317 = por %p315, %p316
      %s319 = sadd.s32 %s318, 1
      %p322 = scmp.eq.s32.totalorder %s32, 1
      %p323 = scmp.ne.s32.totalorder %s318, %s320
      %p324 = scmp.eq.s32.totalorder %s32, 0
      %p325 = por %p323, %p324
      %p326 = scmp.ne.s32.totalorder %s318, %s320
      %p327 = scmp.eq.s32.totalorder %s37, 1
      %p328 = por %p326, %p327
      %p329 = scmp.ne.s32.totalorder %s320, %s321
      %p330 = scmp.eq.s32.totalorder %s37, 0
      %p331 = por %p329, %p330
      %p332 = scmp.ne.s32.totalorder %s320, %s321
      %p333 = scmp.eq.s32.totalorder %s38, 1
      %p334 = por %p332, %p333
      %p336 = scmp.ne.s32.totalorder %s321, %s335
      %p337 = scmp.eq.s32.totalorder %s38, 0
      %p338 = por %p336, %p337
      %s340 = sadd.s32 %s339, 1
      %p343 = scmp.eq.s32.totalorder %s32, 1
      %p344 = scmp.ne.s32.totalorder %s339, %s341
      %p345 = scmp.eq.s32.totalorder %s32, 0
      %p346 = por %p344, %p345
      %p347 = scmp.ne.s32.totalorder %s339, %s341
      %p348 = scmp.eq.s32.totalorder %s37, 1
      %p349 = por %p347, %p348
      %p350 = scmp.ne.s32.totalorder %s341, %s342
      %p351 = scmp.eq.s32.totalorder %s37, 0
      %p352 = por %p350, %p351
      %p353 = scmp.ne.s32.totalorder %s341, %s342
      %p354 = scmp.eq.s32.totalorder %s38, 1
      %p355 = por %p353, %p354
      %p357 = scmp.ne.s32.totalorder %s342, %s356
      %p358 = scmp.eq.s32.totalorder %s38, 0
      %p359 = por %p357, %p358
      %s361 = sadd.s32 %s360, 1
      %p364 = scmp.eq.s32.totalorder %s32, 1
      %p365 = scmp.ne.s32.totalorder %s360, %s362
      %p366 = scmp.eq.s32.totalorder %s32, 0
      %p367 = por %p365, %p366
      %p368 = scmp.ne.s32.totalorder %s360, %s362
      %p369 = scmp.eq.s32.totalorder %s37, 1
      %p370 = por %p368, %p369
      %p371 = scmp.ne.s32.totalorder %s362, %s363
      %p372 = scmp.eq.s32.totalorder %s37, 0
      %p373 = por %p371, %p372
      %p374 = scmp.ne.s32.totalorder %s362, %s363
      %p375 = scmp.eq.s32.totalorder %s38, 1
      %p376 = por %p374, %p375
      %p378 = scmp.ne.s32.totalorder %s363, %s377
      %p379 = scmp.eq.s32.totalorder %s38, 0
      %p380 = por %p378, %p379
      %s381 = ssub.s32 %s32, %s39
      %p382 = scmp.eq.s32.totalorder %s381, 0
      %s384 = sadd.s32 %s383, 1
      %s385 = scalar_select %p382, %s383, %s384
      %p388 = pneg %p382
      %p389 = scmp.eq.s32.totalorder %s32, 1
      %p390 = por %p388, %p389
      %p391 = scmp.ne.s32.totalorder %s383, %s386
      %p392 = scmp.eq.s32.totalorder %s32, 0
      %p393 = por %p391, %p392
      %p394 = scmp.ne.s32.totalorder %s383, %s386
      %p395 = scmp.eq.s32.totalorder %s37, 1
      %p396 = por %p394, %p395
      %p397 = scmp.ne.s32.totalorder %s386, %s387
      %p398 = scmp.eq.s32.totalorder %s37, 0
      %p399 = por %p397, %p398
      %p400 = scmp.ne.s32.totalorder %s386, %s387
      %p401 = scmp.eq.s32.totalorder %s38, 1
      %p402 = por %p400, %p401
      %p404 = scmp.ne.s32.totalorder %s387, %s403
      %p405 = scmp.eq.s32.totalorder %s38, 0
      %p406 = por %p404, %p405
      %p407 = scmp.le.s32.totalorder 1, %s32
      %p408 = scmp.lt.s32.totalorder %s32, 3
      %p409 = pnand %p407, %p408
      %p410 = pneg %p409
      // Predicated region
      $region9: #{tpu_custom_call.1} parent=5 // pred_check
        _
      $region10: #{tpu_custom_call.1} parent=5 // pred_check_branch
        %412 = sbr.rel (%p409) target = $region12
      $region11: #{tpu_custom_call.1} parent=5 // pred_region
        %s413 = ssub.s32 %s32, 1
        // Predicated region
        $region13: #{tpu_custom_call.1} parent=11 // pred_check
          %p414 = pneg %p79
        $region14: #{tpu_custom_call.1} parent=11 // pred_check_branch
          %416 = sbr.rel (%p414) target = $region16
        $region15: #{tpu_custom_call.1} parent=11 // pred_region
          %s418 = ssub.s32 12288, 12288
          %419 = vsyncadd [#allocation6], %s418
          %s420 = sshll.u32 [#allocation5], 4
          %s421 = int_to_ptr.vmem [resolvable:$true] %s420
          %426 = dma.hbm_to_vmem [thread:$0]  %s1, 12288, %s421, [#allocation6], 192, 192, 12
        $region16: #{tpu_custom_call.1} parent=11 // pred_fallthru
          _
        // Predicated region
        $region17: #{tpu_custom_call.1} parent=11 // pred_check
          %p427 = pneg %p100
        $region18: #{tpu_custom_call.1} parent=11 // pred_check_branch
          %429 = sbr.rel (%p427) target = $region20
        $region19: #{tpu_custom_call.1} parent=11 // pred_region
          %s431 = ssub.s32 3072, 3072
          %432 = vsyncadd [#allocation6], %s431
          %s433 = sshll.u32 [#allocation7], 4
          %s434 = int_to_ptr.vmem [resolvable:$true] %s433
          %439 = dma.hbm_to_vmem [thread:$0]  %s2, 3072, %s434, [#allocation6], 192, 192, 12
        $region20: #{tpu_custom_call.1} parent=11 // pred_fallthru
          _
        // Predicated region
        $region21: #{tpu_custom_call.1} parent=11 // pred_check
          %p440 = pneg %p121
        $region22: #{tpu_custom_call.1} parent=11 // pred_check_branch
          %442 = sbr.rel (%p440) target = $region24
        $region23: #{tpu_custom_call.1} parent=11 // pred_region
          _
        $region24: #{tpu_custom_call.1} parent=11 // pred_fallthru
          _
        // Predicated region
        $region25: #{tpu_custom_call.1} parent=11 // pred_check
          %p443 = pneg %p142
        $region26: #{tpu_custom_call.1} parent=11 // pred_check_branch
          %445 = sbr.rel (%p443) target = $region28
        $region27: #{tpu_custom_call.1} parent=11 // pred_region
          _
        $region28: #{tpu_custom_call.1} parent=11 // pred_fallthru
          _
        // Predicated region
        $region29: #{tpu_custom_call.1} parent=11 // pred_check
          %p446 = pneg %p163
        $region30: #{tpu_custom_call.1} parent=11 // pred_check_branch
          %448 = sbr.rel (%p446) target = $region32
        $region31: #{tpu_custom_call.1} parent=11 // pred_region
          %s450 = ssub.s32 2048, 2048
          %451 = vsyncadd [#allocation9], %s450
          %s452 = sshll.u32 [#allocation8], 4
          %s453 = int_to_ptr.vmem [resolvable:$true] %s452
          %458 = dma.hbm_to_vmem [thread:$0]  %s5, 2048, %s453, [#allocation9], 64, 64, 4
        $region32: #{tpu_custom_call.1} parent=11 // pred_fallthru
          _
        // Predicated region
        $region33: #{tpu_custom_call.1} parent=11 // pred_check
          %p459 = pneg %p184
        $region34: #{tpu_custom_call.1} parent=11 // pred_check_branch
          %461 = sbr.rel (%p459) target = $region36
        $region35: #{tpu_custom_call.1} parent=11 // pred_region
          _
        $region36: #{tpu_custom_call.1} parent=11 // pred_fallthru
          _
        // Predicated region
        $region37: #{tpu_custom_call.1} parent=11 // pred_check
          %p462 = pneg %p205
        $region38: #{tpu_custom_call.1} parent=11 // pred_check_branch
          %464 = sbr.rel (%p462) target = $region40
        $region39: #{tpu_custom_call.1} parent=11 // pred_region
          %s466 = ssub.s32 2048, 2048
          %467 = vsyncadd [#allocation9], %s466
          %s468 = sshll.u32 [#allocation10], 4
          %s469 = int_to_ptr.vmem [resolvable:$true] %s468
          %474 = dma.hbm_to_vmem [thread:$0]  %s7, 2048, %s469, [#allocation9], 64, 64, 4
        $region40: #{tpu_custom_call.1} parent=11 // pred_fallthru
          _
        // Predicated region
        $region41: #{tpu_custom_call.1} parent=11 // pred_check
          %p475 = pneg %p226
        $region42: #{tpu_custom_call.1} parent=11 // pred_check_branch
          %477 = sbr.rel (%p475) target = $region44
        $region43: #{tpu_custom_call.1} parent=11 // pred_region
          _
        $region44: #{tpu_custom_call.1} parent=11 // pred_fallthru
          _
        // Predicated region
        $region45: #{tpu_custom_call.1} parent=11 // pred_check
          %p478 = pneg %p247
        $region46: #{tpu_custom_call.1} parent=11 // pred_check_branch
          %480 = sbr.rel (%p478) target = $region48
        $region47: #{tpu_custom_call.1} parent=11 // pred_region
          %s482 = ssub.s32 2048, 2048
          %483 = vsyncadd [#allocation12], %s482
          %s484 = sshll.u32 [#allocation11], 4
          %s485 = int_to_ptr.vmem [resolvable:$true] %s484
          %490 = dma.hbm_to_vmem [thread:$0]  %s9, 2048, %s485, [#allocation12], 64, 64, 4
        $region48: #{tpu_custom_call.1} parent=11 // pred_fallthru
          _
        // Predicated region
        $region49: #{tpu_custom_call.1} parent=11 // pred_check
          %p491 = pneg %p268
        $region50: #{tpu_custom_call.1} parent=11 // pred_check_branch
          %493 = sbr.rel (%p491) target = $region52
        $region51: #{tpu_custom_call.1} parent=11 // pred_region
          _
        $region52: #{tpu_custom_call.1} parent=11 // pred_fallthru
          _
        // Predicated region
        $region53: #{tpu_custom_call.1} parent=11 // pred_check
          %p494 = pneg %p289
        $region54: #{tpu_custom_call.1} parent=11 // pred_check_branch
          %496 = sbr.rel (%p494) target = $region56
        $region55: #{tpu_custom_call.1} parent=11 // pred_region
          %s498 = ssub.s32 2048, 2048
          %499 = vsyncadd [#allocation12], %s498
          %s500 = sshll.u32 [#allocation13], 4
          %s501 = int_to_ptr.vmem [resolvable:$true] %s500
          %506 = dma.hbm_to_vmem [thread:$0]  %s11, 2048, %s501, [#allocation12], 64, 64, 4
        $region56: #{tpu_custom_call.1} parent=11 // pred_fallthru
          _
        // Predicated region
        $region57: #{tpu_custom_call.1} parent=11 // pred_check
          %p507 = pneg %p310
        $region58: #{tpu_custom_call.1} parent=11 // pred_check_branch
          %509 = sbr.rel (%p507) target = $region60
        $region59: #{tpu_custom_call.1} parent=11 // pred_region
          _
        $region60: #{tpu_custom_call.1} parent=11 // pred_fallthru
          _
        // Predicated region
        $region61: #{tpu_custom_call.1} parent=11 // pred_check
          %p510 = pneg %p331
        $region62: #{tpu_custom_call.1} parent=11 // pred_check_branch
          %512 = sbr.rel (%p510) target = $region64
        $region63: #{tpu_custom_call.1} parent=11 // pred_region
          %s514 = ssub.s32 1024, 1024
          %515 = vsyncadd [#allocation15], %s514
          %s516 = sshll.u32 [#allocation14], 4
          %s517 = int_to_ptr.vmem [resolvable:$true] %s516
          %522 = dma.hbm_to_vmem [thread:$0]  %s13, 1024, %s517, [#allocation15], 64, 64, 4
        $region64: #{tpu_custom_call.1} parent=11 // pred_fallthru
          _
        // Predicated region
        $region65: #{tpu_custom_call.1} parent=11 // pred_check
          %p523 = pneg %p352
        $region66: #{tpu_custom_call.1} parent=11 // pred_check_branch
          %525 = sbr.rel (%p523) target = $region68
        $region67: #{tpu_custom_call.1} parent=11 // pred_region
          %s527 = ssub.s32 1024, 1024
          %528 = vsyncadd [#allocation15], %s527
          %s529 = sshll.u32 [#allocation16], 4
          %s530 = int_to_ptr.vmem [resolvable:$true] %s529
          %535 = dma.hbm_to_vmem [thread:$0]  %s14, 1024, %s530, [#allocation15], 64, 64, 4
        $region68: #{tpu_custom_call.1} parent=11 // pred_fallthru
          _
        // Predicated region
        $region69: #{tpu_custom_call.1} parent=11 // pred_check
          %p536 = pneg %p373
        $region70: #{tpu_custom_call.1} parent=11 // pred_check_branch
          %538 = sbr.rel (%p536) target = $region72
        $region71: #{tpu_custom_call.1} parent=11 // pred_region
          _
        $region72: #{tpu_custom_call.1} parent=11 // pred_fallthru
          _
      $region12: #{tpu_custom_call.1} parent=5 // pred_fallthru
        _
      %p539 = scmp.lt.s32.totalorder %s32, 2
      // Predicated region
      $region73: #{tpu_custom_call.1} parent=5 // pred_check
        %p540 = pneg %p539
      $region74: #{tpu_custom_call.1} parent=5 // pred_check_branch
        %542 = sbr.rel (%p540) target = $region76
      $region75: #{tpu_custom_call.1} parent=5 // pred_region
        // Predicated region
        $region77: #{tpu_custom_call.1} parent=75 // pred_check
          %p543 = pneg %p52
        $region78: #{tpu_custom_call.1} parent=75 // pred_check_branch
          %545 = sbr.rel (%p543) target = $region80
        $region79: #{tpu_custom_call.1} parent=75 // pred_region
          %s546 = sand.u32 %s42, 1
          %s547 = scalar_lea.sflag [#allocation3], %s546
          %s548 = sand.u32 %s42, 1
          %s549 = smul.addr %s548, 128
          %s550 = scalar_lea.vmem [#allocation2], %s549
          %s552 = ssub.s32 2048, 2048
          %553 = vsyncadd %s547, %s552
          %s554 = smul.addr %s32, 4
          %s555 = smul.addr %s554, 64
          %s556 = scalar_lea.hbm %s0, %s555
          %s557 = sshll.u32 %s550, 4
          %s558 = int_to_ptr.vmem [resolvable:$true] %s557
          %563 = dma.hbm_to_vmem [thread:$0]  %s556, 2048, %s558, %s547, 512, 256, 16
        $region80: #{tpu_custom_call.1} parent=75 // pred_fallthru
          _
      $region76: #{tpu_custom_call.1} parent=5 // pred_fallthru
        _
      %p564 = scmp.le.s32.totalorder 1, %s32
      %p565 = scmp.lt.s32.totalorder %s32, 3
      %p566 = pnand %p564, %p565
      %p567 = pneg %p566
      // Predicated region
      $region81: #{tpu_custom_call.1} parent=5 // pred_check
        _
      $region82: #{tpu_custom_call.1} parent=5 // pred_check_branch
        %569 = sbr.rel (%p566) target = $region84
      $region83: #{tpu_custom_call.1} parent=5 // pred_region
        %s570 = ssub.s32 %s32, 1
        %s571 = sand.u32 %s45, 1
        %s572 = scalar_lea.sflag [#allocation3], %s571
        %s573 = sand.u32 %s45, 1
        %s574 = smul.addr %s573, 128
        %s575 = scalar_lea.vmem [#allocation2], %s574
        // Predicated region
        $region85: #{tpu_custom_call.1} parent=83 // pred_check
          %p576 = pneg %p58
        $region86: #{tpu_custom_call.1} parent=83 // pred_check_branch
          %578 = sbr.rel (%p576) target = $region88
        $region87: #{tpu_custom_call.1} parent=83 // pred_region
          %579 = dma.done %s572, 2048
        $region88: #{tpu_custom_call.1} parent=83 // pred_fallthru
          _
        // Predicated region
        $region89: #{tpu_custom_call.1} parent=83 // pred_check
          %p580 = pneg %p79
        $region90: #{tpu_custom_call.1} parent=83 // pred_check_branch
          %582 = sbr.rel (%p580) target = $region92
        $region91: #{tpu_custom_call.1} parent=83 // pred_region
          %583 = dma.done [#allocation6], 12288
        $region92: #{tpu_custom_call.1} parent=83 // pred_fallthru
          _
        // Predicated region
        $region93: #{tpu_custom_call.1} parent=83 // pred_check
          %p584 = pneg %p100
        $region94: #{tpu_custom_call.1} parent=83 // pred_check_branch
          %586 = sbr.rel (%p584) target = $region96
        $region95: #{tpu_custom_call.1} parent=83 // pred_region
          %587 = dma.done [#allocation6], 3072
        $region96: #{tpu_custom_call.1} parent=83 // pred_fallthru
          _
        // Predicated region
        $region97: #{tpu_custom_call.1} parent=83 // pred_check
          %p588 = pneg %p163
        $region98: #{tpu_custom_call.1} parent=83 // pred_check_branch
          %590 = sbr.rel (%p588) target = $region100
        $region99: #{tpu_custom_call.1} parent=83 // pred_region
          %591 = dma.done [#allocation9], 2048
        $region100: #{tpu_custom_call.1} parent=83 // pred_fallthru
          _
        // Predicated region
        $region101: #{tpu_custom_call.1} parent=83 // pred_check
          %p592 = pneg %p205
        $region102: #{tpu_custom_call.1} parent=83 // pred_check_branch
          %594 = sbr.rel (%p592) target = $region104
        $region103: #{tpu_custom_call.1} parent=83 // pred_region
          %595 = dma.done [#allocation9], 2048
        $region104: #{tpu_custom_call.1} parent=83 // pred_fallthru
          _
        // Predicated region
        $region105: #{tpu_custom_call.1} parent=83 // pred_check
          %p596 = pneg %p247
        $region106: #{tpu_custom_call.1} parent=83 // pred_check_branch
          %598 = sbr.rel (%p596) target = $region108
        $region107: #{tpu_custom_call.1} parent=83 // pred_region
          %599 = dma.done [#allocation12], 2048
        $region108: #{tpu_custom_call.1} parent=83 // pred_fallthru
          _
        // Predicated region
        $region109: #{tpu_custom_call.1} parent=83 // pred_check
          %p600 = pneg %p289
        $region110: #{tpu_custom_call.1} parent=83 // pred_check_branch
          %602 = sbr.rel (%p600) target = $region112
        $region111: #{tpu_custom_call.1} parent=83 // pred_region
          %603 = dma.done [#allocation12], 2048
        $region112: #{tpu_custom_call.1} parent=83 // pred_fallthru
          _
        // Predicated region
        $region113: #{tpu_custom_call.1} parent=83 // pred_check
          %p604 = pneg %p331
        $region114: #{tpu_custom_call.1} parent=83 // pred_check_branch
          %606 = sbr.rel (%p604) target = $region116
        $region115: #{tpu_custom_call.1} parent=83 // pred_region
          %607 = dma.done [#allocation15], 1024
        $region116: #{tpu_custom_call.1} parent=83 // pred_fallthru
          _
        // Predicated region
        $region117: #{tpu_custom_call.1} parent=83 // pred_check
          %p608 = pneg %p352
        $region118: #{tpu_custom_call.1} parent=83 // pred_check_branch
          %610 = sbr.rel (%p608) target = $region120
        $region119: #{tpu_custom_call.1} parent=83 // pred_region
          %611 = dma.done [#allocation15], 1024
        $region120: #{tpu_custom_call.1} parent=83 // pred_fallthru
          _
        %s612 = sand.u32 %s45, 1
        %s613 = scalar_lea.sflag [#allocation3], %s612
        %s614 = sand.u32 %s45, 1
        %s615 = smul.addr %s614, 128
        %s616 = scalar_lea.vmem [#allocation2], %s615
        %p617 = pneg %p58
        %p618 = pneg %p55
        %p619 = pneg %p79
        %p620 = pneg %p76
        %p621 = pneg %p100
        %p622 = pneg %p97
        %p623 = pneg %p121
        %p624 = pneg %p118
        %p625 = pneg %p142
        %p626 = pneg %p139
        %p627 = pneg %p163
        %p628 = pneg %p160
        %p629 = pneg %p184
        %p630 = pneg %p181
        %p631 = pneg %p205
        %p632 = pneg %p202
        %p633 = pneg %p226
        %p634 = pneg %p223
        %p635 = pneg %p247
        %p636 = pneg %p244
        %p637 = pneg %p268
        %p638 = pneg %p265
        %p639 = pneg %p289
        %p640 = pneg %p286
        %p641 = pneg %p310
        %p642 = pneg %p307
        %p643 = pneg %p331
        %p644 = pneg %p328
        %p645 = pneg %p352
        %p646 = pneg %p349
        %p647 = pneg %p373
        %p648 = pneg %p370
        %p649 = pneg %p399
        %p650 = pneg %p396
        %s651 = sand.u32 %s386, 1
        %s652 = scalar_lea.sflag [#allocation4], %s651
        %s653 = sand.u32 %s386, 1
        %s654 = smul.addr %s653, 8
        %s655 = scalar_lea.vmem [#allocation17], %s654
        %v657 = vld [vmem:[#allocation5] sm:$0xff]
        %v658 = vld [vmem:[#allocation5 + $0x8] sm:$0xf]
        %v659 = vld [vmem:[#allocation5 + $0xc] sm:$0xff]
        %v660 = vld [vmem:[#allocation5 + $0x14] sm:$0xf]
        %v661 = vld [vmem:[#allocation5 + $0x18] sm:$0xff]
        %v662 = vld [vmem:[#allocation5 + $0x20] sm:$0xf]
        %v663 = vld [vmem:[#allocation5 + $0x24] sm:$0xff]
        %v664 = vld [vmem:[#allocation5 + $0x2c] sm:$0xf]
        %v665 = vld [vmem:[#allocation5 + $0x30] sm:$0xff]
        %v666 = vld [vmem:[#allocation5 + $0x38] sm:$0xf]
        %v667 = vld [vmem:[#allocation5 + $0x3c] sm:$0xff]
        %v668 = vld [vmem:[#allocation5 + $0x44] sm:$0xf]
        %v669 = vld [vmem:[#allocation5 + $0x48] sm:$0xff]
        %v670 = vld [vmem:[#allocation5 + $0x50] sm:$0xf]
        %v671 = vld [vmem:[#allocation5 + $0x54] sm:$0xff]
        %v672 = vld [vmem:[#allocation5 + $0x5c] sm:$0xf]
        %v673 = vld [vmem:[#allocation5 + $0x60] sm:$0xff]
        %v674 = vld [vmem:[#allocation5 + $0x68] sm:$0xf]
        %v675 = vld [vmem:[#allocation5 + $0x6c] sm:$0xff]
        %v676 = vld [vmem:[#allocation5 + $0x74] sm:$0xf]
        %v677 = vld [vmem:[#allocation5 + $0x78] sm:$0xff]
        %v678 = vld [vmem:[#allocation5 + $0x80] sm:$0xf]
        %v679 = vld [vmem:[#allocation5 + $0x84] sm:$0xff]
        %v680 = vld [vmem:[#allocation5 + $0x8c] sm:$0xf]
        %v681 = vld [vmem:[#allocation5 + $0x90] sm:$0xff]
        %v682 = vld [vmem:[#allocation5 + $0x98] sm:$0xf]
        %v683 = vld [vmem:[#allocation5 + $0x9c] sm:$0xff]
        %v684 = vld [vmem:[#allocation5 + $0xa4] sm:$0xf]
        %v685 = vld [vmem:[#allocation5 + $0xa8] sm:$0xff]
        %v686 = vld [vmem:[#allocation5 + $0xb0] sm:$0xf]
        %v687 = vld [vmem:[#allocation5 + $0xb4] sm:$0xff]
        %v688 = vld [vmem:[#allocation5 + $0xbc] sm:$0xf]
        %v689 = vld [vmem:[#allocation5 + $0xc0] sm:$0xff]
        %v690 = vld [vmem:[#allocation5 + $0xc8] sm:$0xf]
        %v691 = vld [vmem:[#allocation5 + $0xcc] sm:$0xff]
        %v692 = vld [vmem:[#allocation5 + $0xd4] sm:$0xf]
        %v693 = vld [vmem:[#allocation5 + $0xd8] sm:$0xff]
        %v694 = vld [vmem:[#allocation5 + $0xe0] sm:$0xf]
        %v695 = vld [vmem:[#allocation5 + $0xe4] sm:$0xff]
        %v696 = vld [vmem:[#allocation5 + $0xec] sm:$0xf]
        %v697 = vld [vmem:[#allocation5 + $0xf0] sm:$0xff]
        %v698 = vld [vmem:[#allocation5 + $0xf8] sm:$0xf]
        %v699 = vld [vmem:[#allocation5 + $0xfc] sm:$0xff]
        %v700 = vld [vmem:[#allocation5 + $0x104] sm:$0xf]
        %v701 = vld [vmem:[#allocation5 + $0x108] sm:$0xff]
        %v702 = vld [vmem:[#allocation5 + $0x110] sm:$0xf]
        %v703 = vld [vmem:[#allocation5 + $0x114] sm:$0xff]
        %v704 = vld [vmem:[#allocation5 + $0x11c] sm:$0xf]
        %v705 = vld [vmem:[#allocation5 + $0x120] sm:$0xff]
        %v706 = vld [vmem:[#allocation5 + $0x128] sm:$0xf]
        %v707 = vld [vmem:[#allocation5 + $0x12c] sm:$0xff]
        %v708 = vld [vmem:[#allocation5 + $0x134] sm:$0xf]
        %v709 = vld [vmem:[#allocation5 + $0x138] sm:$0xff]
        %v710 = vld [vmem:[#allocation5 + $0x140] sm:$0xf]
        %v711 = vld [vmem:[#allocation5 + $0x144] sm:$0xff]
        %v712 = vld [vmem:[#allocation5 + $0x14c] sm:$0xf]
        %v713 = vld [vmem:[#allocation5 + $0x150] sm:$0xff]
        %v714 = vld [vmem:[#allocation5 + $0x158] sm:$0xf]
        %v715 = vld [vmem:[#allocation5 + $0x15c] sm:$0xff]
        %v716 = vld [vmem:[#allocation5 + $0x164] sm:$0xf]
        %v717 = vld [vmem:[#allocation5 + $0x168] sm:$0xff]
        %v718 = vld [vmem:[#allocation5 + $0x170] sm:$0xf]
        %v719 = vld [vmem:[#allocation5 + $0x174] sm:$0xff]
        %v720 = vld [vmem:[#allocation5 + $0x17c] sm:$0xf]
        %v721 = vld [vmem:[#allocation5 + $0x180] sm:$0xff]
        %v722 = vld [vmem:[#allocation5 + $0x188] sm:$0xf]
        %v723 = vld [vmem:[#allocation5 + $0x18c] sm:$0xff]
        %v724 = vld [vmem:[#allocation5 + $0x194] sm:$0xf]
        %v725 = vld [vmem:[#allocation5 + $0x198] sm:$0xff]
        %v726 = vld [vmem:[#allocation5 + $0x1a0] sm:$0xf]
        %v727 = vld [vmem:[#allocation5 + $0x1a4] sm:$0xff]
        %v728 = vld [vmem:[#allocation5 + $0x1ac] sm:$0xf]
        %v729 = vld [vmem:[#allocation5 + $0x1b0] sm:$0xff]
        %v730 = vld [vmem:[#allocation5 + $0x1b8] sm:$0xf]
        %v731 = vld [vmem:[#allocation5 + $0x1bc] sm:$0xff]
        %v732 = vld [vmem:[#allocation5 + $0x1c4] sm:$0xf]
        %v733 = vld [vmem:[#allocation5 + $0x1c8] sm:$0xff]
        %v734 = vld [vmem:[#allocation5 + $0x1d0] sm:$0xf]
        %v735 = vld [vmem:[#allocation5 + $0x1d4] sm:$0xff]
        %v736 = vld [vmem:[#allocation5 + $0x1dc] sm:$0xf]
        %v737 = vld [vmem:[#allocation5 + $0x1e0] sm:$0xff]
        %v738 = vld [vmem:[#allocation5 + $0x1e8] sm:$0xf]
        %v739 = vld [vmem:[#allocation5 + $0x1ec] sm:$0xff]
        %v740 = vld [vmem:[#allocation5 + $0x1f4] sm:$0xf]
        %v741 = vld [vmem:[#allocation5 + $0x1f8] sm:$0xff]
        %v742 = vld [vmem:[#allocation5 + $0x200] sm:$0xf]
        %v743 = vld [vmem:[#allocation5 + $0x204] sm:$0xff]
        %v744 = vld [vmem:[#allocation5 + $0x20c] sm:$0xf]
        %v745 = vld [vmem:[#allocation5 + $0x210] sm:$0xff]
        %v746 = vld [vmem:[#allocation5 + $0x218] sm:$0xf]
        %v747 = vld [vmem:[#allocation5 + $0x21c] sm:$0xff]
        %v748 = vld [vmem:[#allocation5 + $0x224] sm:$0xf]
        %v749 = vld [vmem:[#allocation5 + $0x228] sm:$0xff]
        %v750 = vld [vmem:[#allocation5 + $0x230] sm:$0xf]
        %v751 = vld [vmem:[#allocation5 + $0x234] sm:$0xff]
        %v752 = vld [vmem:[#allocation5 + $0x23c] sm:$0xf]
        %v753 = vld [vmem:[#allocation5 + $0x240] sm:$0xff]
        %v754 = vld [vmem:[#allocation5 + $0x248] sm:$0xf]
        %v755 = vld [vmem:[#allocation5 + $0x24c] sm:$0xff]
        %v756 = vld [vmem:[#allocation5 + $0x254] sm:$0xf]
        %v757 = vld [vmem:[#allocation5 + $0x258] sm:$0xff]
        %v758 = vld [vmem:[#allocation5 + $0x260] sm:$0xf]
        %v759 = vld [vmem:[#allocation5 + $0x264] sm:$0xff]
        %v760 = vld [vmem:[#allocation5 + $0x26c] sm:$0xf]
        %v761 = vld [vmem:[#allocation5 + $0x270] sm:$0xff]
        %v762 = vld [vmem:[#allocation5 + $0x278] sm:$0xf]
        %v763 = vld [vmem:[#allocation5 + $0x27c] sm:$0xff]
        %v764 = vld [vmem:[#allocation5 + $0x284] sm:$0xf]
        %v765 = vld [vmem:[#allocation5 + $0x288] sm:$0xff]
        %v766 = vld [vmem:[#allocation5 + $0x290] sm:$0xf]
        %v767 = vld [vmem:[#allocation5 + $0x294] sm:$0xff]
        %v768 = vld [vmem:[#allocation5 + $0x29c] sm:$0xf]
        %v769 = vld [vmem:[#allocation5 + $0x2a0] sm:$0xff]
        %v770 = vld [vmem:[#allocation5 + $0x2a8] sm:$0xf]
        %v771 = vld [vmem:[#allocation5 + $0x2ac] sm:$0xff]
        %v772 = vld [vmem:[#allocation5 + $0x2b4] sm:$0xf]
        %v773 = vld [vmem:[#allocation5 + $0x2b8] sm:$0xff]
        %v774 = vld [vmem:[#allocation5 + $0x2c0] sm:$0xf]
        %v775 = vld [vmem:[#allocation5 + $0x2c4] sm:$0xff]
        %v776 = vld [vmem:[#allocation5 + $0x2cc] sm:$0xf]
        %v777 = vld [vmem:[#allocation5 + $0x2d0] sm:$0xff]
        %v778 = vld [vmem:[#allocation5 + $0x2d8] sm:$0xf]
        %v779 = vld [vmem:[#allocation5 + $0x2dc] sm:$0xff]
        %v780 = vld [vmem:[#allocation5 + $0x2e4] sm:$0xf]
        %v781 = vld [vmem:[#allocation5 + $0x2e8] sm:$0xff]
        %v782 = vld [vmem:[#allocation5 + $0x2f0] sm:$0xf]
        %v783 = vld [vmem:[#allocation5 + $0x2f4] sm:$0xff]
        %v784 = vld [vmem:[#allocation5 + $0x2fc] sm:$0xf]
        %v785 = vld [vmem:[#allocation7] sm:$0xff]
        %v786 = vld [vmem:[#allocation7 + $0x8] sm:$0xf]
        %v787 = vld [vmem:[#allocation7 + $0xc] sm:$0xff]
        %v788 = vld [vmem:[#allocation7 + $0x14] sm:$0xf]
        %v789 = vld [vmem:[#allocation7 + $0x18] sm:$0xff]
        %v790 = vld [vmem:[#allocation7 + $0x20] sm:$0xf]
        %v791 = vld [vmem:[#allocation7 + $0x24] sm:$0xff]
        %v792 = vld [vmem:[#allocation7 + $0x2c] sm:$0xf]
        %v793 = vld [vmem:[#allocation7 + $0x30] sm:$0xff]
        %v794 = vld [vmem:[#allocation7 + $0x38] sm:$0xf]
        %v795 = vld [vmem:[#allocation7 + $0x3c] sm:$0xff]
        %v796 = vld [vmem:[#allocation7 + $0x44] sm:$0xf]
        %v797 = vld [vmem:[#allocation7 + $0x48] sm:$0xff]
        %v798 = vld [vmem:[#allocation7 + $0x50] sm:$0xf]
        %v799 = vld [vmem:[#allocation7 + $0x54] sm:$0xff]
        %v800 = vld [vmem:[#allocation7 + $0x5c] sm:$0xf]
        %v801 = vld [vmem:[#allocation7 + $0x60] sm:$0xff]
        %v802 = vld [vmem:[#allocation7 + $0x68] sm:$0xf]
        %v803 = vld [vmem:[#allocation7 + $0x6c] sm:$0xff]
        %v804 = vld [vmem:[#allocation7 + $0x74] sm:$0xf]
        %v805 = vld [vmem:[#allocation7 + $0x78] sm:$0xff]
        %v806 = vld [vmem:[#allocation7 + $0x80] sm:$0xf]
        %v807 = vld [vmem:[#allocation7 + $0x84] sm:$0xff]
        %v808 = vld [vmem:[#allocation7 + $0x8c] sm:$0xf]
        %v809 = vld [vmem:[#allocation7 + $0x90] sm:$0xff]
        %v810 = vld [vmem:[#allocation7 + $0x98] sm:$0xf]
        %v811 = vld [vmem:[#allocation7 + $0x9c] sm:$0xff]
        %v812 = vld [vmem:[#allocation7 + $0xa4] sm:$0xf]
        %v813 = vld [vmem:[#allocation7 + $0xa8] sm:$0xff]
        %v814 = vld [vmem:[#allocation7 + $0xb0] sm:$0xf]
        %v815 = vld [vmem:[#allocation7 + $0xb4] sm:$0xff]
        %v816 = vld [vmem:[#allocation7 + $0xbc] sm:$0xf]
        %v817 = vld [vmem:[%s3] sm:$0x7]
        %v818 = vld [vmem:[%s4] sm:$0x1]
        %v819 = vld [vmem:[%s4 + $0x1] sm:$0x1]
        %v820 = vld [vmem:[%s4 + $0x2] sm:$0x1]
        %v821 = vld [vmem:[%s575] sm:$0xff]
        %v822 = vld [vmem:[%s575 + $0x8] sm:$0xff]
        %v824 = vlaneseq
        %v825 = vshrl.u32 %v824, 7
        %v826 = vsub.s32 0, %v825
        %v827 = vrot.slane %v817, %v826
        %v828 = vlaneseq
        %v829 = vshrl.u32 %v828, 7
        %v830 = vsub.s32 1, %v829
        %v831 = vrot.slane %v817, %v830
        %v832 = vlaneseq
        %v833 = vshrl.u32 %v832, 7
        %v834 = vsub.s32 2, %v833
        %v835 = vrot.slane %v817, %v834
        %v841 = vunpack.c.l.b16 %v821
        %v842 = vunpack.c.h.b16 %v821
        %v843 = vunpack.c.l.b16 %v822
        %v844 = vunpack.c.h.b16 %v822
        %v845 = vpack.c.b16 %v841, %v841
        %v846 = vpack.c.b16 %v842, %v842
        %v847 = vpack.c.b16 %v843, %v843
        %v848 = vpack.c.b16 %v844, %v844
        %v981 = vunpack.c.l.b16 %v657
        %v982 = vunpack.c.h.b16 %v657
        %v983 = vunpack.c.l.b16 %v658
        %v984 = vunpack.c.l.b16 %v659
        %v985 = vunpack.c.h.b16 %v659
        %v986 = vunpack.c.l.b16 %v660
        %v987 = vunpack.c.l.b16 %v661
        %v988 = vunpack.c.h.b16 %v661
        %v989 = vunpack.c.l.b16 %v662
        %v990 = vunpack.c.l.b16 %v663
        %v991 = vunpack.c.h.b16 %v663
        %v992 = vunpack.c.l.b16 %v664
        %v993 = vunpack.c.l.b16 %v665
        %v994 = vunpack.c.h.b16 %v665
        %v995 = vunpack.c.l.b16 %v666
        %v996 = vunpack.c.l.b16 %v667
        %v997 = vunpack.c.h.b16 %v667
        %v998 = vunpack.c.l.b16 %v668
        %v999 = vunpack.c.l.b16 %v669
        %v1000 = vunpack.c.h.b16 %v669
        %v1001 = vunpack.c.l.b16 %v670
        %v1002 = vunpack.c.l.b16 %v671
        %v1003 = vunpack.c.h.b16 %v671
        %v1004 = vunpack.c.l.b16 %v672
        %v1005 = vunpack.c.l.b16 %v673
        %v1006 = vunpack.c.h.b16 %v673
        %v1007 = vunpack.c.l.b16 %v674
        %v1008 = vunpack.c.l.b16 %v675
        %v1009 = vunpack.c.h.b16 %v675
        %v1010 = vunpack.c.l.b16 %v676
        %v1011 = vunpack.c.l.b16 %v677
        %v1012 = vunpack.c.h.b16 %v677
        %v1013 = vunpack.c.l.b16 %v678
        %v1014 = vunpack.c.l.b16 %v679
        %v1015 = vunpack.c.h.b16 %v679
        %v1016 = vunpack.c.l.b16 %v680
        %v1017 = vunpack.c.l.b16 %v681
        %v1018 = vunpack.c.h.b16 %v681
        %v1019 = vunpack.c.l.b16 %v682
        %v1020 = vunpack.c.l.b16 %v683
        %v1021 = vunpack.c.h.b16 %v683
        %v1022 = vunpack.c.l.b16 %v684
        %v1023 = vunpack.c.l.b16 %v685
        %v1024 = vunpack.c.h.b16 %v685
        %v1025 = vunpack.c.l.b16 %v686
        %v1026 = vunpack.c.l.b16 %v687
        %v1027 = vunpack.c.h.b16 %v687
        %v1028 = vunpack.c.l.b16 %v688
        %v1029 = vunpack.c.l.b16 %v689
        %v1030 = vunpack.c.h.b16 %v689
        %v1031 = vunpack.c.l.b16 %v690
        %v1032 = vunpack.c.l.b16 %v691
        %v1033 = vunpack.c.h.b16 %v691
        %v1034 = vunpack.c.l.b16 %v692
        %v1035 = vunpack.c.l.b16 %v693
        %v1036 = vunpack.c.h.b16 %v693
        %v1037 = vunpack.c.l.b16 %v694
        %v1038 = vunpack.c.l.b16 %v695
        %v1039 = vunpack.c.h.b16 %v695
        %v1040 = vunpack.c.l.b16 %v696
        %v1041 = vunpack.c.l.b16 %v697
        %v1042 = vunpack.c.h.b16 %v697
        %v1043 = vunpack.c.l.b16 %v698
        %v1044 = vunpack.c.l.b16 %v699
        %v1045 = vunpack.c.h.b16 %v699
        %v1046 = vunpack.c.l.b16 %v700
        %v1047 = vunpack.c.l.b16 %v701
        %v1048 = vunpack.c.h.b16 %v701
        %v1049 = vunpack.c.l.b16 %v702
        %v1050 = vunpack.c.l.b16 %v703
        %v1051 = vunpack.c.h.b16 %v703
        %v1052 = vunpack.c.l.b16 %v704
        %v1053 = vunpack.c.l.b16 %v705
        %v1054 = vunpack.c.h.b16 %v705
        %v1055 = vunpack.c.l.b16 %v706
        %v1056 = vunpack.c.l.b16 %v707
        %v1057 = vunpack.c.h.b16 %v707
        %v1058 = vunpack.c.l.b16 %v708
        %v1059 = vunpack.c.l.b16 %v709
        %v1060 = vunpack.c.h.b16 %v709
        %v1061 = vunpack.c.l.b16 %v710
        %v1062 = vunpack.c.l.b16 %v711
        %v1063 = vunpack.c.h.b16 %v711
        %v1064 = vunpack.c.l.b16 %v712
        %v1065 = vunpack.c.l.b16 %v713
        %v1066 = vunpack.c.h.b16 %v713
        %v1067 = vunpack.c.l.b16 %v714
        %v1068 = vunpack.c.l.b16 %v715
        %v1069 = vunpack.c.h.b16 %v715
        %v1070 = vunpack.c.l.b16 %v716
        %v1071 = vunpack.c.l.b16 %v717
        %v1072 = vunpack.c.h.b16 %v717
        %v1073 = vunpack.c.l.b16 %v718
        %v1074 = vunpack.c.l.b16 %v719
        %v1075 = vunpack.c.h.b16 %v719
        %v1076 = vunpack.c.l.b16 %v720
        %v1077 = vunpack.c.l.b16 %v721
        %v1078 = vunpack.c.h.b16 %v721
        %v1079 = vunpack.c.l.b16 %v722
        %v1080 = vunpack.c.l.b16 %v723
        %v1081 = vunpack.c.h.b16 %v723
        %v1082 = vunpack.c.l.b16 %v724
        %v1083 = vunpack.c.l.b16 %v725
        %v1084 = vunpack.c.h.b16 %v725
        %v1085 = vunpack.c.l.b16 %v726
        %v1086 = vunpack.c.l.b16 %v727
        %v1087 = vunpack.c.h.b16 %v727
        %v1088 = vunpack.c.l.b16 %v728
        %v1089 = vunpack.c.l.b16 %v729
        %v1090 = vunpack.c.h.b16 %v729
        %v1091 = vunpack.c.l.b16 %v730
        %v1092 = vunpack.c.l.b16 %v731
        %v1093 = vunpack.c.h.b16 %v731
        %v1094 = vunpack.c.l.b16 %v732
        %v1095 = vunpack.c.l.b16 %v733
        %v1096 = vunpack.c.h.b16 %v733
        %v1097 = vunpack.c.l.b16 %v734
        %v1098 = vunpack.c.l.b16 %v735
        %v1099 = vunpack.c.h.b16 %v735
        %v1100 = vunpack.c.l.b16 %v736
        %v1101 = vunpack.c.l.b16 %v737
        %v1102 = vunpack.c.h.b16 %v737
        %v1103 = vunpack.c.l.b16 %v738
        %v1104 = vunpack.c.l.b16 %v739
        %v1105 = vunpack.c.h.b16 %v739
        %v1106 = vunpack.c.l.b16 %v740
        %v1107 = vunpack.c.l.b16 %v741
        %v1108 = vunpack.c.h.b16 %v741
        %v1109 = vunpack.c.l.b16 %v742
        %v1110 = vunpack.c.l.b16 %v743
        %v1111 = vunpack.c.h.b16 %v743
        %v1112 = vunpack.c.l.b16 %v744
        %v1113 = vunpack.c.l.b16 %v745
        %v1114 = vunpack.c.h.b16 %v745
        %v1115 = vunpack.c.l.b16 %v746
        %v1116 = vunpack.c.l.b16 %v747
        %v1117 = vunpack.c.h.b16 %v747
        %v1118 = vunpack.c.l.b16 %v748
        %v1119 = vunpack.c.l.b16 %v749
        %v1120 = vunpack.c.h.b16 %v749
        %v1121 = vunpack.c.l.b16 %v750
        %v1122 = vunpack.c.l.b16 %v751
        %v1123 = vunpack.c.h.b16 %v751
        %v1124 = vunpack.c.l.b16 %v752
        %v1125 = vunpack.c.l.b16 %v753
        %v1126 = vunpack.c.h.b16 %v753
        %v1127 = vunpack.c.l.b16 %v754
        %v1128 = vunpack.c.l.b16 %v755
        %v1129 = vunpack.c.h.b16 %v755
        %v1130 = vunpack.c.l.b16 %v756
        %v1131 = vunpack.c.l.b16 %v757
        %v1132 = vunpack.c.h.b16 %v757
        %v1133 = vunpack.c.l.b16 %v758
        %v1134 = vunpack.c.l.b16 %v759
        %v1135 = vunpack.c.h.b16 %v759
        %v1136 = vunpack.c.l.b16 %v760
        %v1137 = vunpack.c.l.b16 %v761
        %v1138 = vunpack.c.h.b16 %v761
        %v1139 = vunpack.c.l.b16 %v762
        %v1140 = vunpack.c.l.b16 %v763
        %v1141 = vunpack.c.h.b16 %v763
        %v1142 = vunpack.c.l.b16 %v764
        %v1143 = vunpack.c.l.b16 %v765
        %v1144 = vunpack.c.h.b16 %v765
        %v1145 = vunpack.c.l.b16 %v766
        %v1146 = vunpack.c.l.b16 %v767
        %v1147 = vunpack.c.h.b16 %v767
        %v1148 = vunpack.c.l.b16 %v768
        %v1149 = vunpack.c.l.b16 %v769
        %v1150 = vunpack.c.h.b16 %v769
        %v1151 = vunpack.c.l.b16 %v770
        %v1152 = vunpack.c.l.b16 %v771
        %v1153 = vunpack.c.h.b16 %v771
        %v1154 = vunpack.c.l.b16 %v772
        %v1155 = vunpack.c.l.b16 %v773
        %v1156 = vunpack.c.h.b16 %v773
        %v1157 = vunpack.c.l.b16 %v774
        %v1158 = vunpack.c.l.b16 %v775
        %v1159 = vunpack.c.h.b16 %v775
        %v1160 = vunpack.c.l.b16 %v776
        %v1161 = vunpack.c.l.b16 %v777
        %v1162 = vunpack.c.h.b16 %v777
        %v1163 = vunpack.c.l.b16 %v778
        %v1164 = vunpack.c.l.b16 %v779
        %v1165 = vunpack.c.h.b16 %v779
        %v1166 = vunpack.c.l.b16 %v780
        %v1167 = vunpack.c.l.b16 %v781
        %v1168 = vunpack.c.h.b16 %v781
        %v1169 = vunpack.c.l.b16 %v782
        %v1170 = vunpack.c.l.b16 %v783
        %v1171 = vunpack.c.h.b16 %v783
        %v1172 = vunpack.c.l.b16 %v784
        %v1173 = vpack.c.b16 %v984, %v981
        %v1174 = vpack.c.b16 %v985, %v982
        %v1175 = vpack.c.b16 %v986, %v983
        %v1176 = vpack.c.b16 %v990, %v987
        %v1177 = vpack.c.b16 %v991, %v988
        %v1178 = vpack.c.b16 %v992, %v989
        %v1179 = vpack.c.b16 %v996, %v993
        %v1180 = vpack.c.b16 %v997, %v994
        %v1181 = vpack.c.b16 %v998, %v995
        %v1182 = vpack.c.b16 %v1002, %v999
        %v1183 = vpack.c.b16 %v1003, %v1000
        %v1184 = vpack.c.b16 %v1004, %v1001
        %v1185 = vpack.c.b16 %v1008, %v1005
        %v1186 = vpack.c.b16 %v1009, %v1006
        %v1187 = vpack.c.b16 %v1010, %v1007
        %v1188 = vpack.c.b16 %v1014, %v1011
        %v1189 = vpack.c.b16 %v1015, %v1012
        %v1190 = vpack.c.b16 %v1016, %v1013
        %v1191 = vpack.c.b16 %v1020, %v1017
        %v1192 = vpack.c.b16 %v1021, %v1018
        %v1193 = vpack.c.b16 %v1022, %v1019
        %v1194 = vpack.c.b16 %v1026, %v1023
        %v1195 = vpack.c.b16 %v1027, %v1024
        %v1196 = vpack.c.b16 %v1028, %v1025
        %v1197 = vpack.c.b16 %v1032, %v1029
        %v1198 = vpack.c.b16 %v1033, %v1030
        %v1199 = vpack.c.b16 %v1034, %v1031
        %v1200 = vpack.c.b16 %v1038, %v1035
        %v1201 = vpack.c.b16 %v1039, %v1036
        %v1202 = vpack.c.b16 %v1040, %v1037
        %v1203 = vpack.c.b16 %v1044, %v1041
        %v1204 = vpack.c.b16 %v1045, %v1042
        %v1205 = vpack.c.b16 %v1046, %v1043
        %v1206 = vpack.c.b16 %v1050, %v1047
        %v1207 = vpack.c.b16 %v1051, %v1048
        %v1208 = vpack.c.b16 %v1052, %v1049
        %v1209 = vpack.c.b16 %v1056, %v1053
        %v1210 = vpack.c.b16 %v1057, %v1054
        %v1211 = vpack.c.b16 %v1058, %v1055
        %v1212 = vpack.c.b16 %v1062, %v1059
        %v1213 = vpack.c.b16 %v1063, %v1060
        %v1214 = vpack.c.b16 %v1064, %v1061
        %v1215 = vpack.c.b16 %v1068, %v1065
        %v1216 = vpack.c.b16 %v1069, %v1066
        %v1217 = vpack.c.b16 %v1070, %v1067
        %v1218 = vpack.c.b16 %v1074, %v1071
        %v1219 = vpack.c.b16 %v1075, %v1072
        %v1220 = vpack.c.b16 %v1076, %v1073
        %v1221 = vpack.c.b16 %v1080, %v1077
        %v1222 = vpack.c.b16 %v1081, %v1078
        %v1223 = vpack.c.b16 %v1082, %v1079
        %v1224 = vpack.c.b16 %v1086, %v1083
        %v1225 = vpack.c.b16 %v1087, %v1084
        %v1226 = vpack.c.b16 %v1088, %v1085
        %v1227 = vpack.c.b16 %v1092, %v1089
        %v1228 = vpack.c.b16 %v1093, %v1090
        %v1229 = vpack.c.b16 %v1094, %v1091
        %v1230 = vpack.c.b16 %v1098, %v1095
        %v1231 = vpack.c.b16 %v1099, %v1096
        %v1232 = vpack.c.b16 %v1100, %v1097
        %v1233 = vpack.c.b16 %v1104, %v1101
        %v1234 = vpack.c.b16 %v1105, %v1102
        %v1235 = vpack.c.b16 %v1106, %v1103
        %v1236 = vpack.c.b16 %v1110, %v1107
        %v1237 = vpack.c.b16 %v1111, %v1108
        %v1238 = vpack.c.b16 %v1112, %v1109
        %v1239 = vpack.c.b16 %v1116, %v1113
        %v1240 = vpack.c.b16 %v1117, %v1114
        %v1241 = vpack.c.b16 %v1118, %v1115
        %v1242 = vpack.c.b16 %v1122, %v1119
        %v1243 = vpack.c.b16 %v1123, %v1120
        %v1244 = vpack.c.b16 %v1124, %v1121
        %v1245 = vpack.c.b16 %v1128, %v1125
        %v1246 = vpack.c.b16 %v1129, %v1126
        %v1247 = vpack.c.b16 %v1130, %v1127
        %v1248 = vpack.c.b16 %v1134, %v1131
        %v1249 = vpack.c.b16 %v1135, %v1132
        %v1250 = vpack.c.b16 %v1136, %v1133
        %v1251 = vpack.c.b16 %v1140, %v1137
        %v1252 = vpack.c.b16 %v1141, %v1138
        %v1253 = vpack.c.b16 %v1142, %v1139
        %v1254 = vpack.c.b16 %v1146, %v1143
        %v1255 = vpack.c.b16 %v1147, %v1144
        %v1256 = vpack.c.b16 %v1148, %v1145
        %v1257 = vpack.c.b16 %v1152, %v1149
        %v1258 = vpack.c.b16 %v1153, %v1150
        %v1259 = vpack.c.b16 %v1154, %v1151
        %v1260 = vpack.c.b16 %v1158, %v1155
        %v1261 = vpack.c.b16 %v1159, %v1156
        %v1262 = vpack.c.b16 %v1160, %v1157
        %v1263 = vpack.c.b16 %v1164, %v1161
        %v1264 = vpack.c.b16 %v1165, %v1162
        %v1265 = vpack.c.b16 %v1166, %v1163
        %v1266 = vpack.c.b16 %v1170, %v1167
        %v1267 = vpack.c.b16 %v1171, %v1168
        %v1268 = vpack.c.b16 %v1172, %v1169
        %1365 = vmatprep.subr.bf16.mxu0 %v1174
        %1366 = vmatpush1.bf16.msra.mxu0 %v1173
        %1367 = vmatprep.subr.bf16.mxu0 %v1177
        %1368 = vmatpush1.bf16.msra.mxu0 %v1176
        %1369 = vmatprep.subr.bf16.mxu0 %v1180
        %1370 = vmatpush1.bf16.msra.mxu0 %v1179
        %1371 = vmatprep.subr.bf16.mxu0 %v1183
        %1372 = vmatpush1.bf16.msra.mxu0 %v1182
        %1373 = vmatprep.subr.bf16.mxu0 %v1186
        %1374 = vmatpush1.bf16.msra.mxu0 %v1185
        %1375 = vmatprep.subr.bf16.mxu0 %v1189
        %1376 = vmatpush1.bf16.msra.mxu0 %v1188
        %1377 = vmatprep.subr.bf16.mxu0 %v1192
        %1378 = vmatpush1.bf16.msra.mxu0 %v1191
        %1379 = vmatprep.subr.bf16.mxu0 %v1195
        %1380 = vmatpush1.bf16.msra.mxu0 %v1194
        %1381 = vmatprep.subr.bf16.mxu0 %v1198
        %1382 = vmatpush1.bf16.msra.mxu0 %v1197
        %1383 = vmatprep.subr.bf16.mxu0 %v1201
        %1384 = vmatpush1.bf16.msra.mxu0 %v1200
        %1385 = vmatprep.subr.bf16.mxu0 %v1204
        %1386 = vmatpush1.bf16.msra.mxu0 %v1203
        %1387 = vmatprep.subr.bf16.mxu0 %v1207
        %1388 = vmatpush1.bf16.msra.mxu0 %v1206
        %1389 = vmatprep.subr.bf16.mxu0 %v1210
        %1390 = vmatpush1.bf16.msra.mxu0 %v1209
        %1391 = vmatprep.subr.bf16.mxu0 %v1213
        %1392 = vmatpush1.bf16.msra.mxu0 %v1212
        %1393 = vmatprep.subr.bf16.mxu0 %v1216
        %1394 = vmatpush1.bf16.msra.mxu0 %v1215
        %1395 = vmatprep.subr.bf16.mxu0 %v1219
        %1396 = vmatpush1.bf16.msra.mxu0 %v1218
        %1397 = vmatprep.mubr.bf16.mxu0 %v846
        %1398 = vmatmul.mubr.bf16.gmra.mrb[0].mxu0 %v845
        %v1399 = vpop.f32.mrb[0].mxu0
        %v1400 = vadd.f32 %v827, %v1399
        %v1401 = vpop.f32.mrb[0].mxu0
        %v1402 = vadd.f32 %v831, %v1401
        %v1403 = vpop.f32.mrb[0].mxu0
        %v1404 = vpop.f32.mrb[0].mxu0
        %1405 = vdwg.mxu0
        %1406 = vmatprep.subr.bf16.mxu0 %v1222
        %1407 = vmatpush1.bf16.msra.mxu0 %v1221
        %1408 = vmatprep.subr.bf16.mxu0 %v1225
        %1409 = vmatpush1.bf16.msra.mxu0 %v1224
        %1410 = vmatprep.subr.bf16.mxu0 %v1228
        %1411 = vmatpush1.bf16.msra.mxu0 %v1227
        %1412 = vmatprep.subr.bf16.mxu0 %v1231
        %1413 = vmatpush1.bf16.msra.mxu0 %v1230
        %1414 = vmatprep.subr.bf16.mxu0 %v1234
        %1415 = vmatpush1.bf16.msra.mxu0 %v1233
        %1416 = vmatprep.subr.bf16.mxu0 %v1237
        %1417 = vmatpush1.bf16.msra.mxu0 %v1236
        %1418 = vmatprep.subr.bf16.mxu0 %v1240
        %1419 = vmatpush1.bf16.msra.mxu0 %v1239
        %1420 = vmatprep.subr.bf16.mxu0 %v1243
        %1421 = vmatpush1.bf16.msra.mxu0 %v1242
        %1422 = vmatprep.subr.bf16.mxu0 %v1246
        %1423 = vmatpush1.bf16.msra.mxu0 %v1245
        %1424 = vmatprep.subr.bf16.mxu0 %v1249
        %1425 = vmatpush1.bf16.msra.mxu0 %v1248
        %1426 = vmatprep.subr.bf16.mxu0 %v1252
        %1427 = vmatpush1.bf16.msra.mxu0 %v1251
        %1428 = vmatprep.subr.bf16.mxu0 %v1255
        %1429 = vmatpush1.bf16.msra.mxu0 %v1254
        %1430 = vmatprep.subr.bf16.mxu0 %v1258
        %1431 = vmatpush1.bf16.msra.mxu0 %v1257
        %1432 = vmatprep.subr.bf16.mxu0 %v1261
        %1433 = vmatpush1.bf16.msra.mxu0 %v1260
        %1434 = vmatprep.subr.bf16.mxu0 %v1264
        %1435 = vmatpush1.bf16.msra.mxu0 %v1263
        %1436 = vmatprep.subr.bf16.mxu0 %v1267
        %1437 = vmatpush1.bf16.msra.mxu0 %v1266
        %1438 = vmatprep.mubr.bf16.mxu0 %v848
        %1439 = vmatmul.mubr.bf16.gmra.mrb[0].mxu0 %v847
        %v1440 = vpop.f32.mrb[0].mxu0
        %v1441 = vadd.f32 %v1400, %v1440
        %v1442 = vpop.f32.mrb[0].mxu0
        %v1443 = vadd.f32 %v1402, %v1442
        %v1444 = vpop.f32.mrb[0].mxu0
        %v1445 = vpop.f32.mrb[0].mxu0
        %1446 = vdwg.mxu0
        %1447 = vmatprep.subr.bf16.mxu0 0
        %1448 = vmatpush1.bf16.msra.mxu0 %v1175
        %1449 = vmatprep.subr.bf16.mxu0 0
        %1450 = vmatpush1.bf16.msra.mxu0 %v1178
        %1451 = vmatprep.subr.bf16.mxu0 0
        %1452 = vmatpush1.bf16.msra.mxu0 %v1181
        %1453 = vmatprep.subr.bf16.mxu0 0
        %1454 = vmatpush1.bf16.msra.mxu0 %v1184
        %1455 = vmatprep.subr.bf16.mxu0 0
        %1456 = vmatpush1.bf16.msra.mxu0 %v1187
        %1457 = vmatprep.subr.bf16.mxu0 0
        %1458 = vmatpush1.bf16.msra.mxu0 %v1190
        %1459 = vmatprep.subr.bf16.mxu0 0
        %1460 = vmatpush1.bf16.msra.mxu0 %v1193
        %1461 = vmatprep.subr.bf16.mxu0 0
        %1462 = vmatpush1.bf16.msra.mxu0 %v1196
        %1463 = vmatprep.subr.bf16.mxu0 0
        %1464 = vmatpush1.bf16.msra.mxu0 %v1199
        %1465 = vmatprep.subr.bf16.mxu0 0
        %1466 = vmatpush1.bf16.msra.mxu0 %v1202
        %1467 = vmatprep.subr.bf16.mxu0 0
        %1468 = vmatpush1.bf16.msra.mxu0 %v1205
        %1469 = vmatprep.subr.bf16.mxu0 0
        %1470 = vmatpush1.bf16.msra.mxu0 %v1208
        %1471 = vmatprep.subr.bf16.mxu0 0
        %1472 = vmatpush1.bf16.msra.mxu0 %v1211
        %1473 = vmatprep.subr.bf16.mxu0 0
        %1474 = vmatpush1.bf16.msra.mxu0 %v1214
        %1475 = vmatprep.subr.bf16.mxu0 0
        %1476 = vmatpush1.bf16.msra.mxu0 %v1217
        %1477 = vmatprep.subr.bf16.mxu0 0
        %1478 = vmatpush1.bf16.msra.mxu0 %v1220
        %1479 = vmatprep.mubr.bf16.mxu0 %v846
        %1480 = vmatmul.mubr.bf16.gmra.mrb[0].mxu0 %v845
        %v1481 = vpop.f32.mrb[0].mxu0
        %v1482 = vadd.f32 %v835, %v1481
        %v1483 = vpop.f32.mrb[0].mxu0
        %v1484 = vpop.f32.mrb[0].mxu0
        %v1485 = vpop.f32.mrb[0].mxu0
        %1486 = vdwg.mxu0
        %1487 = vmatprep.subr.bf16.mxu0 0
        %1488 = vmatpush1.bf16.msra.mxu0 %v1223
        %1489 = vmatprep.subr.bf16.mxu0 0
        %1490 = vmatpush1.bf16.msra.mxu0 %v1226
        %1491 = vmatprep.subr.bf16.mxu0 0
        %1492 = vmatpush1.bf16.msra.mxu0 %v1229
        %1493 = vmatprep.subr.bf16.mxu0 0
        %1494 = vmatpush1.bf16.msra.mxu0 %v1232
        %1495 = vmatprep.subr.bf16.mxu0 0
        %1496 = vmatpush1.bf16.msra.mxu0 %v1235
        %1497 = vmatprep.subr.bf16.mxu0 0
        %1498 = vmatpush1.bf16.msra.mxu0 %v1238
        %1499 = vmatprep.subr.bf16.mxu0 0
        %1500 = vmatpush1.bf16.msra.mxu0 %v1241
        %1501 = vmatprep.subr.bf16.mxu0 0
        %1502 = vmatpush1.bf16.msra.mxu0 %v1244
        %1503 = vmatprep.subr.bf16.mxu0 0
        %1504 = vmatpush1.bf16.msra.mxu0 %v1247
        %1505 = vmatprep.subr.bf16.mxu0 0
        %1506 = vmatpush1.bf16.msra.mxu0 %v1250
        %1507 = vmatprep.subr.bf16.mxu0 0
        %1508 = vmatpush1.bf16.msra.mxu0 %v1253
        %1509 = vmatprep.subr.bf16.mxu0 0
        %1510 = vmatpush1.bf16.msra.mxu0 %v1256
        %1511 = vmatprep.subr.bf16.mxu0 0
        %1512 = vmatpush1.bf16.msra.mxu0 %v1259
        %1513 = vmatprep.subr.bf16.mxu0 0
        %1514 = vmatpush1.bf16.msra.mxu0 %v1262
        %1515 = vmatprep.subr.bf16.mxu0 0
        %1516 = vmatpush1.bf16.msra.mxu0 %v1265
        %1517 = vmatprep.subr.bf16.mxu0 0
        %1518 = vmatpush1.bf16.msra.mxu0 %v1268
        %1519 = vmatprep.mubr.bf16.mxu0 %v848
        %1520 = vmatmul.mubr.bf16.gmra.mrb[0].mxu0 %v847
        %v1521 = vpop.f32.mrb[0].mxu0
        %v1522 = vadd.f32 %v1482, %v1521
        %v1523 = vpop.f32.mrb[0].mxu0
        %v1524 = vpop.f32.mrb[0].mxu0
        %v1525 = vpop.f32.mrb[0].mxu0
        %1526 = vdwg.mxu0
        %v1559 = vunpack.c.l.b16 %v785
        %v1560 = vunpack.c.h.b16 %v785
        %v1561 = vunpack.c.l.b16 %v786
        %v1562 = vunpack.c.l.b16 %v787
        %v1563 = vunpack.c.h.b16 %v787
        %v1564 = vunpack.c.l.b16 %v788
        %v1565 = vunpack.c.l.b16 %v789
        %v1566 = vunpack.c.h.b16 %v789
        %v1567 = vunpack.c.l.b16 %v790
        %v1568 = vunpack.c.l.b16 %v791
        %v1569 = vunpack.c.h.b16 %v791
        %v1570 = vunpack.c.l.b16 %v792
        %v1571 = vunpack.c.l.b16 %v793
        %v1572 = vunpack.c.h.b16 %v793
        %v1573 = vunpack.c.l.b16 %v794
        %v1574 = vunpack.c.l.b16 %v795
        %v1575 = vunpack.c.h.b16 %v795
        %v1576 = vunpack.c.l.b16 %v796
        %v1577 = vunpack.c.l.b16 %v797
        %v1578 = vunpack.c.h.b16 %v797
        %v1579 = vunpack.c.l.b16 %v798
        %v1580 = vunpack.c.l.b16 %v799
        %v1581 = vunpack.c.h.b16 %v799
        %v1582 = vunpack.c.l.b16 %v800
        %v1583 = vunpack.c.l.b16 %v801
        %v1584 = vunpack.c.h.b16 %v801
        %v1585 = vunpack.c.l.b16 %v802
        %v1586 = vunpack.c.l.b16 %v803
        %v1587 = vunpack.c.h.b16 %v803
        %v1588 = vunpack.c.l.b16 %v804
        %v1589 = vunpack.c.l.b16 %v805
        %v1590 = vunpack.c.h.b16 %v805
        %v1591 = vunpack.c.l.b16 %v806
        %v1592 = vunpack.c.l.b16 %v807
        %v1593 = vunpack.c.h.b16 %v807
        %v1594 = vunpack.c.l.b16 %v808
        %v1595 = vunpack.c.l.b16 %v809
        %v1596 = vunpack.c.h.b16 %v809
        %v1597 = vunpack.c.l.b16 %v810
        %v1598 = vunpack.c.l.b16 %v811
        %v1599 = vunpack.c.h.b16 %v811
        %v1600 = vunpack.c.l.b16 %v812
        %v1601 = vunpack.c.l.b16 %v813
        %v1602 = vunpack.c.h.b16 %v813
        %v1603 = vunpack.c.l.b16 %v814
        %v1604 = vunpack.c.l.b16 %v815
        %v1605 = vunpack.c.h.b16 %v815
        %v1606 = vunpack.c.l.b16 %v816
        %v1607 = vpack.c.b16 %v1562, %v1559
        %v1608 = vpack.c.b16 %v1563, %v1560
        %v1609 = vpack.c.b16 %v1564, %v1561
        %v1610 = vpack.c.b16 %v1568, %v1565
        %v1611 = vpack.c.b16 %v1569, %v1566
        %v1612 = vpack.c.b16 %v1570, %v1567
        %v1613 = vpack.c.b16 %v1574, %v1571
        %v1614 = vpack.c.b16 %v1575, %v1572
        %v1615 = vpack.c.b16 %v1576, %v1573
        %v1616 = vpack.c.b16 %v1580, %v1577
        %v1617 = vpack.c.b16 %v1581, %v1578
        %v1618 = vpack.c.b16 %v1582, %v1579
        %v1619 = vpack.c.b16 %v1586, %v1583
        %v1620 = vpack.c.b16 %v1587, %v1584
        %v1621 = vpack.c.b16 %v1588, %v1585
        %v1622 = vpack.c.b16 %v1592, %v1589
        %v1623 = vpack.c.b16 %v1593, %v1590
        %v1624 = vpack.c.b16 %v1594, %v1591
        %v1625 = vpack.c.b16 %v1598, %v1595
        %v1626 = vpack.c.b16 %v1599, %v1596
        %v1627 = vpack.c.b16 %v1600, %v1597
        %v1628 = vpack.c.b16 %v1604, %v1601
        %v1629 = vpack.c.b16 %v1605, %v1602
        %v1630 = vpack.c.b16 %v1606, %v1603
        %1655 = vmatprep.subr.bf16.mxu0 %v1608
        %1656 = vmatpush1.bf16.msra.mxu0 %v1607
        %1657 = vmatprep.subr.bf16.mxu0 %v1611
        %1658 = vmatpush1.bf16.msra.mxu0 %v1610
        %1659 = vmatprep.subr.bf16.mxu0 %v1614
        %1660 = vmatpush1.bf16.msra.mxu0 %v1613
        %1661 = vmatprep.subr.bf16.mxu0 %v1617
        %1662 = vmatpush1.bf16.msra.mxu0 %v1616
        %1663 = vmatprep.subr.bf16.mxu0 %v1620
        %1664 = vmatpush1.bf16.msra.mxu0 %v1619
        %1665 = vmatprep.subr.bf16.mxu0 %v1623
        %1666 = vmatpush1.bf16.msra.mxu0 %v1622
        %1667 = vmatprep.subr.bf16.mxu0 %v1626
        %1668 = vmatpush1.bf16.msra.mxu0 %v1625
        %1669 = vmatprep.subr.bf16.mxu0 %v1629
        %1670 = vmatpush1.bf16.msra.mxu0 %v1628
        %1671 = vmatprep.subr.bf16.mxu0 0
        %1672 = vmatpush1.bf16.msra.mxu0 0
        %1673 = vmatprep.subr.bf16.mxu0 0
        %1674 = vmatpush1.bf16.msra.mxu0 0
        %1675 = vmatprep.subr.bf16.mxu0 0
        %1676 = vmatpush1.bf16.msra.mxu0 0
        %1677 = vmatprep.subr.bf16.mxu0 0
        %1678 = vmatpush1.bf16.msra.mxu0 0
        %1679 = vmatprep.subr.bf16.mxu0 0
        %1680 = vmatpush1.bf16.msra.mxu0 0
        %1681 = vmatprep.subr.bf16.mxu0 0
        %1682 = vmatpush1.bf16.msra.mxu0 0
        %1683 = vmatprep.subr.bf16.mxu0 0
        %1684 = vmatpush1.bf16.msra.mxu0 0
        %1685 = vmatprep.subr.bf16.mxu0 0
        %1686 = vmatpush1.bf16.msra.mxu0 0
        %1687 = vmatprep.mubr.bf16.mxu0 0
        %1688 = vmatmul.mubr.bf16.gmra.mrb[0].mxu0 0
        %v1689 = vpop.f32.mrb[0].mxu0
        %v1690 = vadd.f32 0.0, %v1689
        %v1691 = vpop.f32.mrb[0].mxu0
        %v1692 = vadd.f32 0.0, %v1691
        %v1693 = vpop.f32.mrb[0].mxu0
        %v1694 = vpop.f32.mrb[0].mxu0
        %1695 = vdwg.mxu0
        %1696 = vmatprep.subr.bf16.mxu0 0
        %1697 = vmatpush1.bf16.msra.mxu0 %v1609
        %1698 = vmatprep.subr.bf16.mxu0 0
        %1699 = vmatpush1.bf16.msra.mxu0 %v1612
        %1700 = vmatprep.subr.bf16.mxu0 0
        %1701 = vmatpush1.bf16.msra.mxu0 %v1615
        %1702 = vmatprep.subr.bf16.mxu0 0
        %1703 = vmatpush1.bf16.msra.mxu0 %v1618
        %1704 = vmatprep.subr.bf16.mxu0 0
        %1705 = vmatpush1.bf16.msra.mxu0 %v1621
        %1706 = vmatprep.subr.bf16.mxu0 0
        %1707 = vmatpush1.bf16.msra.mxu0 %v1624
        %1708 = vmatprep.subr.bf16.mxu0 0
        %1709 = vmatpush1.bf16.msra.mxu0 %v1627
        %1710 = vmatprep.subr.bf16.mxu0 0
        %1711 = vmatpush1.bf16.msra.mxu0 %v1630
        %1712 = vmatprep.subr.bf16.mxu0 0
        %1713 = vmatpush1.bf16.msra.mxu0 0
        %1714 = vmatprep.subr.bf16.mxu0 0
        %1715 = vmatpush1.bf16.msra.mxu0 0
        %1716 = vmatprep.subr.bf16.mxu0 0
        %1717 = vmatpush1.bf16.msra.mxu0 0
        %1718 = vmatprep.subr.bf16.mxu0 0
        %1719 = vmatpush1.bf16.msra.mxu0 0
        %1720 = vmatprep.subr.bf16.mxu0 0
        %1721 = vmatpush1.bf16.msra.mxu0 0
        %1722 = vmatprep.subr.bf16.mxu0 0
        %1723 = vmatpush1.bf16.msra.mxu0 0
        %1724 = vmatprep.subr.bf16.mxu0 0
        %1725 = vmatpush1.bf16.msra.mxu0 0
        %1726 = vmatprep.subr.bf16.mxu0 0
        %1727 = vmatpush1.bf16.msra.mxu0 0
        %1728 = vmatprep.mubr.bf16.mxu0 0
        %1729 = vmatmul.mubr.bf16.gmra.mrb[0].mxu0 0
        %v1730 = vpop.f32.mrb[0].mxu0
        %v1731 = vadd.f32 0.0, %v1730
        %v1732 = vpop.f32.mrb[0].mxu0
        %v1733 = vpop.f32.mrb[0].mxu0
        %v1734 = vpop.f32.mrb[0].mxu0
        %1735 = vdwg.mxu0
        %v1736 = vadd.f32 %v1441, %v1690
        %v1738 = vlaneseq
        %v1739 = vshrl.u32 %v1738, 7
        %v1740 = vsub.s32 0, %v1739
        %v1741 = vrot.slane %v818, %v1740
        %v1743 = vadd.f32 %v1736, %v1741
        %v1744 = vsub.f32 0.0, %v1743
        %v1745 = vmul.f32 %v1744, 1.442695
        %v1746 = vpow.pop %v1745
        %v1747 = vadd.f32 %v1746, 1.0
        %v1748 = vrcp.pop %v1747
        %v1749 = vmul.f32 1.0, %v1748
        %v1750 = vadd.f32 %v1443, %v1692
        %v1752 = vlaneseq
        %v1753 = vshrl.u32 %v1752, 7
        %v1754 = vsub.s32 0, %v1753
        %v1755 = vrot.slane %v819, %v1754
        %v1757 = vadd.f32 %v1750, %v1755
        %v1758 = vsub.f32 0.0, %v1757
        %v1759 = vmul.f32 %v1758, 1.442695
        %v1760 = vpow.pop %v1759
        %v1761 = vadd.f32 %v1760, 1.0
        %v1762 = vrcp.pop %v1761
        %v1763 = vmul.f32 1.0, %v1762
        %v1765 = vlaneseq
        %v1766 = vshrl.u32 %v1765, 7
        %v1767 = vsub.s32 0, %v1766
        %v1768 = vrot.slane %v820, %v1767
        %v1770 = vadd.f32 %v1731, %v1768
        %v1771 = vmul.f32 %v1749, %v1770
        %v1772 = vadd.f32 %v1522, %v1771
        %v1773 = vtanh.pop %v1772
        %v1774 = vsub.f32 1.0, %v1763
        %v1775 = vmul.f32 %v1774, %v1773
        %v1776 = vmul.f32 %v1763, 0.0
        %v1777 = vadd.f32 %v1775, %v1776
        %s1778 = scalar_lea.vmem %s575, 16 [#allocation2]
        %v1779 = vld [vmem:[%s1778] sm:$0xff]
        %v1780 = vld [vmem:[%s1778 + $0x8] sm:$0xff]
        %v1783 = vunpack.c.l.b16 %v1779
        %v1784 = vunpack.c.h.b16 %v1779
        %v1785 = vunpack.c.l.b16 %v1780
        %v1786 = vunpack.c.h.b16 %v1780
        %v1787 = vpack.c.b16 %v1783, %v1783
        %v1788 = vpack.c.b16 %v1784, %v1784
        %v1789 = vpack.c.b16 %v1785, %v1785
        %v1790 = vpack.c.b16 %v1786, %v1786
        %1795 = vmatprep.subr.bf16.mxu0 %v1174
        %1796 = vmatpush1.bf16.msra.mxu0 %v1173
        %1797 = vmatprep.subr.bf16.mxu0 %v1177
        %1798 = vmatpush1.bf16.msra.mxu0 %v1176
        %1799 = vmatprep.subr.bf16.mxu0 %v1180
        %1800 = vmatpush1.bf16.msra.mxu0 %v1179
        %1801 = vmatprep.subr.bf16.mxu0 %v1183
        %1802 = vmatpush1.bf16.msra.mxu0 %v1182
        %1803 = vmatprep.subr.bf16.mxu0 %v1186
        %1804 = vmatpush1.bf16.msra.mxu0 %v1185
        %1805 = vmatprep.subr.bf16.mxu0 %v1189
        %1806 = vmatpush1.bf16.msra.mxu0 %v1188
        %1807 = vmatprep.subr.bf16.mxu0 %v1192
        %1808 = vmatpush1.bf16.msra.mxu0 %v1191
        %1809 = vmatprep.subr.bf16.mxu0 %v1195
        %1810 = vmatpush1.bf16.msra.mxu0 %v1194
        %1811 = vmatprep.subr.bf16.mxu0 %v1198
        %1812 = vmatpush1.bf16.msra.mxu0 %v1197
        %1813 = vmatprep.subr.bf16.mxu0 %v1201
        %1814 = vmatpush1.bf16.msra.mxu0 %v1200
        %1815 = vmatprep.subr.bf16.mxu0 %v1204
        %1816 = vmatpush1.bf16.msra.mxu0 %v1203
        %1817 = vmatprep.subr.bf16.mxu0 %v1207
        %1818 = vmatpush1.bf16.msra.mxu0 %v1206
        %1819 = vmatprep.subr.bf16.mxu0 %v1210
        %1820 = vmatpush1.bf16.msra.mxu0 %v1209
        %1821 = vmatprep.subr.bf16.mxu0 %v1213
        %1822 = vmatpush1.bf16.msra.mxu0 %v1212
        %1823 = vmatprep.subr.bf16.mxu0 %v1216
        %1824 = vmatpush1.bf16.msra.mxu0 %v1215
        %1825 = vmatprep.subr.bf16.mxu0 %v1219
        %1826 = vmatpush1.bf16.msra.mxu0 %v1218
        %1827 = vmatprep.mubr.bf16.mxu0 %v1788
        %1828 = vmatmul.mubr.bf16.gmra.mrb[0].mxu0 %v1787
        %v1829 = vpop.f32.mrb[0].mxu0
        %v1830 = vadd.f32 %v827, %v1829
        %v1831 = vpop.f32.mrb[0].mxu0
        %v1832 = vadd.f32 %v831, %v1831
        %v1833 = vpop.f32.mrb[0].mxu0
        %v1834 = vpop.f32.mrb[0].mxu0
        %1835 = vdwg.mxu0
        %1836 = vmatprep.subr.bf16.mxu0 %v1222
        %1837 = vmatpush1.bf16.msra.mxu0 %v1221
        %1838 = vmatprep.subr.bf16.mxu0 %v1225
        %1839 = vmatpush1.bf16.msra.mxu0 %v1224
        %1840 = vmatprep.subr.bf16.mxu0 %v1228
        %1841 = vmatpush1.bf16.msra.mxu0 %v1227
        %1842 = vmatprep.subr.bf16.mxu0 %v1231
        %1843 = vmatpush1.bf16.msra.mxu0 %v1230
        %1844 = vmatprep.subr.bf16.mxu0 %v1234
        %1845 = vmatpush1.bf16.msra.mxu0 %v1233
        %1846 = vmatprep.subr.bf16.mxu0 %v1237
        %1847 = vmatpush1.bf16.msra.mxu0 %v1236
        %1848 = vmatprep.subr.bf16.mxu0 %v1240
        %1849 = vmatpush1.bf16.msra.mxu0 %v1239
        %1850 = vmatprep.subr.bf16.mxu0 %v1243
        %1851 = vmatpush1.bf16.msra.mxu0 %v1242
        %1852 = vmatprep.subr.bf16.mxu0 %v1246
        %1853 = vmatpush1.bf16.msra.mxu0 %v1245
        %1854 = vmatprep.subr.bf16.mxu0 %v1249
        %1855 = vmatpush1.bf16.msra.mxu0 %v1248
        %1856 = vmatprep.subr.bf16.mxu0 %v1252
        %1857 = vmatpush1.bf16.msra.mxu0 %v1251
        %1858 = vmatprep.subr.bf16.mxu0 %v1255
        %1859 = vmatpush1.bf16.msra.mxu0 %v1254
        %1860 = vmatprep.subr.bf16.mxu0 %v1258
        %1861 = vmatpush1.bf16.msra.mxu0 %v1257
        %1862 = vmatprep.subr.bf16.mxu0 %v1261
        %1863 = vmatpush1.bf16.msra.mxu0 %v1260
        %1864 = vmatprep.subr.bf16.mxu0 %v1264
        %1865 = vmatpush1.bf16.msra.mxu0 %v1263
        %1866 = vmatprep.subr.bf16.mxu0 %v1267
        %1867 = vmatpush1.bf16.msra.mxu0 %v1266
        %1868 = vmatprep.mubr.bf16.mxu0 %v1790
        %1869 = vmatmul.mubr.bf16.gmra.mrb[0].mxu0 %v1789
        %v1870 = vpop.f32.mrb[0].mxu0
        %v1871 = vadd.f32 %v1830, %v1870
        %v1872 = vpop.f32.mrb[0].mxu0
        %v1873 = vadd.f32 %v1832, %v1872
        %v1874 = vpop.f32.mrb[0].mxu0
        %v1875 = vpop.f32.mrb[0].mxu0
        %1876 = vdwg.mxu0
        %1877 = vmatprep.subr.bf16.mxu0 0
        %1878 = vmatpush1.bf16.msra.mxu0 %v1175
        %1879 = vmatprep.subr.bf16.mxu0 0
        %1880 = vmatpush1.bf16.msra.mxu0 %v1178
        %1881 = vmatprep.subr.bf16.mxu0 0
        %1882 = vmatpush1.bf16.msra.mxu0 %v1181
        %1883 = vmatprep.subr.bf16.mxu0 0
        %1884 = vmatpush1.bf16.msra.mxu0 %v1184
        %1885 = vmatprep.subr.bf16.mxu0 0
        %1886 = vmatpush1.bf16.msra.mxu0 %v1187
        %1887 = vmatprep.subr.bf16.mxu0 0
        %1888 = vmatpush1.bf16.msra.mxu0 %v1190
        %1889 = vmatprep.subr.bf16.mxu0 0
        %1890 = vmatpush1.bf16.msra.mxu0 %v1193
        %1891 = vmatprep.subr.bf16.mxu0 0
        %1892 = vmatpush1.bf16.msra.mxu0 %v1196
        %1893 = vmatprep.subr.bf16.mxu0 0
        %1894 = vmatpush1.bf16.msra.mxu0 %v1199
        %1895 = vmatprep.subr.bf16.mxu0 0
        %1896 = vmatpush1.bf16.msra.mxu0 %v1202
        %1897 = vmatprep.subr.bf16.mxu0 0
        %1898 = vmatpush1.bf16.msra.mxu0 %v1205
        %1899 = vmatprep.subr.bf16.mxu0 0
        %1900 = vmatpush1.bf16.msra.mxu0 %v1208
        %1901 = vmatprep.subr.bf16.mxu0 0
        %1902 = vmatpush1.bf16.msra.mxu0 %v1211
        %1903 = vmatprep.subr.bf16.mxu0 0
        %1904 = vmatpush1.bf16.msra.mxu0 %v1214
        %1905 = vmatprep.subr.bf16.mxu0 0
        %1906 = vmatpush1.bf16.msra.mxu0 %v1217
        %1907 = vmatprep.subr.bf16.mxu0 0
        %1908 = vmatpush1.bf16.msra.mxu0 %v1220
        %1909 = vmatprep.mubr.bf16.mxu0 %v1788
        %1910 = vmatmul.mubr.bf16.gmra.mrb[0].mxu0 %v1787
        %v1911 = vpop.f32.mrb[0].mxu0
        %v1912 = vadd.f32 %v835, %v1911
        %v1913 = vpop.f32.mrb[0].mxu0
        %v1914 = vpop.f32.mrb[0].mxu0
        %v1915 = vpop.f32.mrb[0].mxu0
        %1916 = vdwg.mxu0
        %1917 = vmatprep.subr.bf16.mxu0 0
        %1918 = vmatpush1.bf16.msra.mxu0 %v1223
        %1919 = vmatprep.subr.bf16.mxu0 0
        %1920 = vmatpush1.bf16.msra.mxu0 %v1226
        %1921 = vmatprep.subr.bf16.mxu0 0
        %1922 = vmatpush1.bf16.msra.mxu0 %v1229
        %1923 = vmatprep.subr.bf16.mxu0 0
        %1924 = vmatpush1.bf16.msra.mxu0 %v1232
        %1925 = vmatprep.subr.bf16.mxu0 0
        %1926 = vmatpush1.bf16.msra.mxu0 %v1235
        %1927 = vmatprep.subr.bf16.mxu0 0
        %1928 = vmatpush1.bf16.msra.mxu0 %v1238
        %1929 = vmatprep.subr.bf16.mxu0 0
        %1930 = vmatpush1.bf16.msra.mxu0 %v1241
        %1931 = vmatprep.subr.bf16.mxu0 0
        %1932 = vmatpush1.bf16.msra.mxu0 %v1244
        %1933 = vmatprep.subr.bf16.mxu0 0
        %1934 = vmatpush1.bf16.msra.mxu0 %v1247
        %1935 = vmatprep.subr.bf16.mxu0 0
        %1936 = vmatpush1.bf16.msra.mxu0 %v1250
        %1937 = vmatprep.subr.bf16.mxu0 0
        %1938 = vmatpush1.bf16.msra.mxu0 %v1253
        %1939 = vmatprep.subr.bf16.mxu0 0
        %1940 = vmatpush1.bf16.msra.mxu0 %v1256
        %1941 = vmatprep.subr.bf16.mxu0 0
        %1942 = vmatpush1.bf16.msra.mxu0 %v1259
        %1943 = vmatprep.subr.bf16.mxu0 0
        %1944 = vmatpush1.bf16.msra.mxu0 %v1262
        %1945 = vmatprep.subr.bf16.mxu0 0
        %1946 = vmatpush1.bf16.msra.mxu0 %v1265
        %1947 = vmatprep.subr.bf16.mxu0 0
        %1948 = vmatpush1.bf16.msra.mxu0 %v1268
        %1949 = vmatprep.mubr.bf16.mxu0 %v1790
        %1950 = vmatmul.mubr.bf16.gmra.mrb[0].mxu0 %v1789
        %v1951 = vpop.f32.mrb[0].mxu0
        %v1952 = vadd.f32 %v1912, %v1951
        %v1953 = vpop.f32.mrb[0].mxu0
        %v1954 = vpop.f32.mrb[0].mxu0
        %v1955 = vpop.f32.mrb[0].mxu0
        %1956 = vdwg.mxu0
        %v1957 = vpack.c.bf16 %v1777, %v1777
        %1958 = vmatprep.subr.bf16.mxu0 %v1608
        %1959 = vmatpush1.bf16.msra.mxu0 %v1607
        %1960 = vmatprep.subr.bf16.mxu0 %v1611
        %1961 = vmatpush1.bf16.msra.mxu0 %v1610
        %1962 = vmatprep.subr.bf16.mxu0 %v1614
        %1963 = vmatpush1.bf16.msra.mxu0 %v1613
        %1964 = vmatprep.subr.bf16.mxu0 %v1617
        %1965 = vmatpush1.bf16.msra.mxu0 %v1616
        %1966 = vmatprep.subr.bf16.mxu0 %v1620
        %1967 = vmatpush1.bf16.msra.mxu0 %v1619
        %1968 = vmatprep.subr.bf16.mxu0 %v1623
        %1969 = vmatpush1.bf16.msra.mxu0 %v1622
        %1970 = vmatprep.subr.bf16.mxu0 %v1626
        %1971 = vmatpush1.bf16.msra.mxu0 %v1625
        %1972 = vmatprep.subr.bf16.mxu0 %v1629
        %1973 = vmatpush1.bf16.msra.mxu0 %v1628
        %1974 = vmatprep.subr.bf16.mxu0 0
        %1975 = vmatpush1.bf16.msra.mxu0 0
        %1976 = vmatprep.subr.bf16.mxu0 0
        %1977 = vmatpush1.bf16.msra.mxu0 0
        %1978 = vmatprep.subr.bf16.mxu0 0
        %1979 = vmatpush1.bf16.msra.mxu0 0
        %1980 = vmatprep.subr.bf16.mxu0 0
        %1981 = vmatpush1.bf16.msra.mxu0 0
        %1982 = vmatprep.subr.bf16.mxu0 0
        %1983 = vmatpush1.bf16.msra.mxu0 0
        %1984 = vmatprep.subr.bf16.mxu0 0
        %1985 = vmatpush1.bf16.msra.mxu0 0
        %1986 = vmatprep.subr.bf16.mxu0 0
        %1987 = vmatpush1.bf16.msra.mxu0 0
        %1988 = vmatprep.subr.bf16.mxu0 0
        %1989 = vmatpush1.bf16.msra.mxu0 0
        %1990 = vmatprep.mubr.bf16.mxu0 0
        %1991 = vmatmul.mubr.bf16.gmra.mrb[0].mxu0 %v1957
        %v1992 = vpop.f32.mrb[0].mxu0
        %v1993 = vadd.f32 0.0, %v1992
        %v1994 = vpop.f32.mrb[0].mxu0
        %v1995 = vadd.f32 0.0, %v1994
        %v1996 = vpop.f32.mrb[0].mxu0
        %v1997 = vpop.f32.mrb[0].mxu0
        %1998 = vdwg.mxu0
        %1999 = vmatprep.subr.bf16.mxu0 0
        %2000 = vmatpush1.bf16.msra.mxu0 %v1609
        %2001 = vmatprep.subr.bf16.mxu0 0
        %2002 = vmatpush1.bf16.msra.mxu0 %v1612
        %2003 = vmatprep.subr.bf16.mxu0 0
        %2004 = vmatpush1.bf16.msra.mxu0 %v1615
        %2005 = vmatprep.subr.bf16.mxu0 0
        %2006 = vmatpush1.bf16.msra.mxu0 %v1618
        %2007 = vmatprep.subr.bf16.mxu0 0
        %2008 = vmatpush1.bf16.msra.mxu0 %v1621
        %2009 = vmatprep.subr.bf16.mxu0 0
        %2010 = vmatpush1.bf16.msra.mxu0 %v1624
        %2011 = vmatprep.subr.bf16.mxu0 0
        %2012 = vmatpush1.bf16.msra.mxu0 %v1627
        %2013 = vmatprep.subr.bf16.mxu0 0
        %2014 = vmatpush1.bf16.msra.mxu0 %v1630
        %2015 = vmatprep.subr.bf16.mxu0 0
        %2016 = vmatpush1.bf16.msra.mxu0 0
        %2017 = vmatprep.subr.bf16.mxu0 0
        %2018 = vmatpush1.bf16.msra.mxu0 0
        %2019 = vmatprep.subr.bf16.mxu0 0
        %2020 = vmatpush1.bf16.msra.mxu0 0
        %2021 = vmatprep.subr.bf16.mxu0 0
        %2022 = vmatpush1.bf16.msra.mxu0 0
        %2023 = vmatprep.subr.bf16.mxu0 0
        %2024 = vmatpush1.bf16.msra.mxu0 0
        %2025 = vmatprep.subr.bf16.mxu0 0
        %2026 = vmatpush1.bf16.msra.mxu0 0
        %2027 = vmatprep.subr.bf16.mxu0 0
        %2028 = vmatpush1.bf16.msra.mxu0 0
        %2029 = vmatprep.subr.bf16.mxu0 0
        %2030 = vmatpush1.bf16.msra.mxu0 0
        %2031 = vmatprep.mubr.bf16.mxu0 0
        %2032 = vmatmul.mubr.bf16.gmra.mrb[0].mxu0 %v1957
        %v2033 = vpop.f32.mrb[0].mxu0
        %v2034 = vadd.f32 0.0, %v2033
        %v2035 = vpop.f32.mrb[0].mxu0
        %v2036 = vpop.f32.mrb[0].mxu0
        %v2037 = vpop.f32.mrb[0].mxu0
        %2038 = vdwg.mxu0
        %v2039 = vadd.f32 %v1871, %v1993
        %v2040 = vadd.f32 %v2039, %v1741
        %v2041 = vsub.f32 0.0, %v2040
        %v2042 = vmul.f32 %v2041, 1.442695
        %v2043 = vpow.pop %v2042
        %v2044 = vadd.f32 %v2043, 1.0
        %v2045 = vrcp.pop %v2044
        %v2046 = vmul.f32 1.0, %v2045
        %v2047 = vadd.f32 %v1873, %v1995
        %v2048 = vadd.f32 %v2047, %v1755
        %v2049 = vsub.f32 0.0, %v2048
        %v2050 = vmul.f32 %v2049, 1.442695
        %v2051 = vpow.pop %v2050
        %v2052 = vadd.f32 %v2051, 1.0
        %v2053 = vrcp.pop %v2052
        %v2054 = vmul.f32 1.0, %v2053
        %v2055 = vadd.f32 %v2034, %v1768
        %v2056 = vmul.f32 %v2046, %v2055
        %v2057 = vadd.f32 %v1952, %v2056
        %v2058 = vtanh.pop %v2057
        %v2059 = vsub.f32 1.0, %v2054
        %v2060 = vmul.f32 %v2059, %v2058
        %v2061 = vmul.f32 %v2054, %v1777
        %v2062 = vadd.f32 %v2060, %v2061
        %s2063 = scalar_lea.vmem %s575, 32 [#allocation2]
        %v2064 = vld [vmem:[%s2063] sm:$0xff]
        %v2065 = vld [vmem:[%s2063 + $0x8] sm:$0xff]
        %v2068 = vunpack.c.l.b16 %v2064
        %v2069 = vunpack.c.h.b16 %v2064
        %v2070 = vunpack.c.l.b16 %v2065
        %v2071 = vunpack.c.h.b16 %v2065
        %v2072 = vpack.c.b16 %v2068, %v2068
        %v2073 = vpack.c.b16 %v2069, %v2069
        %v2074 = vpack.c.b16 %v2070, %v2070
        %v2075 = vpack.c.b16 %v2071, %v2071
        %2080 = vmatprep.subr.bf16.mxu0 %v1174
        %2081 = vmatpush1.bf16.msra.mxu0 %v1173
        %2082 = vmatprep.subr.bf16.mxu0 %v1177
        %2083 = vmatpush1.bf16.msra.mxu0 %v1176
        %2084 = vmatprep.subr.bf16.mxu0 %v1180
        %2085 = vmatpush1.bf16.msra.mxu0 %v1179
        %2086 = vmatprep.subr.bf16.mxu0 %v1183
        %2087 = vmatpush1.bf16.msra.mxu0 %v1182
        %2088 = vmatprep.subr.bf16.mxu0 %v1186
        %2089 = vmatpush1.bf16.msra.mxu0 %v1185
        %2090 = vmatprep.subr.bf16.mxu0 %v1189
        %2091 = vmatpush1.bf16.msra.mxu0 %v1188
        %2092 = vmatprep.subr.bf16.mxu0 %v1192
        %2093 = vmatpush1.bf16.msra.mxu0 %v1191
        %2094 = vmatprep.subr.bf16.mxu0 %v1195
        %2095 = vmatpush1.bf16.msra.mxu0 %v1194
        %2096 = vmatprep.subr.bf16.mxu0 %v1198
        %2097 = vmatpush1.bf16.msra.mxu0 %v1197
        %2098 = vmatprep.subr.bf16.mxu0 %v1201
        %2099 = vmatpush1.bf16.msra.mxu0 %v1200
        %2100 = vmatprep.subr.bf16.mxu0 %v1204
        %2101 = vmatpush1.bf16.msra.mxu0 %v1203
        %2102 = vmatprep.subr.bf16.mxu0 %v1207
        %2103 = vmatpush1.bf16.msra.mxu0 %v1206
        %2104 = vmatprep.subr.bf16.mxu0 %v1210
        %2105 = vmatpush1.bf16.msra.mxu0 %v1209
        %2106 = vmatprep.subr.bf16.mxu0 %v1213
        %2107 = vmatpush1.bf16.msra.mxu0 %v1212
        %2108 = vmatprep.subr.bf16.mxu0 %v1216
        %2109 = vmatpush1.bf16.msra.mxu0 %v1215
        %2110 = vmatprep.subr.bf16.mxu0 %v1219
        %2111 = vmatpush1.bf16.msra.mxu0 %v1218
        %2112 = vmatprep.mubr.bf16.mxu0 %v2073
        %2113 = vmatmul.mubr.bf16.gmra.mrb[0].mxu0 %v2072
        %v2114 = vpop.f32.mrb[0].mxu0
        %v2115 = vadd.f32 %v827, %v2114
        %v2116 = vpop.f32.mrb[0].mxu0
        %v2117 = vadd.f32 %v831, %v2116
        %v2118 = vpop.f32.mrb[0].mxu0
        %v2119 = vpop.f32.mrb[0].mxu0
        %2120 = vdwg.mxu0
        %2121 = vmatprep.subr.bf16.mxu0 %v1222
        %2122 = vmatpush1.bf16.msra.mxu0 %v1221
        %2123 = vmatprep.subr.bf16.mxu0 %v1225
        %2124 = vmatpush1.bf16.msra.mxu0 %v1224
        %2125 = vmatprep.subr.bf16.mxu0 %v1228
        %2126 = vmatpush1.bf16.msra.mxu0 %v1227
        %2127 = vmatprep.subr.bf16.mxu0 %v1231
        %2128 = vmatpush1.bf16.msra.mxu0 %v1230
        %2129 = vmatprep.subr.bf16.mxu0 %v1234
        %2130 = vmatpush1.bf16.msra.mxu0 %v1233
        %2131 = vmatprep.subr.bf16.mxu0 %v1237
        %2132 = vmatpush1.bf16.msra.mxu0 %v1236
        %2133 = vmatprep.subr.bf16.mxu0 %v1240
        %2134 = vmatpush1.bf16.msra.mxu0 %v1239
        %2135 = vmatprep.subr.bf16.mxu0 %v1243
        %2136 = vmatpush1.bf16.msra.mxu0 %v1242
        %2137 = vmatprep.subr.bf16.mxu0 %v1246
        %2138 = vmatpush1.bf16.msra.mxu0 %v1245
        %2139 = vmatprep.subr.bf16.mxu0 %v1249
        %2140 = vmatpush1.bf16.msra.mxu0 %v1248
        %2141 = vmatprep.subr.bf16.mxu0 %v1252
        %2142 = vmatpush1.bf16.msra.mxu0 %v1251
        %2143 = vmatprep.subr.bf16.mxu0 %v1255
        %2144 = vmatpush1.bf16.msra.mxu0 %v1254
        %2145 = vmatprep.subr.bf16.mxu0 %v1258
        %2146 = vmatpush1.bf16.msra.mxu0 %v1257
        %2147 = vmatprep.subr.bf16.mxu0 %v1261
        %2148 = vmatpush1.bf16.msra.mxu0 %v1260
        %2149 = vmatprep.subr.bf16.mxu0 %v1264
        %2150 = vmatpush1.bf16.msra.mxu0 %v1263
        %2151 = vmatprep.subr.bf16.mxu0 %v1267
        %2152 = vmatpush1.bf16.msra.mxu0 %v1266
        %2153 = vmatprep.mubr.bf16.mxu0 %v2075
        %2154 = vmatmul.mubr.bf16.gmra.mrb[0].mxu0 %v2074
        %v2155 = vpop.f32.mrb[0].mxu0
        %v2156 = vadd.f32 %v2115, %v2155
        %v2157 = vpop.f32.mrb[0].mxu0
        %v2158 = vadd.f32 %v2117, %v2157
        %v2159 = vpop.f32.mrb[0].mxu0
        %v2160 = vpop.f32.mrb[0].mxu0
        %2161 = vdwg.mxu0
        %2162 = vmatprep.subr.bf16.mxu0 0
        %2163 = vmatpush1.bf16.msra.mxu0 %v1175
        %2164 = vmatprep.subr.bf16.mxu0 0
        %2165 = vmatpush1.bf16.msra.mxu0 %v1178
        %2166 = vmatprep.subr.bf16.mxu0 0
        %2167 = vmatpush1.bf16.msra.mxu0 %v1181
        %2168 = vmatprep.subr.bf16.mxu0 0
        %2169 = vmatpush1.bf16.msra.mxu0 %v1184
        %2170 = vmatprep.subr.bf16.mxu0 0
        %2171 = vmatpush1.bf16.msra.mxu0 %v1187
        %2172 = vmatprep.subr.bf16.mxu0 0
        %2173 = vmatpush1.bf16.msra.mxu0 %v1190
        %2174 = vmatprep.subr.bf16.mxu0 0
        %2175 = vmatpush1.bf16.msra.mxu0 %v1193
        %2176 = vmatprep.subr.bf16.mxu0 0
        %2177 = vmatpush1.bf16.msra.mxu0 %v1196
        %2178 = vmatprep.subr.bf16.mxu0 0
        %2179 = vmatpush1.bf16.msra.mxu0 %v1199
        %2180 = vmatprep.subr.bf16.mxu0 0
        %2181 = vmatpush1.bf16.msra.mxu0 %v1202
        %2182 = vmatprep.subr.bf16.mxu0 0
        %2183 = vmatpush1.bf16.msra.mxu0 %v1205
        %2184 = vmatprep.subr.bf16.mxu0 0
        %2185 = vmatpush1.bf16.msra.mxu0 %v1208
        %2186 = vmatprep.subr.bf16.mxu0 0
        %2187 = vmatpush1.bf16.msra.mxu0 %v1211
        %2188 = vmatprep.subr.bf16.mxu0 0
        %2189 = vmatpush1.bf16.msra.mxu0 %v1214
        %2190 = vmatprep.subr.bf16.mxu0 0
        %2191 = vmatpush1.bf16.msra.mxu0 %v1217
        %2192 = vmatprep.subr.bf16.mxu0 0
        %2193 = vmatpush1.bf16.msra.mxu0 %v1220
        %2194 = vmatprep.mubr.bf16.mxu0 %v2073
        %2195 = vmatmul.mubr.bf16.gmra.mrb[0].mxu0 %v2072
        %v2196 = vpop.f32.mrb[0].mxu0
        %v2197 = vadd.f32 %v835, %v2196
        %v2198 = vpop.f32.mrb[0].mxu0
        %v2199 = vpop.f32.mrb[0].mxu0
        %v2200 = vpop.f32.mrb[0].mxu0
        %2201 = vdwg.mxu0
        %2202 = vmatprep.subr.bf16.mxu0 0
        %2203 = vmatpush1.bf16.msra.mxu0 %v1223
        %2204 = vmatprep.subr.bf16.mxu0 0
        %2205 = vmatpush1.bf16.msra.mxu0 %v1226
        %2206 = vmatprep.subr.bf16.mxu0 0
        %2207 = vmatpush1.bf16.msra.mxu0 %v1229
        %2208 = vmatprep.subr.bf16.mxu0 0
        %2209 = vmatpush1.bf16.msra.mxu0 %v1232
        %2210 = vmatprep.subr.bf16.mxu0 0
        %2211 = vmatpush1.bf16.msra.mxu0 %v1235
        %2212 = vmatprep.subr.bf16.mxu0 0
        %2213 = vmatpush1.bf16.msra.mxu0 %v1238
        %2214 = vmatprep.subr.bf16.mxu0 0
        %2215 = vmatpush1.bf16.msra.mxu0 %v1241
        %2216 = vmatprep.subr.bf16.mxu0 0
        %2217 = vmatpush1.bf16.msra.mxu0 %v1244
        %2218 = vmatprep.subr.bf16.mxu0 0
        %2219 = vmatpush1.bf16.msra.mxu0 %v1247
        %2220 = vmatprep.subr.bf16.mxu0 0
        %2221 = vmatpush1.bf16.msra.mxu0 %v1250
        %2222 = vmatprep.subr.bf16.mxu0 0
        %2223 = vmatpush1.bf16.msra.mxu0 %v1253
        %2224 = vmatprep.subr.bf16.mxu0 0
        %2225 = vmatpush1.bf16.msra.mxu0 %v1256
        %2226 = vmatprep.subr.bf16.mxu0 0
        %2227 = vmatpush1.bf16.msra.mxu0 %v1259
        %2228 = vmatprep.subr.bf16.mxu0 0
        %2229 = vmatpush1.bf16.msra.mxu0 %v1262
        %2230 = vmatprep.subr.bf16.mxu0 0
        %2231 = vmatpush1.bf16.msra.mxu0 %v1265
        %2232 = vmatprep.subr.bf16.mxu0 0
        %2233 = vmatpush1.bf16.msra.mxu0 %v1268
        %2234 = vmatprep.mubr.bf16.mxu0 %v2075
        %2235 = vmatmul.mubr.bf16.gmra.mrb[0].mxu0 %v2074
        %v2236 = vpop.f32.mrb[0].mxu0
        %v2237 = vadd.f32 %v2197, %v2236
        %v2238 = vpop.f32.mrb[0].mxu0
        %v2239 = vpop.f32.mrb[0].mxu0
        %v2240 = vpop.f32.mrb[0].mxu0
        %2241 = vdwg.mxu0
        %v2242 = vpack.c.bf16 %v2062, %v2062
        %2243 = vmatprep.subr.bf16.mxu0 %v1608
        %2244 = vmatpush1.bf16.msra.mxu0 %v1607
        %2245 = vmatprep.subr.bf16.mxu0 %v1611
        %2246 = vmatpush1.bf16.msra.mxu0 %v1610
        %2247 = vmatprep.subr.bf16.mxu0 %v1614
        %2248 = vmatpush1.bf16.msra.mxu0 %v1613
        %2249 = vmatprep.subr.bf16.mxu0 %v1617
        %2250 = vmatpush1.bf16.msra.mxu0 %v1616
        %2251 = vmatprep.subr.bf16.mxu0 %v1620
        %2252 = vmatpush1.bf16.msra.mxu0 %v1619
        %2253 = vmatprep.subr.bf16.mxu0 %v1623
        %2254 = vmatpush1.bf16.msra.mxu0 %v1622
        %2255 = vmatprep.subr.bf16.mxu0 %v1626
        %2256 = vmatpush1.bf16.msra.mxu0 %v1625
        %2257 = vmatprep.subr.bf16.mxu0 %v1629
        %2258 = vmatpush1.bf16.msra.mxu0 %v1628
        %2259 = vmatprep.subr.bf16.mxu0 0
        %2260 = vmatpush1.bf16.msra.mxu0 0
        %2261 = vmatprep.subr.bf16.mxu0 0
        %2262 = vmatpush1.bf16.msra.mxu0 0
        %2263 = vmatprep.subr.bf16.mxu0 0
        %2264 = vmatpush1.bf16.msra.mxu0 0
        %2265 = vmatprep.subr.bf16.mxu0 0
        %2266 = vmatpush1.bf16.msra.mxu0 0
        %2267 = vmatprep.subr.bf16.mxu0 0
        %2268 = vmatpush1.bf16.msra.mxu0 0
        %2269 = vmatprep.subr.bf16.mxu0 0
        %2270 = vmatpush1.bf16.msra.mxu0 0
        %2271 = vmatprep.subr.bf16.mxu0 0
        %2272 = vmatpush1.bf16.msra.mxu0 0
        %2273 = vmatprep.subr.bf16.mxu0 0
        %2274 = vmatpush1.bf16.msra.mxu0 0
        %2275 = vmatprep.mubr.bf16.mxu0 0
        %2276 = vmatmul.mubr.bf16.gmra.mrb[0].mxu0 %v2242
        %v2277 = vpop.f32.mrb[0].mxu0
        %v2278 = vadd.f32 0.0, %v2277
        %v2279 = vpop.f32.mrb[0].mxu0
        %v2280 = vadd.f32 0.0, %v2279
        %v2281 = vpop.f32.mrb[0].mxu0
        %v2282 = vpop.f32.mrb[0].mxu0
        %2283 = vdwg.mxu0
        %2284 = vmatprep.subr.bf16.mxu0 0
        %2285 = vmatpush1.bf16.msra.mxu0 %v1609
        %2286 = vmatprep.subr.bf16.mxu0 0
        %2287 = vmatpush1.bf16.msra.mxu0 %v1612
        %2288 = vmatprep.subr.bf16.mxu0 0
        %2289 = vmatpush1.bf16.msra.mxu0 %v1615
        %2290 = vmatprep.subr.bf16.mxu0 0
        %2291 = vmatpush1.bf16.msra.mxu0 %v1618
        %2292 = vmatprep.subr.bf16.mxu0 0
        %2293 = vmatpush1.bf16.msra.mxu0 %v1621
        %2294 = vmatprep.subr.bf16.mxu0 0
        %2295 = vmatpush1.bf16.msra.mxu0 %v1624
        %2296 = vmatprep.subr.bf16.mxu0 0
        %2297 = vmatpush1.bf16.msra.mxu0 %v1627
        %2298 = vmatprep.subr.bf16.mxu0 0
        %2299 = vmatpush1.bf16.msra.mxu0 %v1630
        %2300 = vmatprep.subr.bf16.mxu0 0
        %2301 = vmatpush1.bf16.msra.mxu0 0
        %2302 = vmatprep.subr.bf16.mxu0 0
        %2303 = vmatpush1.bf16.msra.mxu0 0
        %2304 = vmatprep.subr.bf16.mxu0 0
        %2305 = vmatpush1.bf16.msra.mxu0 0
        %2306 = vmatprep.subr.bf16.mxu0 0
        %2307 = vmatpush1.bf16.msra.mxu0 0
        %2308 = vmatprep.subr.bf16.mxu0 0
        %2309 = vmatpush1.bf16.msra.mxu0 0
        %2310 = vmatprep.subr.bf16.mxu0 0
        %2311 = vmatpush1.bf16.msra.mxu0 0
        %2312 = vmatprep.subr.bf16.mxu0 0
        %2313 = vmatpush1.bf16.msra.mxu0 0
        %2314 = vmatprep.subr.bf16.mxu0 0
        %2315 = vmatpush1.bf16.msra.mxu0 0
        %2316 = vmatprep.mubr.bf16.mxu0 0
        %2317 = vmatmul.mubr.bf16.gmra.mrb[0].mxu0 %v2242
        %v2318 = vpop.f32.mrb[0].mxu0
        %v2319 = vadd.f32 0.0, %v2318
        %v2320 = vpop.f32.mrb[0].mxu0
        %v2321 = vpop.f32.mrb[0].mxu0
        %v2322 = vpop.f32.mrb[0].mxu0
        %2323 = vdwg.mxu0
        %v2324 = vadd.f32 %v2156, %v2278
        %v2325 = vadd.f32 %v2324, %v1741
        %v2326 = vsub.f32 0.0, %v2325
        %v2327 = vmul.f32 %v2326, 1.442695
        %v2328 = vpow.pop %v2327
        %v2329 = vadd.f32 %v2328, 1.0
        %v2330 = vrcp.pop %v2329
        %v2331 = vmul.f32 1.0, %v2330
        %v2332 = vadd.f32 %v2158, %v2280
        %v2333 = vadd.f32 %v2332, %v1755
        %v2334 = vsub.f32 0.0, %v2333
        %v2335 = vmul.f32 %v2334, 1.442695
        %v2336 = vpow.pop %v2335
        %v2337 = vadd.f32 %v2336, 1.0
        %v2338 = vrcp.pop %v2337
        %v2339 = vmul.f32 1.0, %v2338
        %v2340 = vadd.f32 %v2319, %v1768
        %v2341 = vmul.f32 %v2331, %v2340
        %v2342 = vadd.f32 %v2237, %v2341
        %v2343 = vtanh.pop %v2342
        %v2344 = vsub.f32 1.0, %v2339
        %v2345 = vmul.f32 %v2344, %v2343
        %v2346 = vmul.f32 %v2339, %v2062
        %v2347 = vadd.f32 %v2345, %v2346
        %s2348 = scalar_lea.vmem %s575, 48 [#allocation2]
        %v2349 = vld [vmem:[%s2348] sm:$0xff]
        %v2350 = vld [vmem:[%s2348 + $0x8] sm:$0xff]
        %v2353 = vunpack.c.l.b16 %v2349
        %v2354 = vunpack.c.h.b16 %v2349
        %v2355 = vunpack.c.l.b16 %v2350
        %v2356 = vunpack.c.h.b16 %v2350
        %v2357 = vpack.c.b16 %v2353, %v2353
        %v2358 = vpack.c.b16 %v2354, %v2354
        %v2359 = vpack.c.b16 %v2355, %v2355
        %v2360 = vpack.c.b16 %v2356, %v2356
        %2365 = vmatprep.subr.bf16.mxu0 %v1174
        %2366 = vmatpush1.bf16.msra.mxu0 %v1173
        %2367 = vmatprep.subr.bf16.mxu0 %v1177
        %2368 = vmatpush1.bf16.msra.mxu0 %v1176
        %2369 = vmatprep.subr.bf16.mxu0 %v1180
        %2370 = vmatpush1.bf16.msra.mxu0 %v1179
        %2371 = vmatprep.subr.bf16.mxu0 %v1183
        %2372 = vmatpush1.bf16.msra.mxu0 %v1182
        %2373 = vmatprep.subr.bf16.mxu0 %v1186
        %2374 = vmatpush1.bf16.msra.mxu0 %v1185
        %2375 = vmatprep.subr.bf16.mxu0 %v1189
        %2376 = vmatpush1.bf16.msra.mxu0 %v1188
        %2377 = vmatprep.subr.bf16.mxu0 %v1192
        %2378 = vmatpush1.bf16.msra.mxu0 %v1191
        %2379 = vmatprep.subr.bf16.mxu0 %v1195
        %2380 = vmatpush1.bf16.msra.mxu0 %v1194
        %2381 = vmatprep.subr.bf16.mxu0 %v1198
        %2382 = vmatpush1.bf16.msra.mxu0 %v1197
        %2383 = vmatprep.subr.bf16.mxu0 %v1201
        %2384 = vmatpush1.bf16.msra.mxu0 %v1200
        %2385 = vmatprep.subr.bf16.mxu0 %v1204
        %2386 = vmatpush1.bf16.msra.mxu0 %v1203
        %2387 = vmatprep.subr.bf16.mxu0 %v1207
        %2388 = vmatpush1.bf16.msra.mxu0 %v1206
        %2389 = vmatprep.subr.bf16.mxu0 %v1210
        %2390 = vmatpush1.bf16.msra.mxu0 %v1209
        %2391 = vmatprep.subr.bf16.mxu0 %v1213
        %2392 = vmatpush1.bf16.msra.mxu0 %v1212
        %2393 = vmatprep.subr.bf16.mxu0 %v1216
        %2394 = vmatpush1.bf16.msra.mxu0 %v1215
        %2395 = vmatprep.subr.bf16.mxu0 %v1219
        %2396 = vmatpush1.bf16.msra.mxu0 %v1218
        %2397 = vmatprep.mubr.bf16.mxu0 %v2358
        %2398 = vmatmul.mubr.bf16.gmra.mrb[0].mxu0 %v2357
        %v2399 = vpop.f32.mrb[0].mxu0
        %v2400 = vadd.f32 %v827, %v2399
        %v2401 = vpop.f32.mrb[0].mxu0
        %v2402 = vadd.f32 %v831, %v2401
        %v2403 = vpop.f32.mrb[0].mxu0
        %v2404 = vpop.f32.mrb[0].mxu0
        %2405 = vdwg.mxu0
        %2406 = vmatprep.subr.bf16.mxu0 %v1222
        %2407 = vmatpush1.bf16.msra.mxu0 %v1221
        %2408 = vmatprep.subr.bf16.mxu0 %v1225
        %2409 = vmatpush1.bf16.msra.mxu0 %v1224
        %2410 = vmatprep.subr.bf16.mxu0 %v1228
        %2411 = vmatpush1.bf16.msra.mxu0 %v1227
        %2412 = vmatprep.subr.bf16.mxu0 %v1231
        %2413 = vmatpush1.bf16.msra.mxu0 %v1230
        %2414 = vmatprep.subr.bf16.mxu0 %v1234
        %2415 = vmatpush1.bf16.msra.mxu0 %v1233
        %2416 = vmatprep.subr.bf16.mxu0 %v1237
        %2417 = vmatpush1.bf16.msra.mxu0 %v1236
        %2418 = vmatprep.subr.bf16.mxu0 %v1240
        %2419 = vmatpush1.bf16.msra.mxu0 %v1239
        %2420 = vmatprep.subr.bf16.mxu0 %v1243
        %2421 = vmatpush1.bf16.msra.mxu0 %v1242
        %2422 = vmatprep.subr.bf16.mxu0 %v1246
        %2423 = vmatpush1.bf16.msra.mxu0 %v1245
        %2424 = vmatprep.subr.bf16.mxu0 %v1249
        %2425 = vmatpush1.bf16.msra.mxu0 %v1248
        %2426 = vmatprep.subr.bf16.mxu0 %v1252
        %2427 = vmatpush1.bf16.msra.mxu0 %v1251
        %2428 = vmatprep.subr.bf16.mxu0 %v1255
        %2429 = vmatpush1.bf16.msra.mxu0 %v1254
        %2430 = vmatprep.subr.bf16.mxu0 %v1258
        %2431 = vmatpush1.bf16.msra.mxu0 %v1257
        %2432 = vmatprep.subr.bf16.mxu0 %v1261
        %2433 = vmatpush1.bf16.msra.mxu0 %v1260
        %2434 = vmatprep.subr.bf16.mxu0 %v1264
        %2435 = vmatpush1.bf16.msra.mxu0 %v1263
        %2436 = vmatprep.subr.bf16.mxu0 %v1267
        %2437 = vmatpush1.bf16.msra.mxu0 %v1266
        %2438 = vmatprep.mubr.bf16.mxu0 %v2360
        %2439 = vmatmul.mubr.bf16.gmra.mrb[0].mxu0 %v2359
        %v2440 = vpop.f32.mrb[0].mxu0
        %v2441 = vadd.f32 %v2400, %v2440
        %v2442 = vpop.f32.mrb[0].mxu0
        %v2443 = vadd.f32 %v2402, %v2442
        %v2444 = vpop.f32.mrb[0].mxu0
        %v2445 = vpop.f32.mrb[0].mxu0
        %2446 = vdwg.mxu0
        %2447 = vmatprep.subr.bf16.mxu0 0
        %2448 = vmatpush1.bf16.msra.mxu0 %v1175
        %2449 = vmatprep.subr.bf16.mxu0 0
        %2450 = vmatpush1.bf16.msra.mxu0 %v1178
        %2451 = vmatprep.subr.bf16.mxu0 0
        %2452 = vmatpush1.bf16.msra.mxu0 %v1181
        %2453 = vmatprep.subr.bf16.mxu0 0
        %2454 = vmatpush1.bf16.msra.mxu0 %v1184
        %2455 = vmatprep.subr.bf16.mxu0 0
        %2456 = vmatpush1.bf16.msra.mxu0 %v1187
        %2457 = vmatprep.subr.bf16.mxu0 0
        %2458 = vmatpush1.bf16.msra.mxu0 %v1190
        %2459 = vmatprep.subr.bf16.mxu0 0
        %2460 = vmatpush1.bf16.msra.mxu0 %v1193
        %2461 = vmatprep.subr.bf16.mxu0 0
        %2462 = vmatpush1.bf16.msra.mxu0 %v1196
        %2463 = vmatprep.subr.bf16.mxu0 0
        %2464 = vmatpush1.bf16.msra.mxu0 %v1199
        %2465 = vmatprep.subr.bf16.mxu0 0
        %2466 = vmatpush1.bf16.msra.mxu0 %v1202
        %2467 = vmatprep.subr.bf16.mxu0 0
        %2468 = vmatpush1.bf16.msra.mxu0 %v1205
        %2469 = vmatprep.subr.bf16.mxu0 0
        %2470 = vmatpush1.bf16.msra.mxu0 %v1208
        %2471 = vmatprep.subr.bf16.mxu0 0
        %2472 = vmatpush1.bf16.msra.mxu0 %v1211
        %2473 = vmatprep.subr.bf16.mxu0 0
        %2474 = vmatpush1.bf16.msra.mxu0 %v1214
        %2475 = vmatprep.subr.bf16.mxu0 0
        %2476 = vmatpush1.bf16.msra.mxu0 %v1217
        %2477 = vmatprep.subr.bf16.mxu0 0
        %2478 = vmatpush1.bf16.msra.mxu0 %v1220
        %2479 = vmatprep.mubr.bf16.mxu0 %v2358
        %2480 = vmatmul.mubr.bf16.gmra.mrb[0].mxu0 %v2357
        %v2481 = vpop.f32.mrb[0].mxu0
        %v2482 = vadd.f32 %v835, %v2481
        %v2483 = vpop.f32.mrb[0].mxu0
        %v2484 = vpop.f32.mrb[0].mxu0
        %v2485 = vpop.f32.mrb[0].mxu0
        %2486 = vdwg.mxu0
        %2487 = vmatprep.subr.bf16.mxu0 0
        %2488 = vmatpush1.bf16.msra.mxu0 %v1223
        %2489 = vmatprep.subr.bf16.mxu0 0
        %2490 = vmatpush1.bf16.msra.mxu0 %v1226
        %2491 = vmatprep.subr.bf16.mxu0 0
        %2492 = vmatpush1.bf16.msra.mxu0 %v1229
        %2493 = vmatprep.subr.bf16.mxu0 0
        %2494 = vmatpush1.bf16.msra.mxu0 %v1232
        %2495 = vmatprep.subr.bf16.mxu0 0
        %2496 = vmatpush1.bf16.msra.mxu0 %v1235
        %2497 = vmatprep.subr.bf16.mxu0 0
        %2498 = vmatpush1.bf16.msra.mxu0 %v1238
        %2499 = vmatprep.subr.bf16.mxu0 0
        %2500 = vmatpush1.bf16.msra.mxu0 %v1241
        %2501 = vmatprep.subr.bf16.mxu0 0
        %2502 = vmatpush1.bf16.msra.mxu0 %v1244
        %2503 = vmatprep.subr.bf16.mxu0 0
        %2504 = vmatpush1.bf16.msra.mxu0 %v1247
        %2505 = vmatprep.subr.bf16.mxu0 0
        %2506 = vmatpush1.bf16.msra.mxu0 %v1250
        %2507 = vmatprep.subr.bf16.mxu0 0
        %2508 = vmatpush1.bf16.msra.mxu0 %v1253
        %2509 = vmatprep.subr.bf16.mxu0 0
        %2510 = vmatpush1.bf16.msra.mxu0 %v1256
        %2511 = vmatprep.subr.bf16.mxu0 0
        %2512 = vmatpush1.bf16.msra.mxu0 %v1259
        %2513 = vmatprep.subr.bf16.mxu0 0
        %2514 = vmatpush1.bf16.msra.mxu0 %v1262
        %2515 = vmatprep.subr.bf16.mxu0 0
        %2516 = vmatpush1.bf16.msra.mxu0 %v1265
        %2517 = vmatprep.subr.bf16.mxu0 0
        %2518 = vmatpush1.bf16.msra.mxu0 %v1268
        %2519 = vmatprep.mubr.bf16.mxu0 %v2360
        %2520 = vmatmul.mubr.bf16.gmra.mrb[0].mxu0 %v2359
        %v2521 = vpop.f32.mrb[0].mxu0
        %v2522 = vadd.f32 %v2482, %v2521
        %v2523 = vpop.f32.mrb[0].mxu0
        %v2524 = vpop.f32.mrb[0].mxu0
        %v2525 = vpop.f32.mrb[0].mxu0
        %2526 = vdwg.mxu0
        %v2527 = vpack.c.bf16 %v2347, %v2347
        %2528 = vmatprep.subr.bf16.mxu0 %v1608
        %2529 = vmatpush1.bf16.msra.mxu0 %v1607
        %2530 = vmatprep.subr.bf16.mxu0 %v1611
        %2531 = vmatpush1.bf16.msra.mxu0 %v1610
        %2532 = vmatprep.subr.bf16.mxu0 %v1614
        %2533 = vmatpush1.bf16.msra.mxu0 %v1613
        %2534 = vmatprep.subr.bf16.mxu0 %v1617
        %2535 = vmatpush1.bf16.msra.mxu0 %v1616
        %2536 = vmatprep.subr.bf16.mxu0 %v1620
        %2537 = vmatpush1.bf16.msra.mxu0 %v1619
        %2538 = vmatprep.subr.bf16.mxu0 %v1623
        %2539 = vmatpush1.bf16.msra.mxu0 %v1622
        %2540 = vmatprep.subr.bf16.mxu0 %v1626
        %2541 = vmatpush1.bf16.msra.mxu0 %v1625
        %2542 = vmatprep.subr.bf16.mxu0 %v1629
        %2543 = vmatpush1.bf16.msra.mxu0 %v1628
        %2544 = vmatprep.subr.bf16.mxu0 0
        %2545 = vmatpush1.bf16.msra.mxu0 0
        %2546 = vmatprep.subr.bf16.mxu0 0
        %2547 = vmatpush1.bf16.msra.mxu0 0
        %2548 = vmatprep.subr.bf16.mxu0 0
        %2549 = vmatpush1.bf16.msra.mxu0 0
        %2550 = vmatprep.subr.bf16.mxu0 0
        %2551 = vmatpush1.bf16.msra.mxu0 0
        %2552 = vmatprep.subr.bf16.mxu0 0
        %2553 = vmatpush1.bf16.msra.mxu0 0
        %2554 = vmatprep.subr.bf16.mxu0 0
        %2555 = vmatpush1.bf16.msra.mxu0 0
        %2556 = vmatprep.subr.bf16.mxu0 0
        %2557 = vmatpush1.bf16.msra.mxu0 0
        %2558 = vmatprep.subr.bf16.mxu0 0
        %2559 = vmatpush1.bf16.msra.mxu0 0
        %2560 = vmatprep.mubr.bf16.mxu0 0
        %2561 = vmatmul.mubr.bf16.gmra.mrb[0].mxu0 %v2527
        %v2562 = vpop.f32.mrb[0].mxu0
        %v2563 = vadd.f32 0.0, %v2562
        %v2564 = vpop.f32.mrb[0].mxu0
        %v2565 = vadd.f32 0.0, %v2564
        %v2566 = vpop.f32.mrb[0].mxu0
        %v2567 = vpop.f32.mrb[0].mxu0
        %2568 = vdwg.mxu0
        %2569 = vmatprep.subr.bf16.mxu0 0
        %2570 = vmatpush1.bf16.msra.mxu0 %v1609
        %2571 = vmatprep.subr.bf16.mxu0 0
        %2572 = vmatpush1.bf16.msra.mxu0 %v1612
        %2573 = vmatprep.subr.bf16.mxu0 0
        %2574 = vmatpush1.bf16.msra.mxu0 %v1615
        %2575 = vmatprep.subr.bf16.mxu0 0
        %2576 = vmatpush1.bf16.msra.mxu0 %v1618
        %2577 = vmatprep.subr.bf16.mxu0 0
        %2578 = vmatpush1.bf16.msra.mxu0 %v1621
        %2579 = vmatprep.subr.bf16.mxu0 0
        %2580 = vmatpush1.bf16.msra.mxu0 %v1624
        %2581 = vmatprep.subr.bf16.mxu0 0
        %2582 = vmatpush1.bf16.msra.mxu0 %v1627
        %2583 = vmatprep.subr.bf16.mxu0 0
        %2584 = vmatpush1.bf16.msra.mxu0 %v1630
        %2585 = vmatprep.subr.bf16.mxu0 0
        %2586 = vmatpush1.bf16.msra.mxu0 0
        %2587 = vmatprep.subr.bf16.mxu0 0
        %2588 = vmatpush1.bf16.msra.mxu0 0
        %2589 = vmatprep.subr.bf16.mxu0 0
        %2590 = vmatpush1.bf16.msra.mxu0 0
        %2591 = vmatprep.subr.bf16.mxu0 0
        %2592 = vmatpush1.bf16.msra.mxu0 0
        %2593 = vmatprep.subr.bf16.mxu0 0
        %2594 = vmatpush1.bf16.msra.mxu0 0
        %2595 = vmatprep.subr.bf16.mxu0 0
        %2596 = vmatpush1.bf16.msra.mxu0 0
        %2597 = vmatprep.subr.bf16.mxu0 0
        %2598 = vmatpush1.bf16.msra.mxu0 0
        %2599 = vmatprep.subr.bf16.mxu0 0
        %2600 = vmatpush1.bf16.msra.mxu0 0
        %2601 = vmatprep.mubr.bf16.mxu0 0
        %2602 = vmatmul.mubr.bf16.gmra.mrb[0].mxu0 %v2527
        %v2603 = vpop.f32.mrb[0].mxu0
        %v2604 = vadd.f32 0.0, %v2603
        %v2605 = vpop.f32.mrb[0].mxu0
        %v2606 = vpop.f32.mrb[0].mxu0
        %v2607 = vpop.f32.mrb[0].mxu0
        %2608 = vdwg.mxu0
        %v2609 = vadd.f32 %v2441, %v2563
        %v2610 = vadd.f32 %v2609, %v1741
        %v2611 = vsub.f32 0.0, %v2610
        %v2612 = vmul.f32 %v2611, 1.442695
        %v2613 = vpow.pop %v2612
        %v2614 = vadd.f32 %v2613, 1.0
        %v2615 = vrcp.pop %v2614
        %v2616 = vmul.f32 1.0, %v2615
        %v2617 = vadd.f32 %v2443, %v2565
        %v2618 = vadd.f32 %v2617, %v1755
        %v2619 = vsub.f32 0.0, %v2618
        %v2620 = vmul.f32 %v2619, 1.442695
        %v2621 = vpow.pop %v2620
        %v2622 = vadd.f32 %v2621, 1.0
        %v2623 = vrcp.pop %v2622
        %v2624 = vmul.f32 1.0, %v2623
        %v2625 = vadd.f32 %v2604, %v1768
        %v2626 = vmul.f32 %v2616, %v2625
        %v2627 = vadd.f32 %v2522, %v2626
        %v2628 = vtanh.pop %v2627
        %v2629 = vsub.f32 1.0, %v2624
        %v2630 = vmul.f32 %v2629, %v2628
        %v2631 = vmul.f32 %v2624, %v2347
        %v2632 = vadd.f32 %v2630, %v2631
        %s2633 = scalar_lea.vmem %s575, 64 [#allocation2]
        %v2634 = vld [vmem:[%s2633] sm:$0xff]
        %v2635 = vld [vmem:[%s2633 + $0x8] sm:$0xff]
        %v2638 = vunpack.c.l.b16 %v2634
        %v2639 = vunpack.c.h.b16 %v2634
        %v2640 = vunpack.c.l.b16 %v2635
        %v2641 = vunpack.c.h.b16 %v2635
        %v2642 = vpack.c.b16 %v2638, %v2638
        %v2643 = vpack.c.b16 %v2639, %v2639
        %v2644 = vpack.c.b16 %v2640, %v2640
        %v2645 = vpack.c.b16 %v2641, %v2641
        %2650 = vmatprep.subr.bf16.mxu0 %v1174
        %2651 = vmatpush1.bf16.msra.mxu0 %v1173
        %2652 = vmatprep.subr.bf16.mxu0 %v1177
        %2653 = vmatpush1.bf16.msra.mxu0 %v1176
        %2654 = vmatprep.subr.bf16.mxu0 %v1180
        %2655 = vmatpush1.bf16.msra.mxu0 %v1179
        %2656 = vmatprep.subr.bf16.mxu0 %v1183
        %2657 = vmatpush1.bf16.msra.mxu0 %v1182
        %2658 = vmatprep.subr.bf16.mxu0 %v1186
        %2659 = vmatpush1.bf16.msra.mxu0 %v1185
        %2660 = vmatprep.subr.bf16.mxu0 %v1189
        %2661 = vmatpush1.bf16.msra.mxu0 %v1188
        %2662 = vmatprep.subr.bf16.mxu0 %v1192
        %2663 = vmatpush1.bf16.msra.mxu0 %v1191
        %2664 = vmatprep.subr.bf16.mxu0 %v1195
        %2665 = vmatpush1.bf16.msra.mxu0 %v1194
        %2666 = vmatprep.subr.bf16.mxu0 %v1198
        %2667 = vmatpush1.bf16.msra.mxu0 %v1197
        %2668 = vmatprep.subr.bf16.mxu0 %v1201
        %2669 = vmatpush1.bf16.msra.mxu0 %v1200
        %2670 = vmatprep.subr.bf16.mxu0 %v1204
        %2671 = vmatpush1.bf16.msra.mxu0 %v1203
        %2672 = vmatprep.subr.bf16.mxu0 %v1207
        %2673 = vmatpush1.bf16.msra.mxu0 %v1206
        %2674 = vmatprep.subr.bf16.mxu0 %v1210
        %2675 = vmatpush1.bf16.msra.mxu0 %v1209
        %2676 = vmatprep.subr.bf16.mxu0 %v1213
        %2677 = vmatpush1.bf16.msra.mxu0 %v1212
        %2678 = vmatprep.subr.bf16.mxu0 %v1216
        %2679 = vmatpush1.bf16.msra.mxu0 %v1215
        %2680 = vmatprep.subr.bf16.mxu0 %v1219
        %2681 = vmatpush1.bf16.msra.mxu0 %v1218
        %2682 = vmatprep.mubr.bf16.mxu0 %v2643
        %2683 = vmatmul.mubr.bf16.gmra.mrb[0].mxu0 %v2642
        %v2684 = vpop.f32.mrb[0].mxu0
        %v2685 = vadd.f32 %v827, %v2684
        %v2686 = vpop.f32.mrb[0].mxu0
        %v2687 = vadd.f32 %v831, %v2686
        %v2688 = vpop.f32.mrb[0].mxu0
        %v2689 = vpop.f32.mrb[0].mxu0
        %2690 = vdwg.mxu0
        %2691 = vmatprep.subr.bf16.mxu0 %v1222
        %2692 = vmatpush1.bf16.msra.mxu0 %v1221
        %2693 = vmatprep.subr.bf16.mxu0 %v1225
        %2694 = vmatpush1.bf16.msra.mxu0 %v1224
        %2695 = vmatprep.subr.bf16.mxu0 %v1228
        %2696 = vmatpush1.bf16.msra.mxu0 %v1227
        %2697 = vmatprep.subr.bf16.mxu0 %v1231
        %2698 = vmatpush1.bf16.msra.mxu0 %v1230
        %2699 = vmatprep.subr.bf16.mxu0 %v1234
        %2700 = vmatpush1.bf16.msra.mxu0 %v1233
        %2701 = vmatprep.subr.bf16.mxu0 %v1237
        %2702 = vmatpush1.bf16.msra.mxu0 %v1236
        %2703 = vmatprep.subr.bf16.mxu0 %v1240
        %2704 = vmatpush1.bf16.msra.mxu0 %v1239
        %2705 = vmatprep.subr.bf16.mxu0 %v1243
        %2706 = vmatpush1.bf16.msra.mxu0 %v1242
        %2707 = vmatprep.subr.bf16.mxu0 %v1246
        %2708 = vmatpush1.bf16.msra.mxu0 %v1245
        %2709 = vmatprep.subr.bf16.mxu0 %v1249
        %2710 = vmatpush1.bf16.msra.mxu0 %v1248
        %2711 = vmatprep.subr.bf16.mxu0 %v1252
        %2712 = vmatpush1.bf16.msra.mxu0 %v1251
        %2713 = vmatprep.subr.bf16.mxu0 %v1255
        %2714 = vmatpush1.bf16.msra.mxu0 %v1254
        %2715 = vmatprep.subr.bf16.mxu0 %v1258
        %2716 = vmatpush1.bf16.msra.mxu0 %v1257
        %2717 = vmatprep.subr.bf16.mxu0 %v1261
        %2718 = vmatpush1.bf16.msra.mxu0 %v1260
        %2719 = vmatprep.subr.bf16.mxu0 %v1264
        %2720 = vmatpush1.bf16.msra.mxu0 %v1263
        %2721 = vmatprep.subr.bf16.mxu0 %v1267
        %2722 = vmatpush1.bf16.msra.mxu0 %v1266
        %2723 = vmatprep.mubr.bf16.mxu0 %v2645
        %2724 = vmatmul.mubr.bf16.gmra.mrb[0].mxu0 %v2644
        %v2725 = vpop.f32.mrb[0].mxu0
        %v2726 = vadd.f32 %v2685, %v2725
        %v2727 = vpop.f32.mrb[0].mxu0
        %v2728 = vadd.f32 %v2687, %v2727
        %v2729 = vpop.f32.mrb[0].mxu0
        %v2730 = vpop.f32.mrb[0].mxu0
        %2731 = vdwg.mxu0
        %2732 = vmatprep.subr.bf16.mxu0 0
        %2733 = vmatpush1.bf16.msra.mxu0 %v1175
        %2734 = vmatprep.subr.bf16.mxu0 0
        %2735 = vmatpush1.bf16.msra.mxu0 %v1178
        %2736 = vmatprep.subr.bf16.mxu0 0
        %2737 = vmatpush1.bf16.msra.mxu0 %v1181
        %2738 = vmatprep.subr.bf16.mxu0 0
        %2739 = vmatpush1.bf16.msra.mxu0 %v1184
        %2740 = vmatprep.subr.bf16.mxu0 0
        %2741 = vmatpush1.bf16.msra.mxu0 %v1187
        %2742 = vmatprep.subr.bf16.mxu0 0
        %2743 = vmatpush1.bf16.msra.mxu0 %v1190
        %2744 = vmatprep.subr.bf16.mxu0 0
        %2745 = vmatpush1.bf16.msra.mxu0 %v1193
        %2746 = vmatprep.subr.bf16.mxu0 0
        %2747 = vmatpush1.bf16.msra.mxu0 %v1196
        %2748 = vmatprep.subr.bf16.mxu0 0
        %2749 = vmatpush1.bf16.msra.mxu0 %v1199
        %2750 = vmatprep.subr.bf16.mxu0 0
        %2751 = vmatpush1.bf16.msra.mxu0 %v1202
        %2752 = vmatprep.subr.bf16.mxu0 0
        %2753 = vmatpush1.bf16.msra.mxu0 %v1205
        %2754 = vmatprep.subr.bf16.mxu0 0
        %2755 = vmatpush1.bf16.msra.mxu0 %v1208
        %2756 = vmatprep.subr.bf16.mxu0 0
        %2757 = vmatpush1.bf16.msra.mxu0 %v1211
        %2758 = vmatprep.subr.bf16.mxu0 0
        %2759 = vmatpush1.bf16.msra.mxu0 %v1214
        %2760 = vmatprep.subr.bf16.mxu0 0
        %2761 = vmatpush1.bf16.msra.mxu0 %v1217
        %2762 = vmatprep.subr.bf16.mxu0 0
        %2763 = vmatpush1.bf16.msra.mxu0 %v1220
        %2764 = vmatprep.mubr.bf16.mxu0 %v2643
        %2765 = vmatmul.mubr.bf16.gmra.mrb[0].mxu0 %v2642
        %v2766 = vpop.f32.mrb[0].mxu0
        %v2767 = vadd.f32 %v835, %v2766
        %v2768 = vpop.f32.mrb[0].mxu0
        %v2769 = vpop.f32.mrb[0].mxu0
        %v2770 = vpop.f32.mrb[0].mxu0
        %2771 = vdwg.mxu0
        %2772 = vmatprep.subr.bf16.mxu0 0
        %2773 = vmatpush1.bf16.msra.mxu0 %v1223
        %2774 = vmatprep.subr.bf16.mxu0 0
        %2775 = vmatpush1.bf16.msra.mxu0 %v1226
        %2776 = vmatprep.subr.bf16.mxu0 0
        %2777 = vmatpush1.bf16.msra.mxu0 %v1229
        %2778 = vmatprep.subr.bf16.mxu0 0
        %2779 = vmatpush1.bf16.msra.mxu0 %v1232
        %2780 = vmatprep.subr.bf16.mxu0 0
        %2781 = vmatpush1.bf16.msra.mxu0 %v1235
        %2782 = vmatprep.subr.bf16.mxu0 0
        %2783 = vmatpush1.bf16.msra.mxu0 %v1238
        %2784 = vmatprep.subr.bf16.mxu0 0
        %2785 = vmatpush1.bf16.msra.mxu0 %v1241
        %2786 = vmatprep.subr.bf16.mxu0 0
        %2787 = vmatpush1.bf16.msra.mxu0 %v1244
        %2788 = vmatprep.subr.bf16.mxu0 0
        %2789 = vmatpush1.bf16.msra.mxu0 %v1247
        %2790 = vmatprep.subr.bf16.mxu0 0
        %2791 = vmatpush1.bf16.msra.mxu0 %v1250
        %2792 = vmatprep.subr.bf16.mxu0 0
        %2793 = vmatpush1.bf16.msra.mxu0 %v1253
        %2794 = vmatprep.subr.bf16.mxu0 0
        %2795 = vmatpush1.bf16.msra.mxu0 %v1256
        %2796 = vmatprep.subr.bf16.mxu0 0
        %2797 = vmatpush1.bf16.msra.mxu0 %v1259
        %2798 = vmatprep.subr.bf16.mxu0 0
        %2799 = vmatpush1.bf16.msra.mxu0 %v1262
        %2800 = vmatprep.subr.bf16.mxu0 0
        %2801 = vmatpush1.bf16.msra.mxu0 %v1265
        %2802 = vmatprep.subr.bf16.mxu0 0
        %2803 = vmatpush1.bf16.msra.mxu0 %v1268
        %2804 = vmatprep.mubr.bf16.mxu0 %v2645
        %2805 = vmatmul.mubr.bf16.gmra.mrb[0].mxu0 %v2644
        %v2806 = vpop.f32.mrb[0].mxu0
        %v2807 = vadd.f32 %v2767, %v2806
        %v2808 = vpop.f32.mrb[0].mxu0
        %v2809 = vpop.f32.mrb[0].mxu0
        %v2810 = vpop.f32.mrb[0].mxu0
        %2811 = vdwg.mxu0
        %v2812 = vpack.c.bf16 %v2632, %v2632
        %2813 = vmatprep.subr.bf16.mxu0 %v1608
        %2814 = vmatpush1.bf16.msra.mxu0 %v1607
        %2815 = vmatprep.subr.bf16.mxu0 %v1611
        %2816 = vmatpush1.bf16.msra.mxu0 %v1610
        %2817 = vmatprep.subr.bf16.mxu0 %v1614
        %2818 = vmatpush1.bf16.msra.mxu0 %v1613
        %2819 = vmatprep.subr.bf16.mxu0 %v1617
        %2820 = vmatpush1.bf16.msra.mxu0 %v1616
        %2821 = vmatprep.subr.bf16.mxu0 %v1620
        %2822 = vmatpush1.bf16.msra.mxu0 %v1619
        %2823 = vmatprep.subr.bf16.mxu0 %v1623
        %2824 = vmatpush1.bf16.msra.mxu0 %v1622
        %2825 = vmatprep.subr.bf16.mxu0 %v1626
        %2826 = vmatpush1.bf16.msra.mxu0 %v1625
        %2827 = vmatprep.subr.bf16.mxu0 %v1629
        %2828 = vmatpush1.bf16.msra.mxu0 %v1628
        %2829 = vmatprep.subr.bf16.mxu0 0
        %2830 = vmatpush1.bf16.msra.mxu0 0
        %2831 = vmatprep.subr.bf16.mxu0 0
        %2832 = vmatpush1.bf16.msra.mxu0 0
        %2833 = vmatprep.subr.bf16.mxu0 0
        %2834 = vmatpush1.bf16.msra.mxu0 0
        %2835 = vmatprep.subr.bf16.mxu0 0
        %2836 = vmatpush1.bf16.msra.mxu0 0
        %2837 = vmatprep.subr.bf16.mxu0 0
        %2838 = vmatpush1.bf16.msra.mxu0 0
        %2839 = vmatprep.subr.bf16.mxu0 0
        %2840 = vmatpush1.bf16.msra.mxu0 0
        %2841 = vmatprep.subr.bf16.mxu0 0
        %2842 = vmatpush1.bf16.msra.mxu0 0
        %2843 = vmatprep.subr.bf16.mxu0 0
        %2844 = vmatpush1.bf16.msra.mxu0 0
        %2845 = vmatprep.mubr.bf16.mxu0 0
        %2846 = vmatmul.mubr.bf16.gmra.mrb[0].mxu0 %v2812
        %v2847 = vpop.f32.mrb[0].mxu0
        %v2848 = vadd.f32 0.0, %v2847
        %v2849 = vpop.f32.mrb[0].mxu0
        %v2850 = vadd.f32 0.0, %v2849
        %v2851 = vpop.f32.mrb[0].mxu0
        %v2852 = vpop.f32.mrb[0].mxu0
        %2853 = vdwg.mxu0
        %2854 = vmatprep.subr.bf16.mxu0 0
        %2855 = vmatpush1.bf16.msra.mxu0 %v1609
        %2856 = vmatprep.subr.bf16.mxu0 0
        %2857 = vmatpush1.bf16.msra.mxu0 %v1612
        %2858 = vmatprep.subr.bf16.mxu0 0
        %2859 = vmatpush1.bf16.msra.mxu0 %v1615
        %2860 = vmatprep.subr.bf16.mxu0 0
        %2861 = vmatpush1.bf16.msra.mxu0 %v1618
        %2862 = vmatprep.subr.bf16.mxu0 0
        %2863 = vmatpush1.bf16.msra.mxu0 %v1621
        %2864 = vmatprep.subr.bf16.mxu0 0
        %2865 = vmatpush1.bf16.msra.mxu0 %v1624
        %2866 = vmatprep.subr.bf16.mxu0 0
        %2867 = vmatpush1.bf16.msra.mxu0 %v1627
        %2868 = vmatprep.subr.bf16.mxu0 0
        %2869 = vmatpush1.bf16.msra.mxu0 %v1630
        %2870 = vmatprep.subr.bf16.mxu0 0
        %2871 = vmatpush1.bf16.msra.mxu0 0
        %2872 = vmatprep.subr.bf16.mxu0 0
        %2873 = vmatpush1.bf16.msra.mxu0 0
        %2874 = vmatprep.subr.bf16.mxu0 0
        %2875 = vmatpush1.bf16.msra.mxu0 0
        %2876 = vmatprep.subr.bf16.mxu0 0
        %2877 = vmatpush1.bf16.msra.mxu0 0
        %2878 = vmatprep.subr.bf16.mxu0 0
        %2879 = vmatpush1.bf16.msra.mxu0 0
        %2880 = vmatprep.subr.bf16.mxu0 0
        %2881 = vmatpush1.bf16.msra.mxu0 0
        %2882 = vmatprep.subr.bf16.mxu0 0
        %2883 = vmatpush1.bf16.msra.mxu0 0
        %2884 = vmatprep.subr.bf16.mxu0 0
        %2885 = vmatpush1.bf16.msra.mxu0 0
        %2886 = vmatprep.mubr.bf16.mxu0 0
        %2887 = vmatmul.mubr.bf16.gmra.mrb[0].mxu0 %v2812
        %v2888 = vpop.f32.mrb[0].mxu0
        %v2889 = vadd.f32 0.0, %v2888
        %v2890 = vpop.f32.mrb[0].mxu0
        %v2891 = vpop.f32.mrb[0].mxu0
        %v2892 = vpop.f32.mrb[0].mxu0
        %2893 = vdwg.mxu0
        %v2894 = vadd.f32 %v2726, %v2848
        %v2895 = vadd.f32 %v2894, %v1741
        %v2896 = vsub.f32 0.0, %v2895
        %v2897 = vmul.f32 %v2896, 1.442695
        %v2898 = vpow.pop %v2897
        %v2899 = vadd.f32 %v2898, 1.0
        %v2900 = vrcp.pop %v2899
        %v2901 = vmul.f32 1.0, %v2900
        %v2902 = vadd.f32 %v2728, %v2850
        %v2903 = vadd.f32 %v2902, %v1755
        %v2904 = vsub.f32 0.0, %v2903
        %v2905 = vmul.f32 %v2904, 1.442695
        %v2906 = vpow.pop %v2905
        %v2907 = vadd.f32 %v2906, 1.0
        %v2908 = vrcp.pop %v2907
        %v2909 = vmul.f32 1.0, %v2908
        %v2910 = vadd.f32 %v2889, %v1768
        %v2911 = vmul.f32 %v2901, %v2910
        %v2912 = vadd.f32 %v2807, %v2911
        %v2913 = vtanh.pop %v2912
        %v2914 = vsub.f32 1.0, %v2909
        %v2915 = vmul.f32 %v2914, %v2913
        %v2916 = vmul.f32 %v2909, %v2632
        %v2917 = vadd.f32 %v2915, %v2916
        %s2918 = scalar_lea.vmem %s575, 80 [#allocation2]
        %v2919 = vld [vmem:[%s2918] sm:$0xff]
        %v2920 = vld [vmem:[%s2918 + $0x8] sm:$0xff]
        %v2923 = vunpack.c.l.b16 %v2919
        %v2924 = vunpack.c.h.b16 %v2919
        %v2925 = vunpack.c.l.b16 %v2920
        %v2926 = vunpack.c.h.b16 %v2920
        %v2927 = vpack.c.b16 %v2923, %v2923
        %v2928 = vpack.c.b16 %v2924, %v2924
        %v2929 = vpack.c.b16 %v2925, %v2925
        %v2930 = vpack.c.b16 %v2926, %v2926
        %2935 = vmatprep.subr.bf16.mxu0 %v1174
        %2936 = vmatpush1.bf16.msra.mxu0 %v1173
        %2937 = vmatprep.subr.bf16.mxu0 %v1177
        %2938 = vmatpush1.bf16.msra.mxu0 %v1176
        %2939 = vmatprep.subr.bf16.mxu0 %v1180
        %2940 = vmatpush1.bf16.msra.mxu0 %v1179
        %2941 = vmatprep.subr.bf16.mxu0 %v1183
        %2942 = vmatpush1.bf16.msra.mxu0 %v1182
        %2943 = vmatprep.subr.bf16.mxu0 %v1186
        %2944 = vmatpush1.bf16.msra.mxu0 %v1185
        %2945 = vmatprep.subr.bf16.mxu0 %v1189
        %2946 = vmatpush1.bf16.msra.mxu0 %v1188
        %2947 = vmatprep.subr.bf16.mxu0 %v1192
        %2948 = vmatpush1.bf16.msra.mxu0 %v1191
        %2949 = vmatprep.subr.bf16.mxu0 %v1195
        %2950 = vmatpush1.bf16.msra.mxu0 %v1194
        %2951 = vmatprep.subr.bf16.mxu0 %v1198
        %2952 = vmatpush1.bf16.msra.mxu0 %v1197
        %2953 = vmatprep.subr.bf16.mxu0 %v1201
        %2954 = vmatpush1.bf16.msra.mxu0 %v1200
        %2955 = vmatprep.subr.bf16.mxu0 %v1204
        %2956 = vmatpush1.bf16.msra.mxu0 %v1203
        %2957 = vmatprep.subr.bf16.mxu0 %v1207
        %2958 = vmatpush1.bf16.msra.mxu0 %v1206
        %2959 = vmatprep.subr.bf16.mxu0 %v1210
        %2960 = vmatpush1.bf16.msra.mxu0 %v1209
        %2961 = vmatprep.subr.bf16.mxu0 %v1213
        %2962 = vmatpush1.bf16.msra.mxu0 %v1212
        %2963 = vmatprep.subr.bf16.mxu0 %v1216
        %2964 = vmatpush1.bf16.msra.mxu0 %v1215
        %2965 = vmatprep.subr.bf16.mxu0 %v1219
        %2966 = vmatpush1.bf16.msra.mxu0 %v1218
        %2967 = vmatprep.mubr.bf16.mxu0 %v2928
        %2968 = vmatmul.mubr.bf16.gmra.mrb[0].mxu0 %v2927
        %v2969 = vpop.f32.mrb[0].mxu0
        %v2970 = vadd.f32 %v827, %v2969
        %v2971 = vpop.f32.mrb[0].mxu0
        %v2972 = vadd.f32 %v831, %v2971
        %v2973 = vpop.f32.mrb[0].mxu0
        %v2974 = vpop.f32.mrb[0].mxu0
        %2975 = vdwg.mxu0
        %2976 = vmatprep.subr.bf16.mxu0 %v1222
        %2977 = vmatpush1.bf16.msra.mxu0 %v1221
        %2978 = vmatprep.subr.bf16.mxu0 %v1225
        %2979 = vmatpush1.bf16.msra.mxu0 %v1224
        %2980 = vmatprep.subr.bf16.mxu0 %v1228
        %2981 = vmatpush1.bf16.msra.mxu0 %v1227
        %2982 = vmatprep.subr.bf16.mxu0 %v1231
        %2983 = vmatpush1.bf16.msra.mxu0 %v1230
        %2984 = vmatprep.subr.bf16.mxu0 %v1234
        %2985 = vmatpush1.bf16.msra.mxu0 %v1233
        %2986 = vmatprep.subr.bf16.mxu0 %v1237
        %2987 = vmatpush1.bf16.msra.mxu0 %v1236
        %2988 = vmatprep.subr.bf16.mxu0 %v1240
        %2989 = vmatpush1.bf16.msra.mxu0 %v1239
        %2990 = vmatprep.subr.bf16.mxu0 %v1243
        %2991 = vmatpush1.bf16.msra.mxu0 %v1242
        %2992 = vmatprep.subr.bf16.mxu0 %v1246
        %2993 = vmatpush1.bf16.msra.mxu0 %v1245
        %2994 = vmatprep.subr.bf16.mxu0 %v1249
        %2995 = vmatpush1.bf16.msra.mxu0 %v1248
        %2996 = vmatprep.subr.bf16.mxu0 %v1252
        %2997 = vmatpush1.bf16.msra.mxu0 %v1251
        %2998 = vmatprep.subr.bf16.mxu0 %v1255
        %2999 = vmatpush1.bf16.msra.mxu0 %v1254
        %3000 = vmatprep.subr.bf16.mxu0 %v1258
        %3001 = vmatpush1.bf16.msra.mxu0 %v1257
        %3002 = vmatprep.subr.bf16.mxu0 %v1261
        %3003 = vmatpush1.bf16.msra.mxu0 %v1260
        %3004 = vmatprep.subr.bf16.mxu0 %v1264
        %3005 = vmatpush1.bf16.msra.mxu0 %v1263
        %3006 = vmatprep.subr.bf16.mxu0 %v1267
        %3007 = vmatpush1.bf16.msra.mxu0 %v1266
        %3008 = vmatprep.mubr.bf16.mxu0 %v2930
        %3009 = vmatmul.mubr.bf16.gmra.mrb[0].mxu0 %v2929
        %v3010 = vpop.f32.mrb[0].mxu0
        %v3011 = vadd.f32 %v2970, %v3010
        %v3012 = vpop.f32.mrb[0].mxu0
        %v3013 = vadd.f32 %v2972, %v3012
        %v3014 = vpop.f32.mrb[0].mxu0
        %v3015 = vpop.f32.mrb[0].mxu0
        %3016 = vdwg.mxu0
        %3017 = vmatprep.subr.bf16.mxu0 0
        %3018 = vmatpush1.bf16.msra.mxu0 %v1175
        %3019 = vmatprep.subr.bf16.mxu0 0
        %3020 = vmatpush1.bf16.msra.mxu0 %v1178
        %3021 = vmatprep.subr.bf16.mxu0 0
        %3022 = vmatpush1.bf16.msra.mxu0 %v1181
        %3023 = vmatprep.subr.bf16.mxu0 0
        %3024 = vmatpush1.bf16.msra.mxu0 %v1184
        %3025 = vmatprep.subr.bf16.mxu0 0
        %3026 = vmatpush1.bf16.msra.mxu0 %v1187
        %3027 = vmatprep.subr.bf16.mxu0 0
        %3028 = vmatpush1.bf16.msra.mxu0 %v1190
        %3029 = vmatprep.subr.bf16.mxu0 0
        %3030 = vmatpush1.bf16.msra.mxu0 %v1193
        %3031 = vmatprep.subr.bf16.mxu0 0
        %3032 = vmatpush1.bf16.msra.mxu0 %v1196
        %3033 = vmatprep.subr.bf16.mxu0 0
        %3034 = vmatpush1.bf16.msra.mxu0 %v1199
        %3035 = vmatprep.subr.bf16.mxu0 0
        %3036 = vmatpush1.bf16.msra.mxu0 %v1202
        %3037 = vmatprep.subr.bf16.mxu0 0
        %3038 = vmatpush1.bf16.msra.mxu0 %v1205
        %3039 = vmatprep.subr.bf16.mxu0 0
        %3040 = vmatpush1.bf16.msra.mxu0 %v1208
        %3041 = vmatprep.subr.bf16.mxu0 0
        %3042 = vmatpush1.bf16.msra.mxu0 %v1211
        %3043 = vmatprep.subr.bf16.mxu0 0
        %3044 = vmatpush1.bf16.msra.mxu0 %v1214
        %3045 = vmatprep.subr.bf16.mxu0 0
        %3046 = vmatpush1.bf16.msra.mxu0 %v1217
        %3047 = vmatprep.subr.bf16.mxu0 0
        %3048 = vmatpush1.bf16.msra.mxu0 %v1220
        %3049 = vmatprep.mubr.bf16.mxu0 %v2928
        %3050 = vmatmul.mubr.bf16.gmra.mrb[0].mxu0 %v2927
        %v3051 = vpop.f32.mrb[0].mxu0
        %v3052 = vadd.f32 %v835, %v3051
        %v3053 = vpop.f32.mrb[0].mxu0
        %v3054 = vpop.f32.mrb[0].mxu0
        %v3055 = vpop.f32.mrb[0].mxu0
        %3056 = vdwg.mxu0
        %3057 = vmatprep.subr.bf16.mxu0 0
        %3058 = vmatpush1.bf16.msra.mxu0 %v1223
        %3059 = vmatprep.subr.bf16.mxu0 0
        %3060 = vmatpush1.bf16.msra.mxu0 %v1226
        %3061 = vmatprep.subr.bf16.mxu0 0
        %3062 = vmatpush1.bf16.msra.mxu0 %v1229
        %3063 = vmatprep.subr.bf16.mxu0 0
        %3064 = vmatpush1.bf16.msra.mxu0 %v1232
        %3065 = vmatprep.subr.bf16.mxu0 0
        %3066 = vmatpush1.bf16.msra.mxu0 %v1235
        %3067 = vmatprep.subr.bf16.mxu0 0
        %3068 = vmatpush1.bf16.msra.mxu0 %v1238
        %3069 = vmatprep.subr.bf16.mxu0 0
        %3070 = vmatpush1.bf16.msra.mxu0 %v1241
        %3071 = vmatprep.subr.bf16.mxu0 0
        %3072 = vmatpush1.bf16.msra.mxu0 %v1244
        %3073 = vmatprep.subr.bf16.mxu0 0
        %3074 = vmatpush1.bf16.msra.mxu0 %v1247
        %3075 = vmatprep.subr.bf16.mxu0 0
        %3076 = vmatpush1.bf16.msra.mxu0 %v1250
        %3077 = vmatprep.subr.bf16.mxu0 0
        %3078 = vmatpush1.bf16.msra.mxu0 %v1253
        %3079 = vmatprep.subr.bf16.mxu0 0
        %3080 = vmatpush1.bf16.msra.mxu0 %v1256
        %3081 = vmatprep.subr.bf16.mxu0 0
        %3082 = vmatpush1.bf16.msra.mxu0 %v1259
        %3083 = vmatprep.subr.bf16.mxu0 0
        %3084 = vmatpush1.bf16.msra.mxu0 %v1262
        %3085 = vmatprep.subr.bf16.mxu0 0
        %3086 = vmatpush1.bf16.msra.mxu0 %v1265
        %3087 = vmatprep.subr.bf16.mxu0 0
        %3088 = vmatpush1.bf16.msra.mxu0 %v1268
        %3089 = vmatprep.mubr.bf16.mxu0 %v2930
        %3090 = vmatmul.mubr.bf16.gmra.mrb[0].mxu0 %v2929
        %v3091 = vpop.f32.mrb[0].mxu0
        %v3092 = vadd.f32 %v3052, %v3091
        %v3093 = vpop.f32.mrb[0].mxu0
        %v3094 = vpop.f32.mrb[0].mxu0
        %v3095 = vpop.f32.mrb[0].mxu0
        %3096 = vdwg.mxu0
        %v3097 = vpack.c.bf16 %v2917, %v2917
        %3098 = vmatprep.subr.bf16.mxu0 %v1608
        %3099 = vmatpush1.bf16.msra.mxu0 %v1607
        %3100 = vmatprep.subr.bf16.mxu0 %v1611
        %3101 = vmatpush1.bf16.msra.mxu0 %v1610
        %3102 = vmatprep.subr.bf16.mxu0 %v1614
        %3103 = vmatpush1.bf16.msra.mxu0 %v1613
        %3104 = vmatprep.subr.bf16.mxu0 %v1617
        %3105 = vmatpush1.bf16.msra.mxu0 %v1616
        %3106 = vmatprep.subr.bf16.mxu0 %v1620
        %3107 = vmatpush1.bf16.msra.mxu0 %v1619
        %3108 = vmatprep.subr.bf16.mxu0 %v1623
        %3109 = vmatpush1.bf16.msra.mxu0 %v1622
        %3110 = vmatprep.subr.bf16.mxu0 %v1626
        %3111 = vmatpush1.bf16.msra.mxu0 %v1625
        %3112 = vmatprep.subr.bf16.mxu0 %v1629
        %3113 = vmatpush1.bf16.msra.mxu0 %v1628
        %3114 = vmatprep.subr.bf16.mxu0 0
        %3115 = vmatpush1.bf16.msra.mxu0 0
        %3116 = vmatprep.subr.bf16.mxu0 0
        %3117 = vmatpush1.bf16.msra.mxu0 0
        %3118 = vmatprep.subr.bf16.mxu0 0
        %3119 = vmatpush1.bf16.msra.mxu0 0
        %3120 = vmatprep.subr.bf16.mxu0 0
        %3121 = vmatpush1.bf16.msra.mxu0 0
        %3122 = vmatprep.subr.bf16.mxu0 0
        %3123 = vmatpush1.bf16.msra.mxu0 0
        %3124 = vmatprep.subr.bf16.mxu0 0
        %3125 = vmatpush1.bf16.msra.mxu0 0
        %3126 = vmatprep.subr.bf16.mxu0 0
        %3127 = vmatpush1.bf16.msra.mxu0 0
        %3128 = vmatprep.subr.bf16.mxu0 0
        %3129 = vmatpush1.bf16.msra.mxu0 0
        %3130 = vmatprep.mubr.bf16.mxu0 0
        %3131 = vmatmul.mubr.bf16.gmra.mrb[0].mxu0 %v3097
        %v3132 = vpop.f32.mrb[0].mxu0
        %v3133 = vadd.f32 0.0, %v3132
        %v3134 = vpop.f32.mrb[0].mxu0
        %v3135 = vadd.f32 0.0, %v3134
        %v3136 = vpop.f32.mrb[0].mxu0
        %v3137 = vpop.f32.mrb[0].mxu0
        %3138 = vdwg.mxu0
        %3139 = vmatprep.subr.bf16.mxu0 0
        %3140 = vmatpush1.bf16.msra.mxu0 %v1609
        %3141 = vmatprep.subr.bf16.mxu0 0
        %3142 = vmatpush1.bf16.msra.mxu0 %v1612
        %3143 = vmatprep.subr.bf16.mxu0 0
        %3144 = vmatpush1.bf16.msra.mxu0 %v1615
        %3145 = vmatprep.subr.bf16.mxu0 0
        %3146 = vmatpush1.bf16.msra.mxu0 %v1618
        %3147 = vmatprep.subr.bf16.mxu0 0
        %3148 = vmatpush1.bf16.msra.mxu0 %v1621
        %3149 = vmatprep.subr.bf16.mxu0 0
        %3150 = vmatpush1.bf16.msra.mxu0 %v1624
        %3151 = vmatprep.subr.bf16.mxu0 0
        %3152 = vmatpush1.bf16.msra.mxu0 %v1627
        %3153 = vmatprep.subr.bf16.mxu0 0
        %3154 = vmatpush1.bf16.msra.mxu0 %v1630
        %3155 = vmatprep.subr.bf16.mxu0 0
        %3156 = vmatpush1.bf16.msra.mxu0 0
        %3157 = vmatprep.subr.bf16.mxu0 0
        %3158 = vmatpush1.bf16.msra.mxu0 0
        %3159 = vmatprep.subr.bf16.mxu0 0
        %3160 = vmatpush1.bf16.msra.mxu0 0
        %3161 = vmatprep.subr.bf16.mxu0 0
        %3162 = vmatpush1.bf16.msra.mxu0 0
        %3163 = vmatprep.subr.bf16.mxu0 0
        %3164 = vmatpush1.bf16.msra.mxu0 0
        %3165 = vmatprep.subr.bf16.mxu0 0
        %3166 = vmatpush1.bf16.msra.mxu0 0
        %3167 = vmatprep.subr.bf16.mxu0 0
        %3168 = vmatpush1.bf16.msra.mxu0 0
        %3169 = vmatprep.subr.bf16.mxu0 0
        %3170 = vmatpush1.bf16.msra.mxu0 0
        %3171 = vmatprep.mubr.bf16.mxu0 0
        %3172 = vmatmul.mubr.bf16.gmra.mrb[0].mxu0 %v3097
        %v3173 = vpop.f32.mrb[0].mxu0
        %v3174 = vadd.f32 0.0, %v3173
        %v3175 = vpop.f32.mrb[0].mxu0
        %v3176 = vpop.f32.mrb[0].mxu0
        %v3177 = vpop.f32.mrb[0].mxu0
        %3178 = vdwg.mxu0
        %v3179 = vadd.f32 %v3011, %v3133
        %v3180 = vadd.f32 %v3179, %v1741
        %v3181 = vsub.f32 0.0, %v3180
        %v3182 = vmul.f32 %v3181, 1.442695
        %v3183 = vpow.pop %v3182
        %v3184 = vadd.f32 %v3183, 1.0
        %v3185 = vrcp.pop %v3184
        %v3186 = vmul.f32 1.0, %v3185
        %v3187 = vadd.f32 %v3013, %v3135
        %v3188 = vadd.f32 %v3187, %v1755
        %v3189 = vsub.f32 0.0, %v3188
        %v3190 = vmul.f32 %v3189, 1.442695
        %v3191 = vpow.pop %v3190
        %v3192 = vadd.f32 %v3191, 1.0
        %v3193 = vrcp.pop %v3192
        %v3194 = vmul.f32 1.0, %v3193
        %v3195 = vadd.f32 %v3174, %v1768
        %v3196 = vmul.f32 %v3186, %v3195
        %v3197 = vadd.f32 %v3092, %v3196
        %v3198 = vtanh.pop %v3197
        %v3199 = vsub.f32 1.0, %v3194
        %v3200 = vmul.f32 %v3199, %v3198
        %v3201 = vmul.f32 %v3194, %v2917
        %v3202 = vadd.f32 %v3200, %v3201
        %s3203 = scalar_lea.vmem %s575, 96 [#allocation2]
        %v3204 = vld [vmem:[%s3203] sm:$0xff]
        %v3205 = vld [vmem:[%s3203 + $0x8] sm:$0xff]
        %v3208 = vunpack.c.l.b16 %v3204
        %v3209 = vunpack.c.h.b16 %v3204
        %v3210 = vunpack.c.l.b16 %v3205
        %v3211 = vunpack.c.h.b16 %v3205
        %v3212 = vpack.c.b16 %v3208, %v3208
        %v3213 = vpack.c.b16 %v3209, %v3209
        %v3214 = vpack.c.b16 %v3210, %v3210
        %v3215 = vpack.c.b16 %v3211, %v3211
        %3220 = vmatprep.subr.bf16.mxu0 %v1174
        %3221 = vmatpush1.bf16.msra.mxu0 %v1173
        %3222 = vmatprep.subr.bf16.mxu0 %v1177
        %3223 = vmatpush1.bf16.msra.mxu0 %v1176
        %3224 = vmatprep.subr.bf16.mxu0 %v1180
        %3225 = vmatpush1.bf16.msra.mxu0 %v1179
        %3226 = vmatprep.subr.bf16.mxu0 %v1183
        %3227 = vmatpush1.bf16.msra.mxu0 %v1182
        %3228 = vmatprep.subr.bf16.mxu0 %v1186
        %3229 = vmatpush1.bf16.msra.mxu0 %v1185
        %3230 = vmatprep.subr.bf16.mxu0 %v1189
        %3231 = vmatpush1.bf16.msra.mxu0 %v1188
        %3232 = vmatprep.subr.bf16.mxu0 %v1192
        %3233 = vmatpush1.bf16.msra.mxu0 %v1191
        %3234 = vmatprep.subr.bf16.mxu0 %v1195
        %3235 = vmatpush1.bf16.msra.mxu0 %v1194
        %3236 = vmatprep.subr.bf16.mxu0 %v1198
        %3237 = vmatpush1.bf16.msra.mxu0 %v1197
        %3238 = vmatprep.subr.bf16.mxu0 %v1201
        %3239 = vmatpush1.bf16.msra.mxu0 %v1200
        %3240 = vmatprep.subr.bf16.mxu0 %v1204
        %3241 = vmatpush1.bf16.msra.mxu0 %v1203
        %3242 = vmatprep.subr.bf16.mxu0 %v1207
        %3243 = vmatpush1.bf16.msra.mxu0 %v1206
        %3244 = vmatprep.subr.bf16.mxu0 %v1210
        %3245 = vmatpush1.bf16.msra.mxu0 %v1209
        %3246 = vmatprep.subr.bf16.mxu0 %v1213
        %3247 = vmatpush1.bf16.msra.mxu0 %v1212
        %3248 = vmatprep.subr.bf16.mxu0 %v1216
        %3249 = vmatpush1.bf16.msra.mxu0 %v1215
        %3250 = vmatprep.subr.bf16.mxu0 %v1219
        %3251 = vmatpush1.bf16.msra.mxu0 %v1218
        %3252 = vmatprep.mubr.bf16.mxu0 %v3213
        %3253 = vmatmul.mubr.bf16.gmra.mrb[0].mxu0 %v3212
        %v3254 = vpop.f32.mrb[0].mxu0
        %v3255 = vadd.f32 %v827, %v3254
        %v3256 = vpop.f32.mrb[0].mxu0
        %v3257 = vadd.f32 %v831, %v3256
        %v3258 = vpop.f32.mrb[0].mxu0
        %v3259 = vpop.f32.mrb[0].mxu0
        %3260 = vdwg.mxu0
        %3261 = vmatprep.subr.bf16.mxu0 %v1222
        %3262 = vmatpush1.bf16.msra.mxu0 %v1221
        %3263 = vmatprep.subr.bf16.mxu0 %v1225
        %3264 = vmatpush1.bf16.msra.mxu0 %v1224
        %3265 = vmatprep.subr.bf16.mxu0 %v1228
        %3266 = vmatpush1.bf16.msra.mxu0 %v1227
        %3267 = vmatprep.subr.bf16.mxu0 %v1231
        %3268 = vmatpush1.bf16.msra.mxu0 %v1230
        %3269 = vmatprep.subr.bf16.mxu0 %v1234
        %3270 = vmatpush1.bf16.msra.mxu0 %v1233
        %3271 = vmatprep.subr.bf16.mxu0 %v1237
        %3272 = vmatpush1.bf16.msra.mxu0 %v1236
        %3273 = vmatprep.subr.bf16.mxu0 %v1240
        %3274 = vmatpush1.bf16.msra.mxu0 %v1239
        %3275 = vmatprep.subr.bf16.mxu0 %v1243
        %3276 = vmatpush1.bf16.msra.mxu0 %v1242
        %3277 = vmatprep.subr.bf16.mxu0 %v1246
        %3278 = vmatpush1.bf16.msra.mxu0 %v1245
        %3279 = vmatprep.subr.bf16.mxu0 %v1249
        %3280 = vmatpush1.bf16.msra.mxu0 %v1248
        %3281 = vmatprep.subr.bf16.mxu0 %v1252
        %3282 = vmatpush1.bf16.msra.mxu0 %v1251
        %3283 = vmatprep.subr.bf16.mxu0 %v1255
        %3284 = vmatpush1.bf16.msra.mxu0 %v1254
        %3285 = vmatprep.subr.bf16.mxu0 %v1258
        %3286 = vmatpush1.bf16.msra.mxu0 %v1257
        %3287 = vmatprep.subr.bf16.mxu0 %v1261
        %3288 = vmatpush1.bf16.msra.mxu0 %v1260
        %3289 = vmatprep.subr.bf16.mxu0 %v1264
        %3290 = vmatpush1.bf16.msra.mxu0 %v1263
        %3291 = vmatprep.subr.bf16.mxu0 %v1267
        %3292 = vmatpush1.bf16.msra.mxu0 %v1266
        %3293 = vmatprep.mubr.bf16.mxu0 %v3215
        %3294 = vmatmul.mubr.bf16.gmra.mrb[0].mxu0 %v3214
        %v3295 = vpop.f32.mrb[0].mxu0
        %v3296 = vadd.f32 %v3255, %v3295
        %v3297 = vpop.f32.mrb[0].mxu0
        %v3298 = vadd.f32 %v3257, %v3297
        %v3299 = vpop.f32.mrb[0].mxu0
        %v3300 = vpop.f32.mrb[0].mxu0
        %3301 = vdwg.mxu0
        %3302 = vmatprep.subr.bf16.mxu0 0
        %3303 = vmatpush1.bf16.msra.mxu0 %v1175
        %3304 = vmatprep.subr.bf16.mxu0 0
        %3305 = vmatpush1.bf16.msra.mxu0 %v1178
        %3306 = vmatprep.subr.bf16.mxu0 0
        %3307 = vmatpush1.bf16.msra.mxu0 %v1181
        %3308 = vmatprep.subr.bf16.mxu0 0
        %3309 = vmatpush1.bf16.msra.mxu0 %v1184
        %3310 = vmatprep.subr.bf16.mxu0 0
        %3311 = vmatpush1.bf16.msra.mxu0 %v1187
        %3312 = vmatprep.subr.bf16.mxu0 0
        %3313 = vmatpush1.bf16.msra.mxu0 %v1190
        %3314 = vmatprep.subr.bf16.mxu0 0
        %3315 = vmatpush1.bf16.msra.mxu0 %v1193
        %3316 = vmatprep.subr.bf16.mxu0 0
        %3317 = vmatpush1.bf16.msra.mxu0 %v1196
        %3318 = vmatprep.subr.bf16.mxu0 0
        %3319 = vmatpush1.bf16.msra.mxu0 %v1199
        %3320 = vmatprep.subr.bf16.mxu0 0
        %3321 = vmatpush1.bf16.msra.mxu0 %v1202
        %3322 = vmatprep.subr.bf16.mxu0 0
        %3323 = vmatpush1.bf16.msra.mxu0 %v1205
        %3324 = vmatprep.subr.bf16.mxu0 0
        %3325 = vmatpush1.bf16.msra.mxu0 %v1208
        %3326 = vmatprep.subr.bf16.mxu0 0
        %3327 = vmatpush1.bf16.msra.mxu0 %v1211
        %3328 = vmatprep.subr.bf16.mxu0 0
        %3329 = vmatpush1.bf16.msra.mxu0 %v1214
        %3330 = vmatprep.subr.bf16.mxu0 0
        %3331 = vmatpush1.bf16.msra.mxu0 %v1217
        %3332 = vmatprep.subr.bf16.mxu0 0
        %3333 = vmatpush1.bf16.msra.mxu0 %v1220
        %3334 = vmatprep.mubr.bf16.mxu0 %v3213
        %3335 = vmatmul.mubr.bf16.gmra.mrb[0].mxu0 %v3212
        %v3336 = vpop.f32.mrb[0].mxu0
        %v3337 = vadd.f32 %v835, %v3336
        %v3338 = vpop.f32.mrb[0].mxu0
        %v3339 = vpop.f32.mrb[0].mxu0
        %v3340 = vpop.f32.mrb[0].mxu0
        %3341 = vdwg.mxu0
        %3342 = vmatprep.subr.bf16.mxu0 0
        %3343 = vmatpush1.bf16.msra.mxu0 %v1223
        %3344 = vmatprep.subr.bf16.mxu0 0
        %3345 = vmatpush1.bf16.msra.mxu0 %v1226
        %3346 = vmatprep.subr.bf16.mxu0 0
        %3347 = vmatpush1.bf16.msra.mxu0 %v1229
        %3348 = vmatprep.subr.bf16.mxu0 0
        %3349 = vmatpush1.bf16.msra.mxu0 %v1232
        %3350 = vmatprep.subr.bf16.mxu0 0
        %3351 = vmatpush1.bf16.msra.mxu0 %v1235
        %3352 = vmatprep.subr.bf16.mxu0 0
        %3353 = vmatpush1.bf16.msra.mxu0 %v1238
        %3354 = vmatprep.subr.bf16.mxu0 0
        %3355 = vmatpush1.bf16.msra.mxu0 %v1241
        %3356 = vmatprep.subr.bf16.mxu0 0
        %3357 = vmatpush1.bf16.msra.mxu0 %v1244
        %3358 = vmatprep.subr.bf16.mxu0 0
        %3359 = vmatpush1.bf16.msra.mxu0 %v1247
        %3360 = vmatprep.subr.bf16.mxu0 0
        %3361 = vmatpush1.bf16.msra.mxu0 %v1250
        %3362 = vmatprep.subr.bf16.mxu0 0
        %3363 = vmatpush1.bf16.msra.mxu0 %v1253
        %3364 = vmatprep.subr.bf16.mxu0 0
        %3365 = vmatpush1.bf16.msra.mxu0 %v1256
        %3366 = vmatprep.subr.bf16.mxu0 0
        %3367 = vmatpush1.bf16.msra.mxu0 %v1259
        %3368 = vmatprep.subr.bf16.mxu0 0
        %3369 = vmatpush1.bf16.msra.mxu0 %v1262
        %3370 = vmatprep.subr.bf16.mxu0 0
        %3371 = vmatpush1.bf16.msra.mxu0 %v1265
        %3372 = vmatprep.subr.bf16.mxu0 0
        %3373 = vmatpush1.bf16.msra.mxu0 %v1268
        %3374 = vmatprep.mubr.bf16.mxu0 %v3215
        %3375 = vmatmul.mubr.bf16.gmra.mrb[0].mxu0 %v3214
        %v3376 = vpop.f32.mrb[0].mxu0
        %v3377 = vadd.f32 %v3337, %v3376
        %v3378 = vpop.f32.mrb[0].mxu0
        %v3379 = vpop.f32.mrb[0].mxu0
        %v3380 = vpop.f32.mrb[0].mxu0
        %3381 = vdwg.mxu0
        %v3382 = vpack.c.bf16 %v3202, %v3202
        %3383 = vmatprep.subr.bf16.mxu0 %v1608
        %3384 = vmatpush1.bf16.msra.mxu0 %v1607
        %3385 = vmatprep.subr.bf16.mxu0 %v1611
        %3386 = vmatpush1.bf16.msra.mxu0 %v1610
        %3387 = vmatprep.subr.bf16.mxu0 %v1614
        %3388 = vmatpush1.bf16.msra.mxu0 %v1613
        %3389 = vmatprep.subr.bf16.mxu0 %v1617
        %3390 = vmatpush1.bf16.msra.mxu0 %v1616
        %3391 = vmatprep.subr.bf16.mxu0 %v1620
        %3392 = vmatpush1.bf16.msra.mxu0 %v1619
        %3393 = vmatprep.subr.bf16.mxu0 %v1623
        %3394 = vmatpush1.bf16.msra.mxu0 %v1622
        %3395 = vmatprep.subr.bf16.mxu0 %v1626
        %3396 = vmatpush1.bf16.msra.mxu0 %v1625
        %3397 = vmatprep.subr.bf16.mxu0 %v1629
        %3398 = vmatpush1.bf16.msra.mxu0 %v1628
        %3399 = vmatprep.subr.bf16.mxu0 0
        %3400 = vmatpush1.bf16.msra.mxu0 0
        %3401 = vmatprep.subr.bf16.mxu0 0
        %3402 = vmatpush1.bf16.msra.mxu0 0
        %3403 = vmatprep.subr.bf16.mxu0 0
        %3404 = vmatpush1.bf16.msra.mxu0 0
        %3405 = vmatprep.subr.bf16.mxu0 0
        %3406 = vmatpush1.bf16.msra.mxu0 0
        %3407 = vmatprep.subr.bf16.mxu0 0
        %3408 = vmatpush1.bf16.msra.mxu0 0
        %3409 = vmatprep.subr.bf16.mxu0 0
        %3410 = vmatpush1.bf16.msra.mxu0 0
        %3411 = vmatprep.subr.bf16.mxu0 0
        %3412 = vmatpush1.bf16.msra.mxu0 0
        %3413 = vmatprep.subr.bf16.mxu0 0
        %3414 = vmatpush1.bf16.msra.mxu0 0
        %3415 = vmatprep.mubr.bf16.mxu0 0
        %3416 = vmatmul.mubr.bf16.gmra.mrb[0].mxu0 %v3382
        %v3417 = vpop.f32.mrb[0].mxu0
        %v3418 = vadd.f32 0.0, %v3417
        %v3419 = vpop.f32.mrb[0].mxu0
        %v3420 = vadd.f32 0.0, %v3419
        %v3421 = vpop.f32.mrb[0].mxu0
        %v3422 = vpop.f32.mrb[0].mxu0
        %3423 = vdwg.mxu0
        %3424 = vmatprep.subr.bf16.mxu0 0
        %3425 = vmatpush1.bf16.msra.mxu0 %v1609
        %3426 = vmatprep.subr.bf16.mxu0 0
        %3427 = vmatpush1.bf16.msra.mxu0 %v1612
        %3428 = vmatprep.subr.bf16.mxu0 0
        %3429 = vmatpush1.bf16.msra.mxu0 %v1615
        %3430 = vmatprep.subr.bf16.mxu0 0
        %3431 = vmatpush1.bf16.msra.mxu0 %v1618
        %3432 = vmatprep.subr.bf16.mxu0 0
        %3433 = vmatpush1.bf16.msra.mxu0 %v1621
        %3434 = vmatprep.subr.bf16.mxu0 0
        %3435 = vmatpush1.bf16.msra.mxu0 %v1624
        %3436 = vmatprep.subr.bf16.mxu0 0
        %3437 = vmatpush1.bf16.msra.mxu0 %v1627
        %3438 = vmatprep.subr.bf16.mxu0 0
        %3439 = vmatpush1.bf16.msra.mxu0 %v1630
        %3440 = vmatprep.subr.bf16.mxu0 0
        %3441 = vmatpush1.bf16.msra.mxu0 0
        %3442 = vmatprep.subr.bf16.mxu0 0
        %3443 = vmatpush1.bf16.msra.mxu0 0
        %3444 = vmatprep.subr.bf16.mxu0 0
        %3445 = vmatpush1.bf16.msra.mxu0 0
        %3446 = vmatprep.subr.bf16.mxu0 0
        %3447 = vmatpush1.bf16.msra.mxu0 0
        %3448 = vmatprep.subr.bf16.mxu0 0
        %3449 = vmatpush1.bf16.msra.mxu0 0
        %3450 = vmatprep.subr.bf16.mxu0 0
        %3451 = vmatpush1.bf16.msra.mxu0 0
        %3452 = vmatprep.subr.bf16.mxu0 0
        %3453 = vmatpush1.bf16.msra.mxu0 0
        %3454 = vmatprep.subr.bf16.mxu0 0
        %3455 = vmatpush1.bf16.msra.mxu0 0
        %3456 = vmatprep.mubr.bf16.mxu0 0
        %3457 = vmatmul.mubr.bf16.gmra.mrb[0].mxu0 %v3382
        %v3458 = vpop.f32.mrb[0].mxu0
        %v3459 = vadd.f32 0.0, %v3458
        %v3460 = vpop.f32.mrb[0].mxu0
        %v3461 = vpop.f32.mrb[0].mxu0
        %v3462 = vpop.f32.mrb[0].mxu0
        %3463 = vdwg.mxu0
        %v3464 = vadd.f32 %v3296, %v3418
        %v3465 = vadd.f32 %v3464, %v1741
        %v3466 = vsub.f32 0.0, %v3465
        %v3467 = vmul.f32 %v3466, 1.442695
        %v3468 = vpow.pop %v3467
        %v3469 = vadd.f32 %v3468, 1.0
        %v3470 = vrcp.pop %v3469
        %v3471 = vmul.f32 1.0, %v3470
        %v3472 = vadd.f32 %v3298, %v3420
        %v3473 = vadd.f32 %v3472, %v1755
        %v3474 = vsub.f32 0.0, %v3473
        %v3475 = vmul.f32 %v3474, 1.442695
        %v3476 = vpow.pop %v3475
        %v3477 = vadd.f32 %v3476, 1.0
        %v3478 = vrcp.pop %v3477
        %v3479 = vmul.f32 1.0, %v3478
        %v3480 = vadd.f32 %v3459, %v1768
        %v3481 = vmul.f32 %v3471, %v3480
        %v3482 = vadd.f32 %v3377, %v3481
        %v3483 = vtanh.pop %v3482
        %v3484 = vsub.f32 1.0, %v3479
        %v3485 = vmul.f32 %v3484, %v3483
        %v3486 = vmul.f32 %v3479, %v3202
        %v3487 = vadd.f32 %v3485, %v3486
        %s3488 = scalar_lea.vmem %s575, 112 [#allocation2]
        %v3489 = vld [vmem:[%s3488] sm:$0xff]
        %v3490 = vld [vmem:[%s3488 + $0x8] sm:$0xff]
        %v3493 = vunpack.c.l.b16 %v3489
        %v3494 = vunpack.c.h.b16 %v3489
        %v3495 = vunpack.c.l.b16 %v3490
        %v3496 = vunpack.c.h.b16 %v3490
        %v3497 = vpack.c.b16 %v3493, %v3493
        %v3498 = vpack.c.b16 %v3494, %v3494
        %v3499 = vpack.c.b16 %v3495, %v3495
        %v3500 = vpack.c.b16 %v3496, %v3496
        %3505 = vmatprep.subr.bf16.mxu0 %v1174
        %3506 = vmatpush1.bf16.msra.mxu0 %v1173
        %3507 = vmatprep.subr.bf16.mxu0 %v1177
        %3508 = vmatpush1.bf16.msra.mxu0 %v1176
        %3509 = vmatprep.subr.bf16.mxu0 %v1180
        %3510 = vmatpush1.bf16.msra.mxu0 %v1179
        %3511 = vmatprep.subr.bf16.mxu0 %v1183
        %3512 = vmatpush1.bf16.msra.mxu0 %v1182
        %3513 = vmatprep.subr.bf16.mxu0 %v1186
        %3514 = vmatpush1.bf16.msra.mxu0 %v1185
        %3515 = vmatprep.subr.bf16.mxu0 %v1189
        %3516 = vmatpush1.bf16.msra.mxu0 %v1188
        %3517 = vmatprep.subr.bf16.mxu0 %v1192
        %3518 = vmatpush1.bf16.msra.mxu0 %v1191
        %3519 = vmatprep.subr.bf16.mxu0 %v1195
        %3520 = vmatpush1.bf16.msra.mxu0 %v1194
        %3521 = vmatprep.subr.bf16.mxu0 %v1198
        %3522 = vmatpush1.bf16.msra.mxu0 %v1197
        %3523 = vmatprep.subr.bf16.mxu0 %v1201
        %3524 = vmatpush1.bf16.msra.mxu0 %v1200
        %3525 = vmatprep.subr.bf16.mxu0 %v1204
        %3526 = vmatpush1.bf16.msra.mxu0 %v1203
        %3527 = vmatprep.subr.bf16.mxu0 %v1207
        %3528 = vmatpush1.bf16.msra.mxu0 %v1206
        %3529 = vmatprep.subr.bf16.mxu0 %v1210
        %3530 = vmatpush1.bf16.msra.mxu0 %v1209
        %3531 = vmatprep.subr.bf16.mxu0 %v1213
        %3532 = vmatpush1.bf16.msra.mxu0 %v1212
        %3533 = vmatprep.subr.bf16.mxu0 %v1216
        %3534 = vmatpush1.bf16.msra.mxu0 %v1215
        %3535 = vmatprep.subr.bf16.mxu0 %v1219
        %3536 = vmatpush1.bf16.msra.mxu0 %v1218
        %3537 = vmatprep.mubr.bf16.mxu0 %v3498
        %3538 = vmatmul.mubr.bf16.gmra.mrb[0].mxu0 %v3497
        %v3539 = vpop.f32.mrb[0].mxu0
        %v3540 = vadd.f32 %v827, %v3539
        %v3541 = vpop.f32.mrb[0].mxu0
        %v3542 = vadd.f32 %v831, %v3541
        %v3543 = vpop.f32.mrb[0].mxu0
        %v3544 = vpop.f32.mrb[0].mxu0
        %3545 = vdwg.mxu0
        %3546 = vmatprep.subr.bf16.mxu0 %v1222
        %3547 = vmatpush1.bf16.msra.mxu0 %v1221
        %3548 = vmatprep.subr.bf16.mxu0 %v1225
        %3549 = vmatpush1.bf16.msra.mxu0 %v1224
        %3550 = vmatprep.subr.bf16.mxu0 %v1228
        %3551 = vmatpush1.bf16.msra.mxu0 %v1227
        %3552 = vmatprep.subr.bf16.mxu0 %v1231
        %3553 = vmatpush1.bf16.msra.mxu0 %v1230
        %3554 = vmatprep.subr.bf16.mxu0 %v1234
        %3555 = vmatpush1.bf16.msra.mxu0 %v1233
        %3556 = vmatprep.subr.bf16.mxu0 %v1237
        %3557 = vmatpush1.bf16.msra.mxu0 %v1236
        %3558 = vmatprep.subr.bf16.mxu0 %v1240
        %3559 = vmatpush1.bf16.msra.mxu0 %v1239
        %3560 = vmatprep.subr.bf16.mxu0 %v1243
        %3561 = vmatpush1.bf16.msra.mxu0 %v1242
        %3562 = vmatprep.subr.bf16.mxu0 %v1246
        %3563 = vmatpush1.bf16.msra.mxu0 %v1245
        %3564 = vmatprep.subr.bf16.mxu0 %v1249
        %3565 = vmatpush1.bf16.msra.mxu0 %v1248
        %3566 = vmatprep.subr.bf16.mxu0 %v1252
        %3567 = vmatpush1.bf16.msra.mxu0 %v1251
        %3568 = vmatprep.subr.bf16.mxu0 %v1255
        %3569 = vmatpush1.bf16.msra.mxu0 %v1254
        %3570 = vmatprep.subr.bf16.mxu0 %v1258
        %3571 = vmatpush1.bf16.msra.mxu0 %v1257
        %3572 = vmatprep.subr.bf16.mxu0 %v1261
        %3573 = vmatpush1.bf16.msra.mxu0 %v1260
        %3574 = vmatprep.subr.bf16.mxu0 %v1264
        %3575 = vmatpush1.bf16.msra.mxu0 %v1263
        %3576 = vmatprep.subr.bf16.mxu0 %v1267
        %3577 = vmatpush1.bf16.msra.mxu0 %v1266
        %3578 = vmatprep.mubr.bf16.mxu0 %v3500
        %3579 = vmatmul.mubr.bf16.gmra.mrb[0].mxu0 %v3499
        %v3580 = vpop.f32.mrb[0].mxu0
        %v3581 = vadd.f32 %v3540, %v3580
        %v3582 = vpop.f32.mrb[0].mxu0
        %v3583 = vadd.f32 %v3542, %v3582
        %v3584 = vpop.f32.mrb[0].mxu0
        %v3585 = vpop.f32.mrb[0].mxu0
        %3586 = vdwg.mxu0
        %3587 = vmatprep.subr.bf16.mxu0 0
        %3588 = vmatpush1.bf16.msra.mxu0 %v1175
        %3589 = vmatprep.subr.bf16.mxu0 0
        %3590 = vmatpush1.bf16.msra.mxu0 %v1178
        %3591 = vmatprep.subr.bf16.mxu0 0
        %3592 = vmatpush1.bf16.msra.mxu0 %v1181
        %3593 = vmatprep.subr.bf16.mxu0 0
        %3594 = vmatpush1.bf16.msra.mxu0 %v1184
        %3595 = vmatprep.subr.bf16.mxu0 0
        %3596 = vmatpush1.bf16.msra.mxu0 %v1187
        %3597 = vmatprep.subr.bf16.mxu0 0
        %3598 = vmatpush1.bf16.msra.mxu0 %v1190
        %3599 = vmatprep.subr.bf16.mxu0 0
        %3600 = vmatpush1.bf16.msra.mxu0 %v1193
        %3601 = vmatprep.subr.bf16.mxu0 0
        %3602 = vmatpush1.bf16.msra.mxu0 %v1196
        %3603 = vmatprep.subr.bf16.mxu0 0
        %3604 = vmatpush1.bf16.msra.mxu0 %v1199
        %3605 = vmatprep.subr.bf16.mxu0 0
        %3606 = vmatpush1.bf16.msra.mxu0 %v1202
        %3607 = vmatprep.subr.bf16.mxu0 0
        %3608 = vmatpush1.bf16.msra.mxu0 %v1205
        %3609 = vmatprep.subr.bf16.mxu0 0
        %3610 = vmatpush1.bf16.msra.mxu0 %v1208
        %3611 = vmatprep.subr.bf16.mxu0 0
        %3612 = vmatpush1.bf16.msra.mxu0 %v1211
        %3613 = vmatprep.subr.bf16.mxu0 0
        %3614 = vmatpush1.bf16.msra.mxu0 %v1214
        %3615 = vmatprep.subr.bf16.mxu0 0
        %3616 = vmatpush1.bf16.msra.mxu0 %v1217
        %3617 = vmatprep.subr.bf16.mxu0 0
        %3618 = vmatpush1.bf16.msra.mxu0 %v1220
        %3619 = vmatprep.mubr.bf16.mxu0 %v3498
        %3620 = vmatmul.mubr.bf16.gmra.mrb[0].mxu0 %v3497
        %v3621 = vpop.f32.mrb[0].mxu0
        %v3622 = vadd.f32 %v835, %v3621
        %v3623 = vpop.f32.mrb[0].mxu0
        %v3624 = vpop.f32.mrb[0].mxu0
        %v3625 = vpop.f32.mrb[0].mxu0
        %3626 = vdwg.mxu0
        %3627 = vmatprep.subr.bf16.mxu0 0
        %3628 = vmatpush1.bf16.msra.mxu0 %v1223
        %3629 = vmatprep.subr.bf16.mxu0 0
        %3630 = vmatpush1.bf16.msra.mxu0 %v1226
        %3631 = vmatprep.subr.bf16.mxu0 0
        %3632 = vmatpush1.bf16.msra.mxu0 %v1229
        %3633 = vmatprep.subr.bf16.mxu0 0
        %3634 = vmatpush1.bf16.msra.mxu0 %v1232
        %3635 = vmatprep.subr.bf16.mxu0 0
        %3636 = vmatpush1.bf16.msra.mxu0 %v1235
        %3637 = vmatprep.subr.bf16.mxu0 0
        %3638 = vmatpush1.bf16.msra.mxu0 %v1238
        %3639 = vmatprep.subr.bf16.mxu0 0
        %3640 = vmatpush1.bf16.msra.mxu0 %v1241
        %3641 = vmatprep.subr.bf16.mxu0 0
        %3642 = vmatpush1.bf16.msra.mxu0 %v1244
        %3643 = vmatprep.subr.bf16.mxu0 0
        %3644 = vmatpush1.bf16.msra.mxu0 %v1247
        %3645 = vmatprep.subr.bf16.mxu0 0
        %3646 = vmatpush1.bf16.msra.mxu0 %v1250
        %3647 = vmatprep.subr.bf16.mxu0 0
        %3648 = vmatpush1.bf16.msra.mxu0 %v1253
        %3649 = vmatprep.subr.bf16.mxu0 0
        %3650 = vmatpush1.bf16.msra.mxu0 %v1256
        %3651 = vmatprep.subr.bf16.mxu0 0
        %3652 = vmatpush1.bf16.msra.mxu0 %v1259
        %3653 = vmatprep.subr.bf16.mxu0 0
        %3654 = vmatpush1.bf16.msra.mxu0 %v1262
        %3655 = vmatprep.subr.bf16.mxu0 0
        %3656 = vmatpush1.bf16.msra.mxu0 %v1265
        %3657 = vmatprep.subr.bf16.mxu0 0
        %3658 = vmatpush1.bf16.msra.mxu0 %v1268
        %3659 = vmatprep.mubr.bf16.mxu0 %v3500
        %3660 = vmatmul.mubr.bf16.gmra.mrb[0].mxu0 %v3499
        %v3661 = vpop.f32.mrb[0].mxu0
        %v3662 = vadd.f32 %v3622, %v3661
        %v3663 = vpop.f32.mrb[0].mxu0
        %v3664 = vpop.f32.mrb[0].mxu0
        %v3665 = vpop.f32.mrb[0].mxu0
        %3666 = vdwg.mxu0
        %v3667 = vpack.c.bf16 %v3487, %v3487
        %3668 = vmatprep.subr.bf16.mxu0 %v1608
        %3669 = vmatpush1.bf16.msra.mxu0 %v1607
        %3670 = vmatprep.subr.bf16.mxu0 %v1611
        %3671 = vmatpush1.bf16.msra.mxu0 %v1610
        %3672 = vmatprep.subr.bf16.mxu0 %v1614
        %3673 = vmatpush1.bf16.msra.mxu0 %v1613
        %3674 = vmatprep.subr.bf16.mxu0 %v1617
        %3675 = vmatpush1.bf16.msra.mxu0 %v1616
        %3676 = vmatprep.subr.bf16.mxu0 %v1620
        %3677 = vmatpush1.bf16.msra.mxu0 %v1619
        %3678 = vmatprep.subr.bf16.mxu0 %v1623
        %3679 = vmatpush1.bf16.msra.mxu0 %v1622
        %3680 = vmatprep.subr.bf16.mxu0 %v1626
        %3681 = vmatpush1.bf16.msra.mxu0 %v1625
        %3682 = vmatprep.subr.bf16.mxu0 %v1629
        %3683 = vmatpush1.bf16.msra.mxu0 %v1628
        %3684 = vmatprep.subr.bf16.mxu0 0
        %3685 = vmatpush1.bf16.msra.mxu0 0
        %3686 = vmatprep.subr.bf16.mxu0 0
        %3687 = vmatpush1.bf16.msra.mxu0 0
        %3688 = vmatprep.subr.bf16.mxu0 0
        %3689 = vmatpush1.bf16.msra.mxu0 0
        %3690 = vmatprep.subr.bf16.mxu0 0
        %3691 = vmatpush1.bf16.msra.mxu0 0
        %3692 = vmatprep.subr.bf16.mxu0 0
        %3693 = vmatpush1.bf16.msra.mxu0 0
        %3694 = vmatprep.subr.bf16.mxu0 0
        %3695 = vmatpush1.bf16.msra.mxu0 0
        %3696 = vmatprep.subr.bf16.mxu0 0
        %3697 = vmatpush1.bf16.msra.mxu0 0
        %3698 = vmatprep.subr.bf16.mxu0 0
        %3699 = vmatpush1.bf16.msra.mxu0 0
        %3700 = vmatprep.mubr.bf16.mxu0 0
        %3701 = vmatmul.mubr.bf16.gmra.mrb[0].mxu0 %v3667
        %v3702 = vpop.f32.mrb[0].mxu0
        %v3703 = vadd.f32 0.0, %v3702
        %v3704 = vpop.f32.mrb[0].mxu0
        %v3705 = vadd.f32 0.0, %v3704
        %v3706 = vpop.f32.mrb[0].mxu0
        %v3707 = vpop.f32.mrb[0].mxu0
        %3708 = vdwg.mxu0
        %3709 = vmatprep.subr.bf16.mxu0 0
        %3710 = vmatpush1.bf16.msra.mxu0 %v1609
        %3711 = vmatprep.subr.bf16.mxu0 0
        %3712 = vmatpush1.bf16.msra.mxu0 %v1612
        %3713 = vmatprep.subr.bf16.mxu0 0
        %3714 = vmatpush1.bf16.msra.mxu0 %v1615
        %3715 = vmatprep.subr.bf16.mxu0 0
        %3716 = vmatpush1.bf16.msra.mxu0 %v1618
        %3717 = vmatprep.subr.bf16.mxu0 0
        %3718 = vmatpush1.bf16.msra.mxu0 %v1621
        %3719 = vmatprep.subr.bf16.mxu0 0
        %3720 = vmatpush1.bf16.msra.mxu0 %v1624
        %3721 = vmatprep.subr.bf16.mxu0 0
        %3722 = vmatpush1.bf16.msra.mxu0 %v1627
        %3723 = vmatprep.subr.bf16.mxu0 0
        %3724 = vmatpush1.bf16.msra.mxu0 %v1630
        %3725 = vmatprep.subr.bf16.mxu0 0
        %3726 = vmatpush1.bf16.msra.mxu0 0
        %3727 = vmatprep.subr.bf16.mxu0 0
        %3728 = vmatpush1.bf16.msra.mxu0 0
        %3729 = vmatprep.subr.bf16.mxu0 0
        %3730 = vmatpush1.bf16.msra.mxu0 0
        %3731 = vmatprep.subr.bf16.mxu0 0
        %3732 = vmatpush1.bf16.msra.mxu0 0
        %3733 = vmatprep.subr.bf16.mxu0 0
        %3734 = vmatpush1.bf16.msra.mxu0 0
        %3735 = vmatprep.subr.bf16.mxu0 0
        %3736 = vmatpush1.bf16.msra.mxu0 0
        %3737 = vmatprep.subr.bf16.mxu0 0
        %3738 = vmatpush1.bf16.msra.mxu0 0
        %3739 = vmatprep.subr.bf16.mxu0 0
        %3740 = vmatpush1.bf16.msra.mxu0 0
        %3741 = vmatprep.mubr.bf16.mxu0 0
        %3742 = vmatmul.mubr.bf16.gmra.mrb[0].mxu0 %v3667
        %v3743 = vpop.f32.mrb[0].mxu0
        %v3744 = vadd.f32 0.0, %v3743
        %v3745 = vpop.f32.mrb[0].mxu0
        %v3746 = vpop.f32.mrb[0].mxu0
        %v3747 = vpop.f32.mrb[0].mxu0
        %3748 = vdwg.mxu0
        %v3749 = vadd.f32 %v3581, %v3703
        %v3750 = vadd.f32 %v3749, %v1741
        %v3751 = vsub.f32 0.0, %v3750
        %v3752 = vmul.f32 %v3751, 1.442695
        %v3753 = vpow.pop %v3752
        %v3754 = vadd.f32 %v3753, 1.0
        %v3755 = vrcp.pop %v3754
        %v3756 = vmul.f32 1.0, %v3755
        %v3757 = vadd.f32 %v3583, %v3705
        %v3758 = vadd.f32 %v3757, %v1755
        %v3759 = vsub.f32 0.0, %v3758
        %v3760 = vmul.f32 %v3759, 1.442695
        %v3761 = vpow.pop %v3760
        %v3762 = vadd.f32 %v3761, 1.0
        %v3763 = vrcp.pop %v3762
        %v3764 = vmul.f32 1.0, %v3763
        %v3765 = vadd.f32 %v3744, %v1768
        %v3766 = vmul.f32 %v3756, %v3765
        %v3767 = vadd.f32 %v3662, %v3766
        %v3768 = vtanh.pop %v3767
        %v3769 = vsub.f32 1.0, %v3764
        %v3770 = vmul.f32 %v3769, %v3768
        %v3771 = vmul.f32 %v3764, %v3487
        %v3772 = vadd.f32 %v3770, %v3771
        %v3773 = vpack.c.bf16 %v3772, %v3772
        %v3774 = vld [vmem:[#allocation8] sm:$0xf]
        %v3775 = vld [vmem:[#allocation8 + $0x4] sm:$0xf]
        %v3776 = vld [vmem:[#allocation8 + $0x8] sm:$0xf]
        %v3777 = vld [vmem:[#allocation8 + $0xc] sm:$0xf]
        %v3778 = vld [vmem:[#allocation8 + $0x10] sm:$0xf]
        %v3779 = vld [vmem:[#allocation8 + $0x14] sm:$0xf]
        %v3780 = vld [vmem:[#allocation8 + $0x18] sm:$0xf]
        %v3781 = vld [vmem:[#allocation8 + $0x1c] sm:$0xf]
        %v3782 = vld [vmem:[#allocation8 + $0x20] sm:$0xf]
        %v3783 = vld [vmem:[#allocation8 + $0x24] sm:$0xf]
        %v3784 = vld [vmem:[#allocation8 + $0x28] sm:$0xf]
        %v3785 = vld [vmem:[#allocation8 + $0x2c] sm:$0xf]
        %v3786 = vld [vmem:[#allocation8 + $0x30] sm:$0xf]
        %v3787 = vld [vmem:[#allocation8 + $0x34] sm:$0xf]
        %v3788 = vld [vmem:[#allocation8 + $0x38] sm:$0xf]
        %v3789 = vld [vmem:[#allocation8 + $0x3c] sm:$0xf]
        %v3790 = vld [vmem:[%s6] sm:$0x1]
        %v3792 = vlaneseq
        %v3793 = vshrl.u32 %v3792, 7
        %v3794 = vsub.s32 0, %v3793
        %v3795 = vrot.slane %v3790, %v3794
        %v3813 = vunpack.c.l.b16 %v3774
        %v3814 = vunpack.c.l.b16 %v3775
        %v3815 = vunpack.c.l.b16 %v3776
        %v3816 = vunpack.c.l.b16 %v3777
        %v3817 = vunpack.c.l.b16 %v3778
        %v3818 = vunpack.c.l.b16 %v3779
        %v3819 = vunpack.c.l.b16 %v3780
        %v3820 = vunpack.c.l.b16 %v3781
        %v3821 = vunpack.c.l.b16 %v3782
        %v3822 = vunpack.c.l.b16 %v3783
        %v3823 = vunpack.c.l.b16 %v3784
        %v3824 = vunpack.c.l.b16 %v3785
        %v3825 = vunpack.c.l.b16 %v3786
        %v3826 = vunpack.c.l.b16 %v3787
        %v3827 = vunpack.c.l.b16 %v3788
        %v3828 = vunpack.c.l.b16 %v3789
        %v3829 = vpack.c.b16 %v3814, %v3813
        %v3830 = vpack.c.b16 %v3816, %v3815
        %v3831 = vpack.c.b16 %v3818, %v3817
        %v3832 = vpack.c.b16 %v3820, %v3819
        %v3833 = vpack.c.b16 %v3822, %v3821
        %v3834 = vpack.c.b16 %v3824, %v3823
        %v3835 = vpack.c.b16 %v3826, %v3825
        %v3836 = vpack.c.b16 %v3828, %v3827
        %3845 = vmatprep.subr.bf16.mxu0 0
        %3846 = vmatpush1.bf16.msra.mxu0 %v3829
        %3847 = vmatprep.subr.bf16.mxu0 0
        %3848 = vmatpush1.bf16.msra.mxu0 %v3830
        %3849 = vmatprep.subr.bf16.mxu0 0
        %3850 = vmatpush1.bf16.msra.mxu0 %v3831
        %3851 = vmatprep.subr.bf16.mxu0 0
        %3852 = vmatpush1.bf16.msra.mxu0 %v3832
        %3853 = vmatprep.subr.bf16.mxu0 0
        %3854 = vmatpush1.bf16.msra.mxu0 %v3833
        %3855 = vmatprep.subr.bf16.mxu0 0
        %3856 = vmatpush1.bf16.msra.mxu0 %v3834
        %3857 = vmatprep.subr.bf16.mxu0 0
        %3858 = vmatpush1.bf16.msra.mxu0 %v3835
        %3859 = vmatprep.subr.bf16.mxu0 0
        %3860 = vmatpush1.bf16.msra.mxu0 %v3836
        %3861 = vmatprep.subr.bf16.mxu0 0
        %3862 = vmatpush1.bf16.msra.mxu0 0
        %3863 = vmatprep.subr.bf16.mxu0 0
        %3864 = vmatpush1.bf16.msra.mxu0 0
        %3865 = vmatprep.subr.bf16.mxu0 0
        %3866 = vmatpush1.bf16.msra.mxu0 0
        %3867 = vmatprep.subr.bf16.mxu0 0
        %3868 = vmatpush1.bf16.msra.mxu0 0
        %3869 = vmatprep.subr.bf16.mxu0 0
        %3870 = vmatpush1.bf16.msra.mxu0 0
        %3871 = vmatprep.subr.bf16.mxu0 0
        %3872 = vmatpush1.bf16.msra.mxu0 0
        %3873 = vmatprep.subr.bf16.mxu0 0
        %3874 = vmatpush1.bf16.msra.mxu0 0
        %3875 = vmatprep.subr.bf16.mxu0 0
        %3876 = vmatpush1.bf16.msra.mxu0 0
        %3877 = vmatprep.mubr.bf16.mxu0 0
        %3878 = vmatmul.mubr.bf16.gmra.mrb[0].mxu0 %v3773
        %v3879 = vpop.f32.mrb[0].mxu0
        %v3880 = vadd.f32 %v3795, %v3879
        %v3881 = vpop.f32.mrb[0].mxu0
        %v3882 = vpop.f32.mrb[0].mxu0
        %v3883 = vpop.f32.mrb[0].mxu0
        %3884 = vdwg.mxu0
        %v3885 = vmax.f32 %v3880, 0.0
        %v3886 = vpack.c.bf16 %v3885, %v3885
        %v3887 = vld [vmem:[#allocation10] sm:$0xf]
        %v3888 = vld [vmem:[#allocation10 + $0x4] sm:$0xf]
        %v3889 = vld [vmem:[#allocation10 + $0x8] sm:$0xf]
        %v3890 = vld [vmem:[#allocation10 + $0xc] sm:$0xf]
        %v3891 = vld [vmem:[#allocation10 + $0x10] sm:$0xf]
        %v3892 = vld [vmem:[#allocation10 + $0x14] sm:$0xf]
        %v3893 = vld [vmem:[#allocation10 + $0x18] sm:$0xf]
        %v3894 = vld [vmem:[#allocation10 + $0x1c] sm:$0xf]
        %v3895 = vld [vmem:[#allocation10 + $0x20] sm:$0xf]
        %v3896 = vld [vmem:[#allocation10 + $0x24] sm:$0xf]
        %v3897 = vld [vmem:[#allocation10 + $0x28] sm:$0xf]
        %v3898 = vld [vmem:[#allocation10 + $0x2c] sm:$0xf]
        %v3899 = vld [vmem:[#allocation10 + $0x30] sm:$0xf]
        %v3900 = vld [vmem:[#allocation10 + $0x34] sm:$0xf]
        %v3901 = vld [vmem:[#allocation10 + $0x38] sm:$0xf]
        %v3902 = vld [vmem:[#allocation10 + $0x3c] sm:$0xf]
        %v3903 = vld [vmem:[%s8] sm:$0x1]
        %v3905 = vlaneseq
        %v3906 = vshrl.u32 %v3905, 7
        %v3907 = vsub.s32 0, %v3906
        %v3908 = vrot.slane %v3903, %v3907
        %v3926 = vunpack.c.l.b16 %v3887
        %v3927 = vunpack.c.l.b16 %v3888
        %v3928 = vunpack.c.l.b16 %v3889
        %v3929 = vunpack.c.l.b16 %v3890
        %v3930 = vunpack.c.l.b16 %v3891
        %v3931 = vunpack.c.l.b16 %v3892
        %v3932 = vunpack.c.l.b16 %v3893
        %v3933 = vunpack.c.l.b16 %v3894
        %v3934 = vunpack.c.l.b16 %v3895
        %v3935 = vunpack.c.l.b16 %v3896
        %v3936 = vunpack.c.l.b16 %v3897
        %v3937 = vunpack.c.l.b16 %v3898
        %v3938 = vunpack.c.l.b16 %v3899
        %v3939 = vunpack.c.l.b16 %v3900
        %v3940 = vunpack.c.l.b16 %v3901
        %v3941 = vunpack.c.l.b16 %v3902
        %v3942 = vpack.c.b16 %v3927, %v3926
        %v3943 = vpack.c.b16 %v3929, %v3928
        %v3944 = vpack.c.b16 %v3931, %v3930
        %v3945 = vpack.c.b16 %v3933, %v3932
        %v3946 = vpack.c.b16 %v3935, %v3934
        %v3947 = vpack.c.b16 %v3937, %v3936
        %v3948 = vpack.c.b16 %v3939, %v3938
        %v3949 = vpack.c.b16 %v3941, %v3940
        %3958 = vmatprep.subr.bf16.mxu0 0
        %3959 = vmatpush1.bf16.msra.mxu0 %v3942
        %3960 = vmatprep.subr.bf16.mxu0 0
        %3961 = vmatpush1.bf16.msra.mxu0 %v3943
        %3962 = vmatprep.subr.bf16.mxu0 0
        %3963 = vmatpush1.bf16.msra.mxu0 %v3944
        %3964 = vmatprep.subr.bf16.mxu0 0
        %3965 = vmatpush1.bf16.msra.mxu0 %v3945
        %3966 = vmatprep.subr.bf16.mxu0 0
        %3967 = vmatpush1.bf16.msra.mxu0 %v3946
        %3968 = vmatprep.subr.bf16.mxu0 0
        %3969 = vmatpush1.bf16.msra.mxu0 %v3947
        %3970 = vmatprep.subr.bf16.mxu0 0
        %3971 = vmatpush1.bf16.msra.mxu0 %v3948
        %3972 = vmatprep.subr.bf16.mxu0 0
        %3973 = vmatpush1.bf16.msra.mxu0 %v3949
        %3974 = vmatprep.subr.bf16.mxu0 0
        %3975 = vmatpush1.bf16.msra.mxu0 0
        %3976 = vmatprep.subr.bf16.mxu0 0
        %3977 = vmatpush1.bf16.msra.mxu0 0
        %3978 = vmatprep.subr.bf16.mxu0 0
        %3979 = vmatpush1.bf16.msra.mxu0 0
        %3980 = vmatprep.subr.bf16.mxu0 0
        %3981 = vmatpush1.bf16.msra.mxu0 0
        %3982 = vmatprep.subr.bf16.mxu0 0
        %3983 = vmatpush1.bf16.msra.mxu0 0
        %3984 = vmatprep.subr.bf16.mxu0 0
        %3985 = vmatpush1.bf16.msra.mxu0 0
        %3986 = vmatprep.subr.bf16.mxu0 0
        %3987 = vmatpush1.bf16.msra.mxu0 0
        %3988 = vmatprep.subr.bf16.mxu0 0
        %3989 = vmatpush1.bf16.msra.mxu0 0
        %3990 = vmatprep.mubr.bf16.mxu0 0
        %3991 = vmatmul.mubr.bf16.gmra.mrb[0].mxu0 %v3886
        %v3992 = vpop.f32.mrb[0].mxu0
        %v3993 = vadd.f32 %v3908, %v3992
        %v3994 = vpop.f32.mrb[0].mxu0
        %v3995 = vpop.f32.mrb[0].mxu0
        %v3996 = vpop.f32.mrb[0].mxu0
        %3997 = vdwg.mxu0
        %v3998 = vmax.f32 %v3993, 0.0
        %v3999 = vadd.f32 %v3998, %v3772
        %v4000 = vpack.c.bf16 %v3999, %v3999
        %s4001 = scalar_lea.vmem [#allocation8], 64
        %v4002 = vld [vmem:[%s4001] sm:$0xf]
        %v4003 = vld [vmem:[%s4001 + $0x4] sm:$0xf]
        %v4004 = vld [vmem:[%s4001 + $0x8] sm:$0xf]
        %v4005 = vld [vmem:[%s4001 + $0xc] sm:$0xf]
        %v4006 = vld [vmem:[%s4001 + $0x10] sm:$0xf]
        %v4007 = vld [vmem:[%s4001 + $0x14] sm:$0xf]
        %v4008 = vld [vmem:[%s4001 + $0x18] sm:$0xf]
        %v4009 = vld [vmem:[%s4001 + $0x1c] sm:$0xf]
        %v4010 = vld [vmem:[%s4001 + $0x20] sm:$0xf]
        %v4011 = vld [vmem:[%s4001 + $0x24] sm:$0xf]
        %v4012 = vld [vmem:[%s4001 + $0x28] sm:$0xf]
        %v4013 = vld [vmem:[%s4001 + $0x2c] sm:$0xf]
        %v4014 = vld [vmem:[%s4001 + $0x30] sm:$0xf]
        %v4015 = vld [vmem:[%s4001 + $0x34] sm:$0xf]
        %v4016 = vld [vmem:[%s4001 + $0x38] sm:$0xf]
        %v4017 = vld [vmem:[%s4001 + $0x3c] sm:$0xf]
        %s4018 = scalar_lea.vmem %s6, 1
        %v4019 = vld [vmem:[%s4018] sm:$0x1]
        %v4021 = vlaneseq
        %v4022 = vshrl.u32 %v4021, 7
        %v4023 = vsub.s32 0, %v4022
        %v4024 = vrot.slane %v4019, %v4023
        %v4042 = vunpack.c.l.b16 %v4002
        %v4043 = vunpack.c.l.b16 %v4003
        %v4044 = vunpack.c.l.b16 %v4004
        %v4045 = vunpack.c.l.b16 %v4005
        %v4046 = vunpack.c.l.b16 %v4006
        %v4047 = vunpack.c.l.b16 %v4007
        %v4048 = vunpack.c.l.b16 %v4008
        %v4049 = vunpack.c.l.b16 %v4009
        %v4050 = vunpack.c.l.b16 %v4010
        %v4051 = vunpack.c.l.b16 %v4011
        %v4052 = vunpack.c.l.b16 %v4012
        %v4053 = vunpack.c.l.b16 %v4013
        %v4054 = vunpack.c.l.b16 %v4014
        %v4055 = vunpack.c.l.b16 %v4015
        %v4056 = vunpack.c.l.b16 %v4016
        %v4057 = vunpack.c.l.b16 %v4017
        %v4058 = vpack.c.b16 %v4043, %v4042
        %v4059 = vpack.c.b16 %v4045, %v4044
        %v4060 = vpack.c.b16 %v4047, %v4046
        %v4061 = vpack.c.b16 %v4049, %v4048
        %v4062 = vpack.c.b16 %v4051, %v4050
        %v4063 = vpack.c.b16 %v4053, %v4052
        %v4064 = vpack.c.b16 %v4055, %v4054
        %v4065 = vpack.c.b16 %v4057, %v4056
        %4074 = vmatprep.subr.bf16.mxu0 0
        %4075 = vmatpush1.bf16.msra.mxu0 %v4058
        %4076 = vmatprep.subr.bf16.mxu0 0
        %4077 = vmatpush1.bf16.msra.mxu0 %v4059
        %4078 = vmatprep.subr.bf16.mxu0 0
        %4079 = vmatpush1.bf16.msra.mxu0 %v4060
        %4080 = vmatprep.subr.bf16.mxu0 0
        %4081 = vmatpush1.bf16.msra.mxu0 %v4061
        %4082 = vmatprep.subr.bf16.mxu0 0
        %4083 = vmatpush1.bf16.msra.mxu0 %v4062
        %4084 = vmatprep.subr.bf16.mxu0 0
        %4085 = vmatpush1.bf16.msra.mxu0 %v4063
        %4086 = vmatprep.subr.bf16.mxu0 0
        %4087 = vmatpush1.bf16.msra.mxu0 %v4064
        %4088 = vmatprep.subr.bf16.mxu0 0
        %4089 = vmatpush1.bf16.msra.mxu0 %v4065
        %4090 = vmatprep.subr.bf16.mxu0 0
        %4091 = vmatpush1.bf16.msra.mxu0 0
        %4092 = vmatprep.subr.bf16.mxu0 0
        %4093 = vmatpush1.bf16.msra.mxu0 0
        %4094 = vmatprep.subr.bf16.mxu0 0
        %4095 = vmatpush1.bf16.msra.mxu0 0
        %4096 = vmatprep.subr.bf16.mxu0 0
        %4097 = vmatpush1.bf16.msra.mxu0 0
        %4098 = vmatprep.subr.bf16.mxu0 0
        %4099 = vmatpush1.bf16.msra.mxu0 0
        %4100 = vmatprep.subr.bf16.mxu0 0
        %4101 = vmatpush1.bf16.msra.mxu0 0
        %4102 = vmatprep.subr.bf16.mxu0 0
        %4103 = vmatpush1.bf16.msra.mxu0 0
        %4104 = vmatprep.subr.bf16.mxu0 0
        %4105 = vmatpush1.bf16.msra.mxu0 0
        %4106 = vmatprep.mubr.bf16.mxu0 0
        %4107 = vmatmul.mubr.bf16.gmra.mrb[0].mxu0 %v4000
        %v4108 = vpop.f32.mrb[0].mxu0
        %v4109 = vadd.f32 %v4024, %v4108
        %v4110 = vpop.f32.mrb[0].mxu0
        %v4111 = vpop.f32.mrb[0].mxu0
        %v4112 = vpop.f32.mrb[0].mxu0
        %4113 = vdwg.mxu0
        %v4114 = vmax.f32 %v4109, 0.0
        %v4115 = vpack.c.bf16 %v4114, %v4114
        %s4116 = scalar_lea.vmem [#allocation10], 64
        %v4117 = vld [vmem:[%s4116] sm:$0xf]
        %v4118 = vld [vmem:[%s4116 + $0x4] sm:$0xf]
        %v4119 = vld [vmem:[%s4116 + $0x8] sm:$0xf]
        %v4120 = vld [vmem:[%s4116 + $0xc] sm:$0xf]
        %v4121 = vld [vmem:[%s4116 + $0x10] sm:$0xf]
        %v4122 = vld [vmem:[%s4116 + $0x14] sm:$0xf]
        %v4123 = vld [vmem:[%s4116 + $0x18] sm:$0xf]
        %v4124 = vld [vmem:[%s4116 + $0x1c] sm:$0xf]
        %v4125 = vld [vmem:[%s4116 + $0x20] sm:$0xf]
        %v4126 = vld [vmem:[%s4116 + $0x24] sm:$0xf]
        %v4127 = vld [vmem:[%s4116 + $0x28] sm:$0xf]
        %v4128 = vld [vmem:[%s4116 + $0x2c] sm:$0xf]
        %v4129 = vld [vmem:[%s4116 + $0x30] sm:$0xf]
        %v4130 = vld [vmem:[%s4116 + $0x34] sm:$0xf]
        %v4131 = vld [vmem:[%s4116 + $0x38] sm:$0xf]
        %v4132 = vld [vmem:[%s4116 + $0x3c] sm:$0xf]
        %s4133 = scalar_lea.vmem %s8, 1
        %v4134 = vld [vmem:[%s4133] sm:$0x1]
        %v4136 = vlaneseq
        %v4137 = vshrl.u32 %v4136, 7
        %v4138 = vsub.s32 0, %v4137
        %v4139 = vrot.slane %v4134, %v4138
        %v4157 = vunpack.c.l.b16 %v4117
        %v4158 = vunpack.c.l.b16 %v4118
        %v4159 = vunpack.c.l.b16 %v4119
        %v4160 = vunpack.c.l.b16 %v4120
        %v4161 = vunpack.c.l.b16 %v4121
        %v4162 = vunpack.c.l.b16 %v4122
        %v4163 = vunpack.c.l.b16 %v4123
        %v4164 = vunpack.c.l.b16 %v4124
        %v4165 = vunpack.c.l.b16 %v4125
        %v4166 = vunpack.c.l.b16 %v4126
        %v4167 = vunpack.c.l.b16 %v4127
        %v4168 = vunpack.c.l.b16 %v4128
        %v4169 = vunpack.c.l.b16 %v4129
        %v4170 = vunpack.c.l.b16 %v4130
        %v4171 = vunpack.c.l.b16 %v4131
        %v4172 = vunpack.c.l.b16 %v4132
        %v4173 = vpack.c.b16 %v4158, %v4157
        %v4174 = vpack.c.b16 %v4160, %v4159
        %v4175 = vpack.c.b16 %v4162, %v4161
        %v4176 = vpack.c.b16 %v4164, %v4163
        %v4177 = vpack.c.b16 %v4166, %v4165
        %v4178 = vpack.c.b16 %v4168, %v4167
        %v4179 = vpack.c.b16 %v4170, %v4169
        %v4180 = vpack.c.b16 %v4172, %v4171
        %4189 = vmatprep.subr.bf16.mxu0 0
        %4190 = vmatpush1.bf16.msra.mxu0 %v4173
        %4191 = vmatprep.subr.bf16.mxu0 0
        %4192 = vmatpush1.bf16.msra.mxu0 %v4174
        %4193 = vmatprep.subr.bf16.mxu0 0
        %4194 = vmatpush1.bf16.msra.mxu0 %v4175
        %4195 = vmatprep.subr.bf16.mxu0 0
        %4196 = vmatpush1.bf16.msra.mxu0 %v4176
        %4197 = vmatprep.subr.bf16.mxu0 0
        %4198 = vmatpush1.bf16.msra.mxu0 %v4177
        %4199 = vmatprep.subr.bf16.mxu0 0
        %4200 = vmatpush1.bf16.msra.mxu0 %v4178
        %4201 = vmatprep.subr.bf16.mxu0 0
        %4202 = vmatpush1.bf16.msra.mxu0 %v4179
        %4203 = vmatprep.subr.bf16.mxu0 0
        %4204 = vmatpush1.bf16.msra.mxu0 %v4180
        %4205 = vmatprep.subr.bf16.mxu0 0
        %4206 = vmatpush1.bf16.msra.mxu0 0
        %4207 = vmatprep.subr.bf16.mxu0 0
        %4208 = vmatpush1.bf16.msra.mxu0 0
        %4209 = vmatprep.subr.bf16.mxu0 0
        %4210 = vmatpush1.bf16.msra.mxu0 0
        %4211 = vmatprep.subr.bf16.mxu0 0
        %4212 = vmatpush1.bf16.msra.mxu0 0
        %4213 = vmatprep.subr.bf16.mxu0 0
        %4214 = vmatpush1.bf16.msra.mxu0 0
        %4215 = vmatprep.subr.bf16.mxu0 0
        %4216 = vmatpush1.bf16.msra.mxu0 0
        %4217 = vmatprep.subr.bf16.mxu0 0
        %4218 = vmatpush1.bf16.msra.mxu0 0
        %4219 = vmatprep.subr.bf16.mxu0 0
        %4220 = vmatpush1.bf16.msra.mxu0 0
        %4221 = vmatprep.mubr.bf16.mxu0 0
        %4222 = vmatmul.mubr.bf16.gmra.mrb[0].mxu0 %v4115
        %v4223 = vpop.f32.mrb[0].mxu0
        %v4224 = vadd.f32 %v4139, %v4223
        %v4225 = vpop.f32.mrb[0].mxu0
        %v4226 = vpop.f32.mrb[0].mxu0
        %v4227 = vpop.f32.mrb[0].mxu0
        %4228 = vdwg.mxu0
        %v4229 = vmax.f32 %v4224, 0.0
        %v4230 = vadd.f32 %v4229, %v3999
        %v4231 = vld [vmem:[#allocation11] sm:$0xf]
        %v4232 = vld [vmem:[#allocation11 + $0x4] sm:$0xf]
        %v4233 = vld [vmem:[#allocation11 + $0x8] sm:$0xf]
        %v4234 = vld [vmem:[#allocation11 + $0xc] sm:$0xf]
        %v4235 = vld [vmem:[#allocation11 + $0x10] sm:$0xf]
        %v4236 = vld [vmem:[#allocation11 + $0x14] sm:$0xf]
        %v4237 = vld [vmem:[#allocation11 + $0x18] sm:$0xf]
        %v4238 = vld [vmem:[#allocation11 + $0x1c] sm:$0xf]
        %v4239 = vld [vmem:[#allocation11 + $0x20] sm:$0xf]
        %v4240 = vld [vmem:[#allocation11 + $0x24] sm:$0xf]
        %v4241 = vld [vmem:[#allocation11 + $0x28] sm:$0xf]
        %v4242 = vld [vmem:[#allocation11 + $0x2c] sm:$0xf]
        %v4243 = vld [vmem:[#allocation11 + $0x30] sm:$0xf]
        %v4244 = vld [vmem:[#allocation11 + $0x34] sm:$0xf]
        %v4245 = vld [vmem:[#allocation11 + $0x38] sm:$0xf]
        %v4246 = vld [vmem:[#allocation11 + $0x3c] sm:$0xf]
        %v4247 = vld [vmem:[%s10] sm:$0x1]
        %v4249 = vlaneseq
        %v4250 = vshrl.u32 %v4249, 7
        %v4251 = vsub.s32 0, %v4250
        %v4252 = vrot.slane %v4247, %v4251
        %v4270 = vunpack.c.l.b16 %v4231
        %v4271 = vunpack.c.l.b16 %v4232
        %v4272 = vunpack.c.l.b16 %v4233
        %v4273 = vunpack.c.l.b16 %v4234
        %v4274 = vunpack.c.l.b16 %v4235
        %v4275 = vunpack.c.l.b16 %v4236
        %v4276 = vunpack.c.l.b16 %v4237
        %v4277 = vunpack.c.l.b16 %v4238
        %v4278 = vunpack.c.l.b16 %v4239
        %v4279 = vunpack.c.l.b16 %v4240
        %v4280 = vunpack.c.l.b16 %v4241
        %v4281 = vunpack.c.l.b16 %v4242
        %v4282 = vunpack.c.l.b16 %v4243
        %v4283 = vunpack.c.l.b16 %v4244
        %v4284 = vunpack.c.l.b16 %v4245
        %v4285 = vunpack.c.l.b16 %v4246
        %v4286 = vpack.c.b16 %v4271, %v4270
        %v4287 = vpack.c.b16 %v4273, %v4272
        %v4288 = vpack.c.b16 %v4275, %v4274
        %v4289 = vpack.c.b16 %v4277, %v4276
        %v4290 = vpack.c.b16 %v4279, %v4278
        %v4291 = vpack.c.b16 %v4281, %v4280
        %v4292 = vpack.c.b16 %v4283, %v4282
        %v4293 = vpack.c.b16 %v4285, %v4284
        %4302 = vmatprep.subr.bf16.mxu0 0
        %4303 = vmatpush1.bf16.msra.mxu0 %v4286
        %4304 = vmatprep.subr.bf16.mxu0 0
        %4305 = vmatpush1.bf16.msra.mxu0 %v4287
        %4306 = vmatprep.subr.bf16.mxu0 0
        %4307 = vmatpush1.bf16.msra.mxu0 %v4288
        %4308 = vmatprep.subr.bf16.mxu0 0
        %4309 = vmatpush1.bf16.msra.mxu0 %v4289
        %4310 = vmatprep.subr.bf16.mxu0 0
        %4311 = vmatpush1.bf16.msra.mxu0 %v4290
        %4312 = vmatprep.subr.bf16.mxu0 0
        %4313 = vmatpush1.bf16.msra.mxu0 %v4291
        %4314 = vmatprep.subr.bf16.mxu0 0
        %4315 = vmatpush1.bf16.msra.mxu0 %v4292
        %4316 = vmatprep.subr.bf16.mxu0 0
        %4317 = vmatpush1.bf16.msra.mxu0 %v4293
        %4318 = vmatprep.subr.bf16.mxu0 0
        %4319 = vmatpush1.bf16.msra.mxu0 0
        %4320 = vmatprep.subr.bf16.mxu0 0
        %4321 = vmatpush1.bf16.msra.mxu0 0
        %4322 = vmatprep.subr.bf16.mxu0 0
        %4323 = vmatpush1.bf16.msra.mxu0 0
        %4324 = vmatprep.subr.bf16.mxu0 0
        %4325 = vmatpush1.bf16.msra.mxu0 0
        %4326 = vmatprep.subr.bf16.mxu0 0
        %4327 = vmatpush1.bf16.msra.mxu0 0
        %4328 = vmatprep.subr.bf16.mxu0 0
        %4329 = vmatpush1.bf16.msra.mxu0 0
        %4330 = vmatprep.subr.bf16.mxu0 0
        %4331 = vmatpush1.bf16.msra.mxu0 0
        %4332 = vmatprep.subr.bf16.mxu0 0
        %4333 = vmatpush1.bf16.msra.mxu0 0
        %4334 = vmatprep.mubr.bf16.mxu0 0
        %4335 = vmatmul.mubr.bf16.gmra.mrb[0].mxu0 %v3773
        %v4336 = vpop.f32.mrb[0].mxu0
        %v4337 = vadd.f32 %v4252, %v4336
        %v4338 = vpop.f32.mrb[0].mxu0
        %v4339 = vpop.f32.mrb[0].mxu0
        %v4340 = vpop.f32.mrb[0].mxu0
        %4341 = vdwg.mxu0
        %v4342 = vmax.f32 %v4337, 0.0
        %v4343 = vpack.c.bf16 %v4342, %v4342
        %v4344 = vld [vmem:[#allocation13] sm:$0xf]
        %v4345 = vld [vmem:[#allocation13 + $0x4] sm:$0xf]
        %v4346 = vld [vmem:[#allocation13 + $0x8] sm:$0xf]
        %v4347 = vld [vmem:[#allocation13 + $0xc] sm:$0xf]
        %v4348 = vld [vmem:[#allocation13 + $0x10] sm:$0xf]
        %v4349 = vld [vmem:[#allocation13 + $0x14] sm:$0xf]
        %v4350 = vld [vmem:[#allocation13 + $0x18] sm:$0xf]
        %v4351 = vld [vmem:[#allocation13 + $0x1c] sm:$0xf]
        %v4352 = vld [vmem:[#allocation13 + $0x20] sm:$0xf]
        %v4353 = vld [vmem:[#allocation13 + $0x24] sm:$0xf]
        %v4354 = vld [vmem:[#allocation13 + $0x28] sm:$0xf]
        %v4355 = vld [vmem:[#allocation13 + $0x2c] sm:$0xf]
        %v4356 = vld [vmem:[#allocation13 + $0x30] sm:$0xf]
        %v4357 = vld [vmem:[#allocation13 + $0x34] sm:$0xf]
        %v4358 = vld [vmem:[#allocation13 + $0x38] sm:$0xf]
        %v4359 = vld [vmem:[#allocation13 + $0x3c] sm:$0xf]
        %v4360 = vld [vmem:[%s12] sm:$0x1]
        %v4362 = vlaneseq
        %v4363 = vshrl.u32 %v4362, 7
        %v4364 = vsub.s32 0, %v4363
        %v4365 = vrot.slane %v4360, %v4364
        %v4383 = vunpack.c.l.b16 %v4344
        %v4384 = vunpack.c.l.b16 %v4345
        %v4385 = vunpack.c.l.b16 %v4346
        %v4386 = vunpack.c.l.b16 %v4347
        %v4387 = vunpack.c.l.b16 %v4348
        %v4388 = vunpack.c.l.b16 %v4349
        %v4389 = vunpack.c.l.b16 %v4350
        %v4390 = vunpack.c.l.b16 %v4351
        %v4391 = vunpack.c.l.b16 %v4352
        %v4392 = vunpack.c.l.b16 %v4353
        %v4393 = vunpack.c.l.b16 %v4354
        %v4394 = vunpack.c.l.b16 %v4355
        %v4395 = vunpack.c.l.b16 %v4356
        %v4396 = vunpack.c.l.b16 %v4357
        %v4397 = vunpack.c.l.b16 %v4358
        %v4398 = vunpack.c.l.b16 %v4359
        %v4399 = vpack.c.b16 %v4384, %v4383
        %v4400 = vpack.c.b16 %v4386, %v4385
        %v4401 = vpack.c.b16 %v4388, %v4387
        %v4402 = vpack.c.b16 %v4390, %v4389
        %v4403 = vpack.c.b16 %v4392, %v4391
        %v4404 = vpack.c.b16 %v4394, %v4393
        %v4405 = vpack.c.b16 %v4396, %v4395
        %v4406 = vpack.c.b16 %v4398, %v4397
        %4415 = vmatprep.subr.bf16.mxu0 0
        %4416 = vmatpush1.bf16.msra.mxu0 %v4399
        %4417 = vmatprep.subr.bf16.mxu0 0
        %4418 = vmatpush1.bf16.msra.mxu0 %v4400
        %4419 = vmatprep.subr.bf16.mxu0 0
        %4420 = vmatpush1.bf16.msra.mxu0 %v4401
        %4421 = vmatprep.subr.bf16.mxu0 0
        %4422 = vmatpush1.bf16.msra.mxu0 %v4402
        %4423 = vmatprep.subr.bf16.mxu0 0
        %4424 = vmatpush1.bf16.msra.mxu0 %v4403
        %4425 = vmatprep.subr.bf16.mxu0 0
        %4426 = vmatpush1.bf16.msra.mxu0 %v4404
        %4427 = vmatprep.subr.bf16.mxu0 0
        %4428 = vmatpush1.bf16.msra.mxu0 %v4405
        %4429 = vmatprep.subr.bf16.mxu0 0
        %4430 = vmatpush1.bf16.msra.mxu0 %v4406
        %4431 = vmatprep.subr.bf16.mxu0 0
        %4432 = vmatpush1.bf16.msra.mxu0 0
        %4433 = vmatprep.subr.bf16.mxu0 0
        %4434 = vmatpush1.bf16.msra.mxu0 0
        %4435 = vmatprep.subr.bf16.mxu0 0
        %4436 = vmatpush1.bf16.msra.mxu0 0
        %4437 = vmatprep.subr.bf16.mxu0 0
        %4438 = vmatpush1.bf16.msra.mxu0 0
        %4439 = vmatprep.subr.bf16.mxu0 0
        %4440 = vmatpush1.bf16.msra.mxu0 0
        %4441 = vmatprep.subr.bf16.mxu0 0
        %4442 = vmatpush1.bf16.msra.mxu0 0
        %4443 = vmatprep.subr.bf16.mxu0 0
        %4444 = vmatpush1.bf16.msra.mxu0 0
        %4445 = vmatprep.subr.bf16.mxu0 0
        %4446 = vmatpush1.bf16.msra.mxu0 0
        %4447 = vmatprep.mubr.bf16.mxu0 0
        %4448 = vmatmul.mubr.bf16.gmra.mrb[0].mxu0 %v4343
        %v4449 = vpop.f32.mrb[0].mxu0
        %v4450 = vadd.f32 %v4365, %v4449
        %v4451 = vpop.f32.mrb[0].mxu0
        %v4452 = vpop.f32.mrb[0].mxu0
        %v4453 = vpop.f32.mrb[0].mxu0
        %4454 = vdwg.mxu0
        %v4455 = vmax.f32 %v4450, 0.0
        %v4456 = vadd.f32 %v4455, %v3772
        %v4457 = vpack.c.bf16 %v4456, %v4456
        %s4458 = scalar_lea.vmem [#allocation11], 64
        %v4459 = vld [vmem:[%s4458] sm:$0xf]
        %v4460 = vld [vmem:[%s4458 + $0x4] sm:$0xf]
        %v4461 = vld [vmem:[%s4458 + $0x8] sm:$0xf]
        %v4462 = vld [vmem:[%s4458 + $0xc] sm:$0xf]
        %v4463 = vld [vmem:[%s4458 + $0x10] sm:$0xf]
        %v4464 = vld [vmem:[%s4458 + $0x14] sm:$0xf]
        %v4465 = vld [vmem:[%s4458 + $0x18] sm:$0xf]
        %v4466 = vld [vmem:[%s4458 + $0x1c] sm:$0xf]
        %v4467 = vld [vmem:[%s4458 + $0x20] sm:$0xf]
        %v4468 = vld [vmem:[%s4458 + $0x24] sm:$0xf]
        %v4469 = vld [vmem:[%s4458 + $0x28] sm:$0xf]
        %v4470 = vld [vmem:[%s4458 + $0x2c] sm:$0xf]
        %v4471 = vld [vmem:[%s4458 + $0x30] sm:$0xf]
        %v4472 = vld [vmem:[%s4458 + $0x34] sm:$0xf]
        %v4473 = vld [vmem:[%s4458 + $0x38] sm:$0xf]
        %v4474 = vld [vmem:[%s4458 + $0x3c] sm:$0xf]
        %s4475 = scalar_lea.vmem %s10, 1
        %v4476 = vld [vmem:[%s4475] sm:$0x1]
        %v4478 = vlaneseq
        %v4479 = vshrl.u32 %v4478, 7
        %v4480 = vsub.s32 0, %v4479
        %v4481 = vrot.slane %v4476, %v4480
        %v4499 = vunpack.c.l.b16 %v4459
        %v4500 = vunpack.c.l.b16 %v4460
        %v4501 = vunpack.c.l.b16 %v4461
        %v4502 = vunpack.c.l.b16 %v4462
        %v4503 = vunpack.c.l.b16 %v4463
        %v4504 = vunpack.c.l.b16 %v4464
        %v4505 = vunpack.c.l.b16 %v4465
        %v4506 = vunpack.c.l.b16 %v4466
        %v4507 = vunpack.c.l.b16 %v4467
        %v4508 = vunpack.c.l.b16 %v4468
        %v4509 = vunpack.c.l.b16 %v4469
        %v4510 = vunpack.c.l.b16 %v4470
        %v4511 = vunpack.c.l.b16 %v4471
        %v4512 = vunpack.c.l.b16 %v4472
        %v4513 = vunpack.c.l.b16 %v4473
        %v4514 = vunpack.c.l.b16 %v4474
        %v4515 = vpack.c.b16 %v4500, %v4499
        %v4516 = vpack.c.b16 %v4502, %v4501
        %v4517 = vpack.c.b16 %v4504, %v4503
        %v4518 = vpack.c.b16 %v4506, %v4505
        %v4519 = vpack.c.b16 %v4508, %v4507
        %v4520 = vpack.c.b16 %v4510, %v4509
        %v4521 = vpack.c.b16 %v4512, %v4511
        %v4522 = vpack.c.b16 %v4514, %v4513
        %4531 = vmatprep.subr.bf16.mxu0 0
        %4532 = vmatpush1.bf16.msra.mxu0 %v4515
        %4533 = vmatprep.subr.bf16.mxu0 0
        %4534 = vmatpush1.bf16.msra.mxu0 %v4516
        %4535 = vmatprep.subr.bf16.mxu0 0
        %4536 = vmatpush1.bf16.msra.mxu0 %v4517
        %4537 = vmatprep.subr.bf16.mxu0 0
        %4538 = vmatpush1.bf16.msra.mxu0 %v4518
        %4539 = vmatprep.subr.bf16.mxu0 0
        %4540 = vmatpush1.bf16.msra.mxu0 %v4519
        %4541 = vmatprep.subr.bf16.mxu0 0
        %4542 = vmatpush1.bf16.msra.mxu0 %v4520
        %4543 = vmatprep.subr.bf16.mxu0 0
        %4544 = vmatpush1.bf16.msra.mxu0 %v4521
        %4545 = vmatprep.subr.bf16.mxu0 0
        %4546 = vmatpush1.bf16.msra.mxu0 %v4522
        %4547 = vmatprep.subr.bf16.mxu0 0
        %4548 = vmatpush1.bf16.msra.mxu0 0
        %4549 = vmatprep.subr.bf16.mxu0 0
        %4550 = vmatpush1.bf16.msra.mxu0 0
        %4551 = vmatprep.subr.bf16.mxu0 0
        %4552 = vmatpush1.bf16.msra.mxu0 0
        %4553 = vmatprep.subr.bf16.mxu0 0
        %4554 = vmatpush1.bf16.msra.mxu0 0
        %4555 = vmatprep.subr.bf16.mxu0 0
        %4556 = vmatpush1.bf16.msra.mxu0 0
        %4557 = vmatprep.subr.bf16.mxu0 0
        %4558 = vmatpush1.bf16.msra.mxu0 0
        %4559 = vmatprep.subr.bf16.mxu0 0
        %4560 = vmatpush1.bf16.msra.mxu0 0
        %4561 = vmatprep.subr.bf16.mxu0 0
        %4562 = vmatpush1.bf16.msra.mxu0 0
        %4563 = vmatprep.mubr.bf16.mxu0 0
        %4564 = vmatmul.mubr.bf16.gmra.mrb[0].mxu0 %v4457
        %v4565 = vpop.f32.mrb[0].mxu0
        %v4566 = vadd.f32 %v4481, %v4565
        %v4567 = vpop.f32.mrb[0].mxu0
        %v4568 = vpop.f32.mrb[0].mxu0
        %v4569 = vpop.f32.mrb[0].mxu0
        %4570 = vdwg.mxu0
        %v4571 = vmax.f32 %v4566, 0.0
        %v4572 = vpack.c.bf16 %v4571, %v4571
        %s4573 = scalar_lea.vmem [#allocation13], 64
        %v4574 = vld [vmem:[%s4573] sm:$0xf]
        %v4575 = vld [vmem:[%s4573 + $0x4] sm:$0xf]
        %v4576 = vld [vmem:[%s4573 + $0x8] sm:$0xf]
        %v4577 = vld [vmem:[%s4573 + $0xc] sm:$0xf]
        %v4578 = vld [vmem:[%s4573 + $0x10] sm:$0xf]
        %v4579 = vld [vmem:[%s4573 + $0x14] sm:$0xf]
        %v4580 = vld [vmem:[%s4573 + $0x18] sm:$0xf]
        %v4581 = vld [vmem:[%s4573 + $0x1c] sm:$0xf]
        %v4582 = vld [vmem:[%s4573 + $0x20] sm:$0xf]
        %v4583 = vld [vmem:[%s4573 + $0x24] sm:$0xf]
        %v4584 = vld [vmem:[%s4573 + $0x28] sm:$0xf]
        %v4585 = vld [vmem:[%s4573 + $0x2c] sm:$0xf]
        %v4586 = vld [vmem:[%s4573 + $0x30] sm:$0xf]
        %v4587 = vld [vmem:[%s4573 + $0x34] sm:$0xf]
        %v4588 = vld [vmem:[%s4573 + $0x38] sm:$0xf]
        %v4589 = vld [vmem:[%s4573 + $0x3c] sm:$0xf]
        %s4590 = scalar_lea.vmem %s12, 1
        %v4591 = vld [vmem:[%s4590] sm:$0x1]
        %v4593 = vlaneseq
        %v4594 = vshrl.u32 %v4593, 7
        %v4595 = vsub.s32 0, %v4594
        %v4596 = vrot.slane %v4591, %v4595
        %v4614 = vunpack.c.l.b16 %v4574
        %v4615 = vunpack.c.l.b16 %v4575
        %v4616 = vunpack.c.l.b16 %v4576
        %v4617 = vunpack.c.l.b16 %v4577
        %v4618 = vunpack.c.l.b16 %v4578
        %v4619 = vunpack.c.l.b16 %v4579
        %v4620 = vunpack.c.l.b16 %v4580
        %v4621 = vunpack.c.l.b16 %v4581
        %v4622 = vunpack.c.l.b16 %v4582
        %v4623 = vunpack.c.l.b16 %v4583
        %v4624 = vunpack.c.l.b16 %v4584
        %v4625 = vunpack.c.l.b16 %v4585
        %v4626 = vunpack.c.l.b16 %v4586
        %v4627 = vunpack.c.l.b16 %v4587
        %v4628 = vunpack.c.l.b16 %v4588
        %v4629 = vunpack.c.l.b16 %v4589
        %v4630 = vpack.c.b16 %v4615, %v4614
        %v4631 = vpack.c.b16 %v4617, %v4616
        %v4632 = vpack.c.b16 %v4619, %v4618
        %v4633 = vpack.c.b16 %v4621, %v4620
        %v4634 = vpack.c.b16 %v4623, %v4622
        %v4635 = vpack.c.b16 %v4625, %v4624
        %v4636 = vpack.c.b16 %v4627, %v4626
        %v4637 = vpack.c.b16 %v4629, %v4628
        %4646 = vmatprep.subr.bf16.mxu0 0
        %4647 = vmatpush1.bf16.msra.mxu0 %v4630
        %4648 = vmatprep.subr.bf16.mxu0 0
        %4649 = vmatpush1.bf16.msra.mxu0 %v4631
        %4650 = vmatprep.subr.bf16.mxu0 0
        %4651 = vmatpush1.bf16.msra.mxu0 %v4632
        %4652 = vmatprep.subr.bf16.mxu0 0
        %4653 = vmatpush1.bf16.msra.mxu0 %v4633
        %4654 = vmatprep.subr.bf16.mxu0 0
        %4655 = vmatpush1.bf16.msra.mxu0 %v4634
        %4656 = vmatprep.subr.bf16.mxu0 0
        %4657 = vmatpush1.bf16.msra.mxu0 %v4635
        %4658 = vmatprep.subr.bf16.mxu0 0
        %4659 = vmatpush1.bf16.msra.mxu0 %v4636
        %4660 = vmatprep.subr.bf16.mxu0 0
        %4661 = vmatpush1.bf16.msra.mxu0 %v4637
        %4662 = vmatprep.subr.bf16.mxu0 0
        %4663 = vmatpush1.bf16.msra.mxu0 0
        %4664 = vmatprep.subr.bf16.mxu0 0
        %4665 = vmatpush1.bf16.msra.mxu0 0
        %4666 = vmatprep.subr.bf16.mxu0 0
        %4667 = vmatpush1.bf16.msra.mxu0 0
        %4668 = vmatprep.subr.bf16.mxu0 0
        %4669 = vmatpush1.bf16.msra.mxu0 0
        %4670 = vmatprep.subr.bf16.mxu0 0
        %4671 = vmatpush1.bf16.msra.mxu0 0
        %4672 = vmatprep.subr.bf16.mxu0 0
        %4673 = vmatpush1.bf16.msra.mxu0 0
        %4674 = vmatprep.subr.bf16.mxu0 0
        %4675 = vmatpush1.bf16.msra.mxu0 0
        %4676 = vmatprep.subr.bf16.mxu0 0
        %4677 = vmatpush1.bf16.msra.mxu0 0
        %4678 = vmatprep.mubr.bf16.mxu0 0
        %4679 = vmatmul.mubr.bf16.gmra.mrb[0].mxu0 %v4572
        %v4680 = vpop.f32.mrb[0].mxu0
        %v4681 = vadd.f32 %v4596, %v4680
        %v4682 = vpop.f32.mrb[0].mxu0
        %v4683 = vpop.f32.mrb[0].mxu0
        %v4684 = vpop.f32.mrb[0].mxu0
        %4685 = vdwg.mxu0
        %v4686 = vmax.f32 %v4681, 0.0
        %v4687 = vadd.f32 %v4686, %v4456
        %v4688 = vpack.c.bf16 %v4230, %v4230
        %v4689 = vld [vmem:[#allocation14] sm:$0xf]
        %v4690 = vld [vmem:[#allocation14 + $0x4] sm:$0xf]
        %v4691 = vld [vmem:[#allocation14 + $0x8] sm:$0xf]
        %v4692 = vld [vmem:[#allocation14 + $0xc] sm:$0xf]
        %v4693 = vld [vmem:[#allocation14 + $0x10] sm:$0xf]
        %v4694 = vld [vmem:[#allocation14 + $0x14] sm:$0xf]
        %v4695 = vld [vmem:[#allocation14 + $0x18] sm:$0xf]
        %v4696 = vld [vmem:[#allocation14 + $0x1c] sm:$0xf]
        %v4697 = vld [vmem:[#allocation14 + $0x20] sm:$0xf]
        %v4698 = vld [vmem:[#allocation14 + $0x24] sm:$0xf]
        %v4699 = vld [vmem:[#allocation14 + $0x28] sm:$0xf]
        %v4700 = vld [vmem:[#allocation14 + $0x2c] sm:$0xf]
        %v4701 = vld [vmem:[#allocation14 + $0x30] sm:$0xf]
        %v4702 = vld [vmem:[#allocation14 + $0x34] sm:$0xf]
        %v4703 = vld [vmem:[#allocation14 + $0x38] sm:$0xf]
        %v4704 = vld [vmem:[#allocation14 + $0x3c] sm:$0xf]
        %v4705 = vpack.c.bf16 %v4687, %v4687
        %v4706 = vld [vmem:[#allocation16] sm:$0xf]
        %v4707 = vld [vmem:[#allocation16 + $0x4] sm:$0xf]
        %v4708 = vld [vmem:[#allocation16 + $0x8] sm:$0xf]
        %v4709 = vld [vmem:[#allocation16 + $0xc] sm:$0xf]
        %v4710 = vld [vmem:[#allocation16 + $0x10] sm:$0xf]
        %v4711 = vld [vmem:[#allocation16 + $0x14] sm:$0xf]
        %v4712 = vld [vmem:[#allocation16 + $0x18] sm:$0xf]
        %v4713 = vld [vmem:[#allocation16 + $0x1c] sm:$0xf]
        %v4714 = vld [vmem:[#allocation16 + $0x20] sm:$0xf]
        %v4715 = vld [vmem:[#allocation16 + $0x24] sm:$0xf]
        %v4716 = vld [vmem:[#allocation16 + $0x28] sm:$0xf]
        %v4717 = vld [vmem:[#allocation16 + $0x2c] sm:$0xf]
        %v4718 = vld [vmem:[#allocation16 + $0x30] sm:$0xf]
        %v4719 = vld [vmem:[#allocation16 + $0x34] sm:$0xf]
        %v4720 = vld [vmem:[#allocation16 + $0x38] sm:$0xf]
        %v4721 = vld [vmem:[#allocation16 + $0x3c] sm:$0xf]
        %v4738 = vunpack.c.l.b16 %v4706
        %v4739 = vunpack.c.l.b16 %v4707
        %v4740 = vunpack.c.l.b16 %v4708
        %v4741 = vunpack.c.l.b16 %v4709
        %v4742 = vunpack.c.l.b16 %v4710
        %v4743 = vunpack.c.l.b16 %v4711
        %v4744 = vunpack.c.l.b16 %v4712
        %v4745 = vunpack.c.l.b16 %v4713
        %v4746 = vunpack.c.l.b16 %v4714
        %v4747 = vunpack.c.l.b16 %v4715
        %v4748 = vunpack.c.l.b16 %v4716
        %v4749 = vunpack.c.l.b16 %v4717
        %v4750 = vunpack.c.l.b16 %v4718
        %v4751 = vunpack.c.l.b16 %v4719
        %v4752 = vunpack.c.l.b16 %v4720
        %v4753 = vunpack.c.l.b16 %v4721
        %v4754 = vpack.c.b16 %v4739, %v4738
        %v4755 = vpack.c.b16 %v4741, %v4740
        %v4756 = vpack.c.b16 %v4743, %v4742
        %v4757 = vpack.c.b16 %v4745, %v4744
        %v4758 = vpack.c.b16 %v4747, %v4746
        %v4759 = vpack.c.b16 %v4749, %v4748
        %v4760 = vpack.c.b16 %v4751, %v4750
        %v4761 = vpack.c.b16 %v4753, %v4752
        %4770 = vmatprep.subr.bf16.mxu0 0
        %4771 = vmatpush1.bf16.msra.mxu0 %v4754
        %4772 = vmatprep.subr.bf16.mxu0 0
        %4773 = vmatpush1.bf16.msra.mxu0 %v4755
        %4774 = vmatprep.subr.bf16.mxu0 0
        %4775 = vmatpush1.bf16.msra.mxu0 %v4756
        %4776 = vmatprep.subr.bf16.mxu0 0
        %4777 = vmatpush1.bf16.msra.mxu0 %v4757
        %4778 = vmatprep.subr.bf16.mxu0 0
        %4779 = vmatpush1.bf16.msra.mxu0 %v4758
        %4780 = vmatprep.subr.bf16.mxu0 0
        %4781 = vmatpush1.bf16.msra.mxu0 %v4759
        %4782 = vmatprep.subr.bf16.mxu0 0
        %4783 = vmatpush1.bf16.msra.mxu0 %v4760
        %4784 = vmatprep.subr.bf16.mxu0 0
        %4785 = vmatpush1.bf16.msra.mxu0 %v4761
        %4786 = vmatprep.subr.bf16.mxu0 0
        %4787 = vmatpush1.bf16.msra.mxu0 0
        %4788 = vmatprep.subr.bf16.mxu0 0
        %4789 = vmatpush1.bf16.msra.mxu0 0
        %4790 = vmatprep.subr.bf16.mxu0 0
        %4791 = vmatpush1.bf16.msra.mxu0 0
        %4792 = vmatprep.subr.bf16.mxu0 0
        %4793 = vmatpush1.bf16.msra.mxu0 0
        %4794 = vmatprep.subr.bf16.mxu0 0
        %4795 = vmatpush1.bf16.msra.mxu0 0
        %4796 = vmatprep.subr.bf16.mxu0 0
        %4797 = vmatpush1.bf16.msra.mxu0 0
        %4798 = vmatprep.subr.bf16.mxu0 0
        %4799 = vmatpush1.bf16.msra.mxu0 0
        %4800 = vmatprep.subr.bf16.mxu0 0
        %4801 = vmatpush1.bf16.msra.mxu0 0
        %4802 = vmatprep.mubr.bf16.mxu0 0
        %4803 = vmatmul.mubr.bf16.gmra.mrb[0].mxu0 %v4705
        %v4804 = vpop.f32.mrb[0].mxu0
        %v4805 = vadd.f32 0.0, %v4804
        %v4806 = vpop.f32.mrb[0].mxu0
        %v4807 = vpop.f32.mrb[0].mxu0
        %v4808 = vpop.f32.mrb[0].mxu0
        %4809 = vdwg.mxu0
        %v4826 = vunpack.c.l.b16 %v4689
        %v4827 = vunpack.c.l.b16 %v4690
        %v4828 = vunpack.c.l.b16 %v4691
        %v4829 = vunpack.c.l.b16 %v4692
        %v4830 = vunpack.c.l.b16 %v4693
        %v4831 = vunpack.c.l.b16 %v4694
        %v4832 = vunpack.c.l.b16 %v4695
        %v4833 = vunpack.c.l.b16 %v4696
        %v4834 = vunpack.c.l.b16 %v4697
        %v4835 = vunpack.c.l.b16 %v4698
        %v4836 = vunpack.c.l.b16 %v4699
        %v4837 = vunpack.c.l.b16 %v4700
        %v4838 = vunpack.c.l.b16 %v4701
        %v4839 = vunpack.c.l.b16 %v4702
        %v4840 = vunpack.c.l.b16 %v4703
        %v4841 = vunpack.c.l.b16 %v4704
        %v4842 = vpack.c.b16 %v4827, %v4826
        %v4843 = vpack.c.b16 %v4829, %v4828
        %v4844 = vpack.c.b16 %v4831, %v4830
        %v4845 = vpack.c.b16 %v4833, %v4832
        %v4846 = vpack.c.b16 %v4835, %v4834
        %v4847 = vpack.c.b16 %v4837, %v4836
        %v4848 = vpack.c.b16 %v4839, %v4838
        %v4849 = vpack.c.b16 %v4841, %v4840
        %4858 = vmatprep.subr.bf16.mxu0 0
        %4859 = vmatpush1.bf16.msra.mxu0 %v4842
        %4860 = vmatprep.subr.bf16.mxu0 0
        %4861 = vmatpush1.bf16.msra.mxu0 %v4843
        %4862 = vmatprep.subr.bf16.mxu0 0
        %4863 = vmatpush1.bf16.msra.mxu0 %v4844
        %4864 = vmatprep.subr.bf16.mxu0 0
        %4865 = vmatpush1.bf16.msra.mxu0 %v4845
        %4866 = vmatprep.subr.bf16.mxu0 0
        %4867 = vmatpush1.bf16.msra.mxu0 %v4846
        %4868 = vmatprep.subr.bf16.mxu0 0
        %4869 = vmatpush1.bf16.msra.mxu0 %v4847
        %4870 = vmatprep.subr.bf16.mxu0 0
        %4871 = vmatpush1.bf16.msra.mxu0 %v4848
        %4872 = vmatprep.subr.bf16.mxu0 0
        %4873 = vmatpush1.bf16.msra.mxu0 %v4849
        %4874 = vmatprep.subr.bf16.mxu0 0
        %4875 = vmatpush1.bf16.msra.mxu0 0
        %4876 = vmatprep.subr.bf16.mxu0 0
        %4877 = vmatpush1.bf16.msra.mxu0 0
        %4878 = vmatprep.subr.bf16.mxu0 0
        %4879 = vmatpush1.bf16.msra.mxu0 0
        %4880 = vmatprep.subr.bf16.mxu0 0
        %4881 = vmatpush1.bf16.msra.mxu0 0
        %4882 = vmatprep.subr.bf16.mxu0 0
        %4883 = vmatpush1.bf16.msra.mxu0 0
        %4884 = vmatprep.subr.bf16.mxu0 0
        %4885 = vmatpush1.bf16.msra.mxu0 0
        %4886 = vmatprep.subr.bf16.mxu0 0
        %4887 = vmatpush1.bf16.msra.mxu0 0
        %4888 = vmatprep.subr.bf16.mxu0 0
        %4889 = vmatpush1.bf16.msra.mxu0 0
        %4890 = vmatprep.mubr.bf16.mxu0 0
        %4891 = vmatmul.mubr.bf16.gmra.mrb[0].mxu0 %v4688
        %v4892 = vpop.f32.mrb[0].mxu0
        %v4893 = vadd.f32 %v4805, %v4892
        %v4894 = vpop.f32.mrb[0].mxu0
        %v4895 = vpop.f32.mrb[0].mxu0
        %v4896 = vpop.f32.mrb[0].mxu0
        %4897 = vdwg.mxu0
        %v4898 = vld [vmem:[%s15] sm:$0x1]
        %v4900 = vlaneseq
        %v4901 = vshrl.u32 %v4900, 7
        %v4902 = vsub.s32 0, %v4901
        %v4903 = vrot.slane %v4898, %v4902
        %v4905 = vadd.f32 %v4893, %v4903
        %4906 = vst [vmem:[%s655] sm:$0xff] %v4905
        %s4907 = sand.u32 %s386, 1
        %s4908 = scalar_lea.sflag [#allocation4], %s4907
        %s4909 = sand.u32 %s386, 1
        %s4910 = smul.addr %s4909, 8
        %s4911 = scalar_lea.vmem [#allocation17], %s4910
        // Predicated region
        $region121: #{tpu_custom_call.1} parent=83 // pred_check
          %p4912 = pneg %p396
        $region122: #{tpu_custom_call.1} parent=83 // pred_check_branch
          %4914 = sbr.rel (%p4912) target = $region124
        $region123: #{tpu_custom_call.1} parent=83 // pred_region
          %s4916 = ssub.s32 128, 128
          %4917 = vsyncadd %s4908, %s4916
          %s4918 = smul.addr %s37, 128
          %s4919 = scalar_lea.hbm %s16, %s4918
          %s4921 = sshll.u32 %s4911, 4
          %s4922 = int_to_ptr.vmem [resolvable:$true] %s4921
          %4924 = dma.vmem_to_hbm [thread:$0]  %s4922, 128, %s4919, %s4908
        $region124: #{tpu_custom_call.1} parent=83 // pred_fallthru
          _
      $region84: #{tpu_custom_call.1} parent=5 // pred_fallthru
        _
      %p4925 = scmp.le.s32.totalorder 2, %s32
      // Predicated region
      $region125: #{tpu_custom_call.1} parent=5 // pred_check
        %p4926 = pneg %p4925
      $region126: #{tpu_custom_call.1} parent=5 // pred_check_branch
        %4928 = sbr.rel (%p4926) target = $region128
      $region127: #{tpu_custom_call.1} parent=5 // pred_region
        %s4929 = ssub.s32 %s32, 2
        // Predicated region
        $region129: #{tpu_custom_call.1} parent=127 // pred_check
          %p4930 = pneg %p402
        $region130: #{tpu_custom_call.1} parent=127 // pred_check_branch
          %4932 = sbr.rel (%p4930) target = $region132
        $region131: #{tpu_custom_call.1} parent=127 // pred_region
          %s4933 = sand.u32 %s387, 1
          %s4934 = scalar_lea.sflag [#allocation4], %s4933
          %s4935 = sand.u32 %s387, 1
          %s4936 = smul.addr %s4935, 8
          %s4937 = scalar_lea.vmem [#allocation17], %s4936
          %4938 = dma.done %s4934, 128
        $region132: #{tpu_custom_call.1} parent=127 // pred_fallthru
          _
      $region128: #{tpu_custom_call.1} parent=5 // pred_fallthru
        _
    $region6: #{tpu_custom_call.1} parent=1 // loop_footer
      %s36 = sadd.s32 1, %s32
    $region7: #{tpu_custom_call.1} parent=1 // loop_footer_branch
      %31 = sbr.rel target = $region3
    $region8: #{tpu_custom_call.1} parent=1 // loop_exit
      _
    %4939 = vsyncpa [#allocation3], 1
    %s4940 = scalar_lea.sflag [#allocation3], 1
    %4941 = vsyncpa %s4940, 1
    %4942 = vsyncpa [#allocation6], 1
    %4943 = vsyncpa [#allocation9], 1
    %4944 = vsyncpa [#allocation12], 1
    %4945 = vsyncpa [#allocation15], 1
    %4946 = vsyncpa [#allocation4], 1
    %s4947 = scalar_lea.sflag [#allocation4], 1
    %4948 = vsyncpa %s4947, 1

</llo_original>
